<compile_context>
chip_gen: v5e
topology: v5e:2x2
jax: 0.10.0
libtpu: 0.0.40
codegen_flags: <defaults>
</compile_context>

<pallas_src>
import functools

import jax
import jax.numpy as jnp
from jax.experimental import pallas as pl
from jax.experimental.pallas import tpu as pltpu


# ----------------------------------------------------------------------------
# Fused encoder-block kernel (one batch element per grid step)
# ----------------------------------------------------------------------------
def _block_kernel(*refs, heads, reduction, eps):
    if reduction > 1:
        (x_ref, xp_ref, g_ln_ref, b_ln_ref, wq_ref, wkv_ref,
         w_sr_ref, b_sr_ref, g_sr_ref, b_srln_ref,
         wo_ref, bo_ref, w1_ref, b1_ref, w2_ref, b2_ref, o_ref) = refs
    else:
        (x_ref, g_ln_ref, b_ln_ref, wq_ref, wkv_ref,
         wo_ref, bo_ref, w1_ref, b1_ref, w2_ref, b2_ref, o_ref) = refs

    N, C = x_ref.shape
    d = C // heads
    scale = d ** (-0.5)

    def ln(t, g, b):
        mu = jnp.mean(t, axis=-1, keepdims=True)
        var = jnp.mean((t - mu) ** 2, axis=-1, keepdims=True)
        return (t - mu) * jax.lax.rsqrt(var + eps) * g + b

    g_ln = g_ln_ref[...]
    b_ln = b_ln_ref[...]

    x = x_ref[...].astype(jnp.float32)          # (N, C)
    xn = ln(x, g_ln, b_ln)                      # Encoder pre-norm (shared LN)

    # ---- SRA: query projection (no bias) -----------------------------------
    q = jnp.dot(xn, wq_ref[...], preferred_element_type=jnp.float32)   # (N, C)

    # ---- SRA: spatial reduction (Conv2d k=stride=r as r*r matmul taps) -----
    if reduction > 1:
        n_tap = xp_ref.shape[1]                 # r*r
        Nk = xp_ref.shape[2]                    # Hr*Wr
        acc = jnp.zeros((Nk, C), jnp.float32)
        for j in range(n_tap):
            # tokens of tap j (already permuted on host); LN is per-token so it
            # commutes with the permutation -> identical to Conv(LN(x)).
            tok = ln(xp_ref[0, j].astype(jnp.float32), g_ln, b_ln)      # (Nk, C)
            w_tap = w_sr_ref[j * C:(j + 1) * C, :]                       # (C, C)
            acc = acc + jnp.dot(tok, w_tap, preferred_element_type=jnp.float32)
        kv_in = ln(acc + b_sr_ref[...], g_sr_ref[...], b_srln_ref[...])  # SR LN
    else:
        kv_in = xn
        Nk = N

    # ---- SRA: key/value projection (no bias) -------------------------------
    kv = jnp.dot(kv_in, wkv_ref[...], preferred_element_type=jnp.float32)  # (Nk, 2C)
    k = kv[:, :C]
    v = kv[:, C:]

    # ---- multi-head attention (static head loop; everything stays in VMEM) -
    nt_dims = (((1,), (1,)), ((), ()))          # contract last dims: q @ k^T
    heads_out = []
    for h in range(heads):
        sl = slice(h * d, (h + 1) * d)
        s = jax.lax.dot_general(q[:, sl], k[:, sl], nt_dims,
                                preferred_element_type=jnp.float32) * scale
        s = s - jnp.max(s, axis=-1, keepdims=True)
        p = jnp.exp(s)
        p = p * pl.reciprocal(jnp.sum(p, axis=-1, keepdims=True), approx=True)
        heads_out.append(jnp.dot(p, v[:, sl], preferred_element_type=jnp.float32))
    attn_out = jnp.concatenate(heads_out, axis=-1)                      # (N, C)

    # ---- out projection + residual (fused epilogue) -------------------------
    a = x + jnp.dot(attn_out, wo_ref[...],
                    preferred_element_type=jnp.float32) + bo_ref[...]

    # ---- feed-forward (tanh-GELU) + residual --------------------------------
    an = ln(a, g_ln, b_ln)
    h1 = jnp.dot(an, w1_ref[...], preferred_element_type=jnp.float32) + b1_ref[...]
    h1 = 0.5 * h1 * (1.0 + jnp.tanh(0.7978845608028654 *
                                    (h1 + 0.044715 * (h1 * h1 * h1))))
    ff = jnp.dot(h1, w2_ref[...], preferred_element_type=jnp.float32) + b2_ref[...]

    o_ref[...] = (a + ff).astype(o_ref.dtype)


# ----------------------------------------------------------------------------
# Wrapper: BlockSpecs / grid over batch, index-only host-side prep
# ----------------------------------------------------------------------------
def block_forward_pallas(x, params, *, H, W, heads, reduction, eps=1e-5):
    B, N, C = x.shape
    r = reduction
    x2 = x.reshape(B * N, C)

    def full_spec(arr):
        return pl.BlockSpec(arr.shape, lambda b, _nd=arr.ndim: (0,) * _nd)

    inputs = [x2]
    in_specs = [pl.BlockSpec((N, C), lambda b: (b, 0))]

    if r > 1:
        Hr, Wr = H // r, W // r
        Nk = Hr * Wr
        # (B, Hr, r, Wr, r, C) -> (B, r, r, Hr, Wr, C) -> (B, r*r, Nk, C)
        # Pure index permutation; feeds the in-kernel conv-as-matmul taps.
        x_patch = (x.reshape(B, Hr, r, Wr, r, C)
                     .transpose(0, 2, 4, 1, 3, 5)
                     .reshape(B, r * r, Nk, C))
        inputs.append(x_patch)
        in_specs.append(pl.BlockSpec((1, r * r, Nk, C), lambda b: (b, 0, 0, 0)))

    weight_names = ["g_ln", "b_ln", "wq", "wkv"]
    if r > 1:
        weight_names += ["w_sr", "b_sr", "g_sr", "b_sr_ln"]
    weight_names += ["wo", "bo", "w_ff1", "b_ff1", "w_ff2", "b_ff2"]

    for name in weight_names:
        w = params[name]
        if w.ndim == 1:
            w = w.reshape(1, -1)
        inputs.append(w)
        in_specs.append(full_spec(w))

    out = pl.pallas_call(
        functools.partial(_block_kernel, heads=heads, reduction=r, eps=eps),
        out_shape=jax.ShapeDtypeStruct((B * N, C), x.dtype),
        grid=(B,),
        in_specs=in_specs,
        out_specs=pl.BlockSpec((N, C), lambda b: (b, 0)),
        compiler_params=pltpu.CompilerParams(
            dimension_semantics=("parallel",)),
    )(*inputs)
    return out.reshape(B, N, C)


# ----------------------------------------------------------------------------
# Pure-JAX reference (exact erf-GELU / exact softmax) for sanity check
# ----------------------------------------------------------------------------
def block_forward_ref(x, params, *, H, W, heads, reduction, eps=1e-5):
    B, N, C = x.shape
    d = C // heads
    scale = d ** (-0.5)

    def ln(t, g, b):
        mu = jnp.mean(t, -1, keepdims=True)
        var = jnp.mean((t - mu) ** 2, -1, keepdims=True)
        return (t - mu) * jax.lax.rsqrt(var + eps) * g + b

    xn = ln(x, params["g_ln"], params["b_ln"])
    q = xn @ params["wq"]

    if reduction > 1:
        r = reduction
        Hr, Wr = H // r, W // r
        patches = (xn.reshape(B, Hr, r, Wr, r, C)
                     .transpose(0, 1, 3, 2, 4, 5)
                     .reshape(B, Hr * Wr, r * r * C))
        redc = patches @ params["w_sr"] + params["b_sr"]
        redc = ln(redc, params["g_sr"], params["b_sr_ln"])
        kv_in, Nk = redc, Hr * Wr
    else:
        kv_in, Nk = xn, N

    kv = kv_in @ params["wkv"]
    k, v = jnp.split(kv, 2, axis=-1)

    def split_heads(t, n):
        return t.reshape(B, n, heads, d).transpose(0, 2, 1, 3)

    qh, kh, vh = split_heads(q, N), split_heads(k, Nk), split_heads(v, Nk)
    s = jnp.einsum("bhnd,bhmd->bhnm", qh, kh) * scale
    p = jax.nn.softmax(s, axis=-1)
    o = jnp.einsum("bhnm,bhmd->bhnd", p, vh)
    o = o.transpose(0, 2, 1, 3).reshape(B, N, C)

    a = x + o @ params["wo"] + params["bo"]
    an = ln(a, params["g_ln"], params["b_ln"])
    h1 = jax.nn.gelu(an @ params["w_ff1"] + params["b_ff1"], approximate=False)
    ff = h1 @ params["w_ff2"] + params["b_ff2"]
    return a + ff


# ----------------------------------------------------------------------------
# Deterministic synthetic parameters
# ----------------------------------------------------------------------------
def init_params(key, dim, heads, reduction, mlp_ratio):
    hidden = dim * mlp_ratio
    ks = jax.random.split(key, 8)
    s = 0.05
    p = {}
    # Encoder LayerNorm (shared by both pre-norms)
    p["g_ln"] = jnp.ones((dim,), jnp.float32)
    p["b_ln"] = jnp.zeros((dim,), jnp.float32)
    # SRA
    p["wq"] = jax.random.normal(ks[0], (dim, dim), jnp.float32) * s
    p["wkv"] = jax.random.normal(ks[1], (dim, 2 * dim), jnp.float32) * s
    w_conv = jax.random.normal(ks[2], (dim, dim, reduction, reduction), jnp.float32) * s
    # (C_out, C_in, kh, kw) -> (kh, kw, C_in, C_out) -> (kh*kw*C_in, C_out)
    p["w_sr"] = w_conv.transpose(2, 3, 1, 0).reshape(reduction * reduction * dim, dim)
    p["b_sr"] = jax.random.normal(ks[3], (dim,), jnp.float32) * s
    p["g_sr"] = jnp.ones((dim,), jnp.float32)
    p["b_sr_ln"] = jnp.zeros((dim,), jnp.float32)
    p["wo"] = jax.random.normal(ks[4], (dim, dim), jnp.float32) * s
    p["bo"] = jax.random.normal(ks[5], (dim,), jnp.float32) * s
    # feedforward
    p["w_ff1"] = jax.random.normal(ks[6], (dim, hidden), jnp.float32) * s
    p["b_ff1"] = jnp.zeros((hidden,), jnp.float32)
    p["w_ff2"] = jax.random.normal(ks[7], (hidden, dim), jnp.float32) * s
    p["b_ff2"] = jnp.zeros((dim,), jnp.float32)
    return p


if __name__ == "__main__":
    dim, heads, reduction, mlp_ratio = 32, 4, 2, 2
    B, H, W = 2, 8, 8
    N = H * W

    key = jax.random.PRNGKey(0)
    kx, kp = jax.random.split(key)
    x = jax.random.normal(kx, (B, N, dim), jnp.float32)
    params = init_params(kp, dim, heads, reduction, mlp_ratio)

    fwd = jax.jit(functools.partial(
        block_forward_pallas, H=H, W=W, heads=heads, reduction=reduction))
    out = jax.block_until_ready(fwd(x, params))

    ref = jax.block_until_ready(
        block_forward_ref(x, params, H=H, W=W, heads=heads, reduction=reduction))

    assert out.shape == (B, N, dim)
    assert bool(jnp.all(jnp.isfinite(out)))
    assert bool(jnp.allclose(out, ref, atol=1e-2, rtol=1e-2)), "mismatch vs JAX reference"
    print("KERNEL_OK")
</pallas_src>

<mosaic_0001>
module attributes {stable_mosaic.version = 11 : i64} {
  func.func @_block_kernel(%arg0: i32, %arg1: memref<64x32xf32, #tpu.memory_space<vmem>>, %arg2: memref<1x4x16x32xf32, #tpu.memory_space<vmem>>, %arg3: memref<1x32xf32, #tpu.memory_space<vmem>>, %arg4: memref<1x32xf32, #tpu.memory_space<vmem>>, %arg5: memref<32x32xf32, #tpu.memory_space<vmem>>, %arg6: memref<32x64xf32, #tpu.memory_space<vmem>>, %arg7: memref<128x32xf32, #tpu.memory_space<vmem>>, %arg8: memref<1x32xf32, #tpu.memory_space<vmem>>, %arg9: memref<1x32xf32, #tpu.memory_space<vmem>>, %arg10: memref<1x32xf32, #tpu.memory_space<vmem>>, %arg11: memref<32x32xf32, #tpu.memory_space<vmem>>, %arg12: memref<1x32xf32, #tpu.memory_space<vmem>>, %arg13: memref<32x64xf32, #tpu.memory_space<vmem>>, %arg14: memref<1x64xf32, #tpu.memory_space<vmem>>, %arg15: memref<64x32xf32, #tpu.memory_space<vmem>>, %arg16: memref<1x32xf32, #tpu.memory_space<vmem>>, %arg17: memref<64x32xf32, #tpu.memory_space<vmem>>) attributes {dimension_semantics = [#tpu.dimension_semantics<parallel>], iteration_bounds = array<i64: 2>, scalar_prefetch = 0 : i64, scratch_operands = 0 : i64, tpu.core_type = #tpu.core_type<tc>, window_params = [{transform_indices = @transform_0, window_bounds = array<i64: 64, 32>}, {transform_indices = @transform_1, window_bounds = array<i64: 1, 4, 16, 32>}, {pipeline_mode = #tpu.pipeline_mode<synchronous>, transform_indices = @transform_2, window_bounds = array<i64: 1, 32>}, {pipeline_mode = #tpu.pipeline_mode<synchronous>, transform_indices = @transform_3, window_bounds = array<i64: 1, 32>}, {pipeline_mode = #tpu.pipeline_mode<synchronous>, transform_indices = @transform_4, window_bounds = array<i64: 32, 32>}, {pipeline_mode = #tpu.pipeline_mode<synchronous>, transform_indices = @transform_5, window_bounds = array<i64: 32, 64>}, {pipeline_mode = #tpu.pipeline_mode<synchronous>, transform_indices = @transform_6, window_bounds = array<i64: 128, 32>}, {pipeline_mode = #tpu.pipeline_mode<synchronous>, transform_indices = @transform_7, window_bounds = array<i64: 1, 32>}, {pipeline_mode = #tpu.pipeline_mode<synchronous>, transform_indices = @transform_8, window_bounds = array<i64: 1, 32>}, {pipeline_mode = #tpu.pipeline_mode<synchronous>, transform_indices = @transform_9, window_bounds = array<i64: 1, 32>}, {pipeline_mode = #tpu.pipeline_mode<synchronous>, transform_indices = @transform_10, window_bounds = array<i64: 32, 32>}, {pipeline_mode = #tpu.pipeline_mode<synchronous>, transform_indices = @transform_11, window_bounds = array<i64: 1, 32>}, {pipeline_mode = #tpu.pipeline_mode<synchronous>, transform_indices = @transform_12, window_bounds = array<i64: 32, 64>}, {pipeline_mode = #tpu.pipeline_mode<synchronous>, transform_indices = @transform_13, window_bounds = array<i64: 1, 64>}, {pipeline_mode = #tpu.pipeline_mode<synchronous>, transform_indices = @transform_14, window_bounds = array<i64: 64, 32>}, {pipeline_mode = #tpu.pipeline_mode<synchronous>, transform_indices = @transform_15, window_bounds = array<i64: 1, 32>}, {transform_indices = @transform_16, window_bounds = array<i64: 64, 32>}]} {
    %c0 = arith.constant 0 : index
    %c0_0 = arith.constant 0 : index
    %0 = vector.load %arg3[%c0, %c0_0] : memref<1x32xf32, #tpu.memory_space<vmem>>, vector<1x32xf32>
    %c0_1 = arith.constant 0 : index
    %c0_2 = arith.constant 0 : index
    %1 = vector.load %arg4[%c0_1, %c0_2] : memref<1x32xf32, #tpu.memory_space<vmem>>, vector<1x32xf32>
    %c0_3 = arith.constant 0 : index
    %c0_4 = arith.constant 0 : index
    %2 = vector.load %arg1[%c0_3, %c0_4] : memref<64x32xf32, #tpu.memory_space<vmem>>, vector<64x32xf32>
    %cst = arith.constant dense<0.000000e+00> : vector<64xf32>
    %3 = vector.multi_reduction <add>, %2, %cst [1] : vector<64x32xf32> to vector<64xf32>
    %4 = vector.shape_cast %3 : vector<64xf32> to vector<64x1xf32>
    %cst_5 = arith.constant 3.200000e+01 : f32
    %5 = vector.broadcast %cst_5 : f32 to vector<64x1xf32>
    %6 = arith.divf %4, %5 : vector<64x1xf32>
    %7 = vector.broadcast %6 : vector<64x1xf32> to vector<64x32xf32>
    %8 = arith.subf %2, %7 : vector<64x32xf32>
    %9 = arith.mulf %8, %8 : vector<64x32xf32>
    %cst_6 = arith.constant dense<0.000000e+00> : vector<64xf32>
    %10 = vector.multi_reduction <add>, %9, %cst_6 [1] : vector<64x32xf32> to vector<64xf32>
    %11 = vector.shape_cast %10 : vector<64xf32> to vector<64x1xf32>
    %cst_7 = arith.constant 3.200000e+01 : f32
    %12 = vector.broadcast %cst_7 : f32 to vector<64x1xf32>
    %13 = arith.divf %11, %12 : vector<64x1xf32>
    %14 = vector.broadcast %6 : vector<64x1xf32> to vector<64x32xf32>
    %15 = arith.subf %2, %14 : vector<64x32xf32>
    %cst_8 = arith.constant 9.99999974E-6 : f32
    %16 = vector.broadcast %cst_8 : f32 to vector<64x1xf32>
    %17 = arith.addf %13, %16 : vector<64x1xf32>
    %18 = math.rsqrt %17 : vector<64x1xf32>
    %19 = vector.broadcast %18 : vector<64x1xf32> to vector<64x32xf32>
    %20 = arith.mulf %15, %19 : vector<64x32xf32>
    %21 = vector.broadcast %0 : vector<1x32xf32> to vector<64x32xf32>
    %22 = arith.mulf %20, %21 : vector<64x32xf32>
    %23 = vector.broadcast %1 : vector<1x32xf32> to vector<64x32xf32>
    %24 = arith.addf %22, %23 : vector<64x32xf32>
    %c0_9 = arith.constant 0 : index
    %c0_10 = arith.constant 0 : index
    %25 = vector.load %arg5[%c0_9, %c0_10] : memref<32x32xf32, #tpu.memory_space<vmem>>, vector<32x32xf32>
    %cst_11 = arith.constant dense<0.000000e+00> : vector<64x32xf32>
    %26 = tpu.matmul %24, %25, %cst_11 {dimension_numbers = #tpu.dot_dimension_numbers<[1], [0], [0], [1], [0, 0, 1, 1], [], []>} : vector<64x32xf32>, vector<32x32xf32>, vector<64x32xf32> -> vector<64x32xf32>
    %cst_12 = arith.constant 0.000000e+00 : f32
    %27 = vector.broadcast %cst_12 : f32 to vector<16x32xf32>
    %c0_13 = arith.constant 0 : index
    %c0_14 = arith.constant 0 : index
    %c0_15 = arith.constant 0 : index
    %c0_16 = arith.constant 0 : index
    %28 = vector.load %arg2[%c0_13, %c0_14, %c0_15, %c0_16] : memref<1x4x16x32xf32, #tpu.memory_space<vmem>>, vector<1x1x16x32xf32>
    %29 = vector.shape_cast %28 : vector<1x1x16x32xf32> to vector<16x32xf32>
    %cst_17 = arith.constant dense<0.000000e+00> : vector<16xf32>
    %30 = vector.multi_reduction <add>, %29, %cst_17 [1] : vector<16x32xf32> to vector<16xf32>
    %31 = vector.shape_cast %30 : vector<16xf32> to vector<16x1xf32>
    %cst_18 = arith.constant 3.200000e+01 : f32
    %32 = vector.broadcast %cst_18 : f32 to vector<16x1xf32>
    %33 = arith.divf %31, %32 : vector<16x1xf32>
    %34 = vector.broadcast %33 : vector<16x1xf32> to vector<16x32xf32>
    %35 = arith.subf %29, %34 : vector<16x32xf32>
    %36 = arith.mulf %35, %35 : vector<16x32xf32>
    %cst_19 = arith.constant dense<0.000000e+00> : vector<16xf32>
    %37 = vector.multi_reduction <add>, %36, %cst_19 [1] : vector<16x32xf32> to vector<16xf32>
    %38 = vector.shape_cast %37 : vector<16xf32> to vector<16x1xf32>
    %cst_20 = arith.constant 3.200000e+01 : f32
    %39 = vector.broadcast %cst_20 : f32 to vector<16x1xf32>
    %40 = arith.divf %38, %39 : vector<16x1xf32>
    %41 = vector.broadcast %33 : vector<16x1xf32> to vector<16x32xf32>
    %42 = arith.subf %29, %41 : vector<16x32xf32>
    %cst_21 = arith.constant 9.99999974E-6 : f32
    %43 = vector.broadcast %cst_21 : f32 to vector<16x1xf32>
    %44 = arith.addf %40, %43 : vector<16x1xf32>
    %45 = math.rsqrt %44 : vector<16x1xf32>
    %46 = vector.broadcast %45 : vector<16x1xf32> to vector<16x32xf32>
    %47 = arith.mulf %42, %46 : vector<16x32xf32>
    %48 = vector.broadcast %0 : vector<1x32xf32> to vector<16x32xf32>
    %49 = arith.mulf %47, %48 : vector<16x32xf32>
    %50 = vector.broadcast %1 : vector<1x32xf32> to vector<16x32xf32>
    %51 = arith.addf %49, %50 : vector<16x32xf32>
    %c0_22 = arith.constant 0 : index
    %c0_23 = arith.constant 0 : index
    %52 = vector.load %arg7[%c0_22, %c0_23] : memref<128x32xf32, #tpu.memory_space<vmem>>, vector<32x32xf32>
    %cst_24 = arith.constant dense<0.000000e+00> : vector<16x32xf32>
    %53 = tpu.matmul %51, %52, %cst_24 {dimension_numbers = #tpu.dot_dimension_numbers<[1], [0], [0], [1], [0, 0, 1, 1], [], []>} : vector<16x32xf32>, vector<32x32xf32>, vector<16x32xf32> -> vector<16x32xf32>
    %54 = arith.addf %27, %53 : vector<16x32xf32>
    %c0_25 = arith.constant 0 : index
    %c1 = arith.constant 1 : index
    %c0_26 = arith.constant 0 : index
    %c0_27 = arith.constant 0 : index
    %55 = vector.load %arg2[%c0_25, %c1, %c0_26, %c0_27] : memref<1x4x16x32xf32, #tpu.memory_space<vmem>>, vector<1x1x16x32xf32>
    %56 = vector.shape_cast %55 : vector<1x1x16x32xf32> to vector<16x32xf32>
    %cst_28 = arith.constant dense<0.000000e+00> : vector<16xf32>
    %57 = vector.multi_reduction <add>, %56, %cst_28 [1] : vector<16x32xf32> to vector<16xf32>
    %58 = vector.shape_cast %57 : vector<16xf32> to vector<16x1xf32>
    %cst_29 = arith.constant 3.200000e+01 : f32
    %59 = vector.broadcast %cst_29 : f32 to vector<16x1xf32>
    %60 = arith.divf %58, %59 : vector<16x1xf32>
    %61 = vector.broadcast %60 : vector<16x1xf32> to vector<16x32xf32>
    %62 = arith.subf %56, %61 : vector<16x32xf32>
    %63 = arith.mulf %62, %62 : vector<16x32xf32>
    %cst_30 = arith.constant dense<0.000000e+00> : vector<16xf32>
    %64 = vector.multi_reduction <add>, %63, %cst_30 [1] : vector<16x32xf32> to vector<16xf32>
    %65 = vector.shape_cast %64 : vector<16xf32> to vector<16x1xf32>
    %cst_31 = arith.constant 3.200000e+01 : f32
    %66 = vector.broadcast %cst_31 : f32 to vector<16x1xf32>
    %67 = arith.divf %65, %66 : vector<16x1xf32>
    %68 = vector.broadcast %60 : vector<16x1xf32> to vector<16x32xf32>
    %69 = arith.subf %56, %68 : vector<16x32xf32>
    %cst_32 = arith.constant 9.99999974E-6 : f32
    %70 = vector.broadcast %cst_32 : f32 to vector<16x1xf32>
    %71 = arith.addf %67, %70 : vector<16x1xf32>
    %72 = math.rsqrt %71 : vector<16x1xf32>
    %73 = vector.broadcast %72 : vector<16x1xf32> to vector<16x32xf32>
    %74 = arith.mulf %69, %73 : vector<16x32xf32>
    %75 = vector.broadcast %0 : vector<1x32xf32> to vector<16x32xf32>
    %76 = arith.mulf %74, %75 : vector<16x32xf32>
    %77 = vector.broadcast %1 : vector<1x32xf32> to vector<16x32xf32>
    %78 = arith.addf %76, %77 : vector<16x32xf32>
    %c32 = arith.constant 32 : index
    %c0_33 = arith.constant 0 : index
    %79 = vector.load %arg7[%c32, %c0_33] : memref<128x32xf32, #tpu.memory_space<vmem>>, vector<32x32xf32>
    %cst_34 = arith.constant dense<0.000000e+00> : vector<16x32xf32>
    %80 = tpu.matmul %78, %79, %cst_34 {dimension_numbers = #tpu.dot_dimension_numbers<[1], [0], [0], [1], [0, 0, 1, 1], [], []>} : vector<16x32xf32>, vector<32x32xf32>, vector<16x32xf32> -> vector<16x32xf32>
    %81 = arith.addf %54, %80 : vector<16x32xf32>
    %c0_35 = arith.constant 0 : index
    %c2 = arith.constant 2 : index
    %c0_36 = arith.constant 0 : index
    %c0_37 = arith.constant 0 : index
    %82 = vector.load %arg2[%c0_35, %c2, %c0_36, %c0_37] : memref<1x4x16x32xf32, #tpu.memory_space<vmem>>, vector<1x1x16x32xf32>
    %83 = vector.shape_cast %82 : vector<1x1x16x32xf32> to vector<16x32xf32>
    %cst_38 = arith.constant dense<0.000000e+00> : vector<16xf32>
    %84 = vector.multi_reduction <add>, %83, %cst_38 [1] : vector<16x32xf32> to vector<16xf32>
    %85 = vector.shape_cast %84 : vector<16xf32> to vector<16x1xf32>
    %cst_39 = arith.constant 3.200000e+01 : f32
    %86 = vector.broadcast %cst_39 : f32 to vector<16x1xf32>
    %87 = arith.divf %85, %86 : vector<16x1xf32>
    %88 = vector.broadcast %87 : vector<16x1xf32> to vector<16x32xf32>
    %89 = arith.subf %83, %88 : vector<16x32xf32>
    %90 = arith.mulf %89, %89 : vector<16x32xf32>
    %cst_40 = arith.constant dense<0.000000e+00> : vector<16xf32>
    %91 = vector.multi_reduction <add>, %90, %cst_40 [1] : vector<16x32xf32> to vector<16xf32>
    %92 = vector.shape_cast %91 : vector<16xf32> to vector<16x1xf32>
    %cst_41 = arith.constant 3.200000e+01 : f32
    %93 = vector.broadcast %cst_41 : f32 to vector<16x1xf32>
    %94 = arith.divf %92, %93 : vector<16x1xf32>
    %95 = vector.broadcast %87 : vector<16x1xf32> to vector<16x32xf32>
    %96 = arith.subf %83, %95 : vector<16x32xf32>
    %cst_42 = arith.constant 9.99999974E-6 : f32
    %97 = vector.broadcast %cst_42 : f32 to vector<16x1xf32>
    %98 = arith.addf %94, %97 : vector<16x1xf32>
    %99 = math.rsqrt %98 : vector<16x1xf32>
    %100 = vector.broadcast %99 : vector<16x1xf32> to vector<16x32xf32>
    %101 = arith.mulf %96, %100 : vector<16x32xf32>
    %102 = vector.broadcast %0 : vector<1x32xf32> to vector<16x32xf32>
    %103 = arith.mulf %101, %102 : vector<16x32xf32>
    %104 = vector.broadcast %1 : vector<1x32xf32> to vector<16x32xf32>
    %105 = arith.addf %103, %104 : vector<16x32xf32>
    %c64 = arith.constant 64 : index
    %c0_43 = arith.constant 0 : index
    %106 = vector.load %arg7[%c64, %c0_43] : memref<128x32xf32, #tpu.memory_space<vmem>>, vector<32x32xf32>
    %cst_44 = arith.constant dense<0.000000e+00> : vector<16x32xf32>
    %107 = tpu.matmul %105, %106, %cst_44 {dimension_numbers = #tpu.dot_dimension_numbers<[1], [0], [0], [1], [0, 0, 1, 1], [], []>} : vector<16x32xf32>, vector<32x32xf32>, vector<16x32xf32> -> vector<16x32xf32>
    %108 = arith.addf %81, %107 : vector<16x32xf32>
    %c0_45 = arith.constant 0 : index
    %c3 = arith.constant 3 : index
    %c0_46 = arith.constant 0 : index
    %c0_47 = arith.constant 0 : index
    %109 = vector.load %arg2[%c0_45, %c3, %c0_46, %c0_47] : memref<1x4x16x32xf32, #tpu.memory_space<vmem>>, vector<1x1x16x32xf32>
    %110 = vector.shape_cast %109 : vector<1x1x16x32xf32> to vector<16x32xf32>
    %cst_48 = arith.constant dense<0.000000e+00> : vector<16xf32>
    %111 = vector.multi_reduction <add>, %110, %cst_48 [1] : vector<16x32xf32> to vector<16xf32>
    %112 = vector.shape_cast %111 : vector<16xf32> to vector<16x1xf32>
    %cst_49 = arith.constant 3.200000e+01 : f32
    %113 = vector.broadcast %cst_49 : f32 to vector<16x1xf32>
    %114 = arith.divf %112, %113 : vector<16x1xf32>
    %115 = vector.broadcast %114 : vector<16x1xf32> to vector<16x32xf32>
    %116 = arith.subf %110, %115 : vector<16x32xf32>
    %117 = arith.mulf %116, %116 : vector<16x32xf32>
    %cst_50 = arith.constant dense<0.000000e+00> : vector<16xf32>
    %118 = vector.multi_reduction <add>, %117, %cst_50 [1] : vector<16x32xf32> to vector<16xf32>
    %119 = vector.shape_cast %118 : vector<16xf32> to vector<16x1xf32>
    %cst_51 = arith.constant 3.200000e+01 : f32
    %120 = vector.broadcast %cst_51 : f32 to vector<16x1xf32>
    %121 = arith.divf %119, %120 : vector<16x1xf32>
    %122 = vector.broadcast %114 : vector<16x1xf32> to vector<16x32xf32>
    %123 = arith.subf %110, %122 : vector<16x32xf32>
    %cst_52 = arith.constant 9.99999974E-6 : f32
    %124 = vector.broadcast %cst_52 : f32 to vector<16x1xf32>
    %125 = arith.addf %121, %124 : vector<16x1xf32>
    %126 = math.rsqrt %125 : vector<16x1xf32>
    %127 = vector.broadcast %126 : vector<16x1xf32> to vector<16x32xf32>
    %128 = arith.mulf %123, %127 : vector<16x32xf32>
    %129 = vector.broadcast %0 : vector<1x32xf32> to vector<16x32xf32>
    %130 = arith.mulf %128, %129 : vector<16x32xf32>
    %131 = vector.broadcast %1 : vector<1x32xf32> to vector<16x32xf32>
    %132 = arith.addf %130, %131 : vector<16x32xf32>
    %c96 = arith.constant 96 : index
    %c0_53 = arith.constant 0 : index
    %133 = vector.load %arg7[%c96, %c0_53] : memref<128x32xf32, #tpu.memory_space<vmem>>, vector<32x32xf32>
    %cst_54 = arith.constant dense<0.000000e+00> : vector<16x32xf32>
    %134 = tpu.matmul %132, %133, %cst_54 {dimension_numbers = #tpu.dot_dimension_numbers<[1], [0], [0], [1], [0, 0, 1, 1], [], []>} : vector<16x32xf32>, vector<32x32xf32>, vector<16x32xf32> -> vector<16x32xf32>
    %135 = arith.addf %108, %134 : vector<16x32xf32>
    %c0_55 = arith.constant 0 : index
    %c0_56 = arith.constant 0 : index
    %136 = vector.load %arg8[%c0_55, %c0_56] : memref<1x32xf32, #tpu.memory_space<vmem>>, vector<1x32xf32>
    %137 = vector.broadcast %136 : vector<1x32xf32> to vector<16x32xf32>
    %138 = arith.addf %135, %137 : vector<16x32xf32>
    %c0_57 = arith.constant 0 : index
    %c0_58 = arith.constant 0 : index
    %139 = vector.load %arg9[%c0_57, %c0_58] : memref<1x32xf32, #tpu.memory_space<vmem>>, vector<1x32xf32>
    %c0_59 = arith.constant 0 : index
    %c0_60 = arith.constant 0 : index
    %140 = vector.load %arg10[%c0_59, %c0_60] : memref<1x32xf32, #tpu.memory_space<vmem>>, vector<1x32xf32>
    %cst_61 = arith.constant dense<0.000000e+00> : vector<16xf32>
    %141 = vector.multi_reduction <add>, %138, %cst_61 [1] : vector<16x32xf32> to vector<16xf32>
    %142 = vector.shape_cast %141 : vector<16xf32> to vector<16x1xf32>
    %cst_62 = arith.constant 3.200000e+01 : f32
    %143 = vector.broadcast %cst_62 : f32 to vector<16x1xf32>
    %144 = arith.divf %142, %143 : vector<16x1xf32>
    %145 = vector.broadcast %144 : vector<16x1xf32> to vector<16x32xf32>
    %146 = arith.subf %138, %145 : vector<16x32xf32>
    %147 = arith.mulf %146, %146 : vector<16x32xf32>
    %cst_63 = arith.constant dense<0.000000e+00> : vector<16xf32>
    %148 = vector.multi_reduction <add>, %147, %cst_63 [1] : vector<16x32xf32> to vector<16xf32>
    %149 = vector.shape_cast %148 : vector<16xf32> to vector<16x1xf32>
    %cst_64 = arith.constant 3.200000e+01 : f32
    %150 = vector.broadcast %cst_64 : f32 to vector<16x1xf32>
    %151 = arith.divf %149, %150 : vector<16x1xf32>
    %152 = vector.broadcast %144 : vector<16x1xf32> to vector<16x32xf32>
    %153 = arith.subf %138, %152 : vector<16x32xf32>
    %cst_65 = arith.constant 9.99999974E-6 : f32
    %154 = vector.broadcast %cst_65 : f32 to vector<16x1xf32>
    %155 = arith.addf %151, %154 : vector<16x1xf32>
    %156 = math.rsqrt %155 : vector<16x1xf32>
    %157 = vector.broadcast %156 : vector<16x1xf32> to vector<16x32xf32>
    %158 = arith.mulf %153, %157 : vector<16x32xf32>
    %159 = vector.broadcast %139 : vector<1x32xf32> to vector<16x32xf32>
    %160 = arith.mulf %158, %159 : vector<16x32xf32>
    %161 = vector.broadcast %140 : vector<1x32xf32> to vector<16x32xf32>
    %162 = arith.addf %160, %161 : vector<16x32xf32>
    %c0_66 = arith.constant 0 : index
    %c0_67 = arith.constant 0 : index
    %163 = vector.load %arg6[%c0_66, %c0_67] : memref<32x64xf32, #tpu.memory_space<vmem>>, vector<32x64xf32>
    %cst_68 = arith.constant dense<0.000000e+00> : vector<16x64xf32>
    %164 = tpu.matmul %162, %163, %cst_68 {dimension_numbers = #tpu.dot_dimension_numbers<[1], [0], [0], [1], [0, 0, 1, 1], [], []>} : vector<16x32xf32>, vector<32x64xf32>, vector<16x64xf32> -> vector<16x64xf32>
    %165 = vector.extract_strided_slice %164 {offsets = [0, 0], sizes = [16, 32], strides = [1, 1]} : vector<16x64xf32> to vector<16x32xf32>
    %166 = vector.extract_strided_slice %164 {offsets = [0, 32], sizes = [16, 32], strides = [1, 1]} : vector<16x64xf32> to vector<16x32xf32>
    %167 = vector.extract_strided_slice %26 {offsets = [0, 0], sizes = [64, 8], strides = [1, 1]} : vector<64x32xf32> to vector<64x8xf32>
    %168 = vector.extract_strided_slice %165 {offsets = [0, 0], sizes = [16, 8], strides = [1, 1]} : vector<16x32xf32> to vector<16x8xf32>
    %cst_69 = arith.constant dense<0.000000e+00> : vector<64x16xf32>
    %169 = tpu.matmul %167, %168, %cst_69 {dimension_numbers = #tpu.dot_dimension_numbers<[1], [1], [0], [0], [0, 0, 1, 0], [], []>} : vector<64x8xf32>, vector<16x8xf32>, vector<64x16xf32> -> vector<64x16xf32>
    %cst_70 = arith.constant 0.353553385 : f32
    %170 = vector.broadcast %cst_70 : f32 to vector<64x16xf32>
    %171 = arith.mulf %169, %170 : vector<64x16xf32>
    %cst_71 = arith.constant dense<0xFF800000> : vector<64xf32>
    %172 = vector.multi_reduction <maximumf>, %171, %cst_71 [1] : vector<64x16xf32> to vector<64xf32>
    %173 = vector.shape_cast %172 : vector<64xf32> to vector<64x1xf32>
    %174 = vector.broadcast %173 : vector<64x1xf32> to vector<64x16xf32>
    %175 = arith.subf %171, %174 : vector<64x16xf32>
    %176 = math.exp %175 : vector<64x16xf32>
    %cst_72 = arith.constant dense<0.000000e+00> : vector<64xf32>
    %177 = vector.multi_reduction <add>, %176, %cst_72 [1] : vector<64x16xf32> to vector<64xf32>
    %178 = vector.shape_cast %177 : vector<64xf32> to vector<64x1xf32>
    %179 = tpu.reciprocal %178 {approx = true} : vector<64x1xf32> -> vector<64x1xf32>
    %180 = vector.broadcast %179 : vector<64x1xf32> to vector<64x16xf32>
    %181 = arith.mulf %176, %180 : vector<64x16xf32>
    %182 = vector.extract_strided_slice %166 {offsets = [0, 0], sizes = [16, 8], strides = [1, 1]} : vector<16x32xf32> to vector<16x8xf32>
    %cst_73 = arith.constant dense<0.000000e+00> : vector<64x8xf32>
    %183 = tpu.matmul %181, %182, %cst_73 {dimension_numbers = #tpu.dot_dimension_numbers<[1], [0], [0], [1], [0, 0, 1, 1], [], []>} : vector<64x16xf32>, vector<16x8xf32>, vector<64x8xf32> -> vector<64x8xf32>
    %184 = vector.extract_strided_slice %26 {offsets = [0, 8], sizes = [64, 8], strides = [1, 1]} : vector<64x32xf32> to vector<64x8xf32>
    %185 = vector.extract_strided_slice %165 {offsets = [0, 8], sizes = [16, 8], strides = [1, 1]} : vector<16x32xf32> to vector<16x8xf32>
    %cst_74 = arith.constant dense<0.000000e+00> : vector<64x16xf32>
    %186 = tpu.matmul %184, %185, %cst_74 {dimension_numbers = #tpu.dot_dimension_numbers<[1], [1], [0], [0], [0, 0, 1, 0], [], []>} : vector<64x8xf32>, vector<16x8xf32>, vector<64x16xf32> -> vector<64x16xf32>
    %cst_75 = arith.constant 0.353553385 : f32
    %187 = vector.broadcast %cst_75 : f32 to vector<64x16xf32>
    %188 = arith.mulf %186, %187 : vector<64x16xf32>
    %cst_76 = arith.constant dense<0xFF800000> : vector<64xf32>
    %189 = vector.multi_reduction <maximumf>, %188, %cst_76 [1] : vector<64x16xf32> to vector<64xf32>
    %190 = vector.shape_cast %189 : vector<64xf32> to vector<64x1xf32>
    %191 = vector.broadcast %190 : vector<64x1xf32> to vector<64x16xf32>
    %192 = arith.subf %188, %191 : vector<64x16xf32>
    %193 = math.exp %192 : vector<64x16xf32>
    %cst_77 = arith.constant dense<0.000000e+00> : vector<64xf32>
    %194 = vector.multi_reduction <add>, %193, %cst_77 [1] : vector<64x16xf32> to vector<64xf32>
    %195 = vector.shape_cast %194 : vector<64xf32> to vector<64x1xf32>
    %196 = tpu.reciprocal %195 {approx = true} : vector<64x1xf32> -> vector<64x1xf32>
    %197 = vector.broadcast %196 : vector<64x1xf32> to vector<64x16xf32>
    %198 = arith.mulf %193, %197 : vector<64x16xf32>
    %199 = vector.extract_strided_slice %166 {offsets = [0, 8], sizes = [16, 8], strides = [1, 1]} : vector<16x32xf32> to vector<16x8xf32>
    %cst_78 = arith.constant dense<0.000000e+00> : vector<64x8xf32>
    %200 = tpu.matmul %198, %199, %cst_78 {dimension_numbers = #tpu.dot_dimension_numbers<[1], [0], [0], [1], [0, 0, 1, 1], [], []>} : vector<64x16xf32>, vector<16x8xf32>, vector<64x8xf32> -> vector<64x8xf32>
    %201 = vector.extract_strided_slice %26 {offsets = [0, 16], sizes = [64, 8], strides = [1, 1]} : vector<64x32xf32> to vector<64x8xf32>
    %202 = vector.extract_strided_slice %165 {offsets = [0, 16], sizes = [16, 8], strides = [1, 1]} : vector<16x32xf32> to vector<16x8xf32>
    %cst_79 = arith.constant dense<0.000000e+00> : vector<64x16xf32>
    %203 = tpu.matmul %201, %202, %cst_79 {dimension_numbers = #tpu.dot_dimension_numbers<[1], [1], [0], [0], [0, 0, 1, 0], [], []>} : vector<64x8xf32>, vector<16x8xf32>, vector<64x16xf32> -> vector<64x16xf32>
    %cst_80 = arith.constant 0.353553385 : f32
    %204 = vector.broadcast %cst_80 : f32 to vector<64x16xf32>
    %205 = arith.mulf %203, %204 : vector<64x16xf32>
    %cst_81 = arith.constant dense<0xFF800000> : vector<64xf32>
    %206 = vector.multi_reduction <maximumf>, %205, %cst_81 [1] : vector<64x16xf32> to vector<64xf32>
    %207 = vector.shape_cast %206 : vector<64xf32> to vector<64x1xf32>
    %208 = vector.broadcast %207 : vector<64x1xf32> to vector<64x16xf32>
    %209 = arith.subf %205, %208 : vector<64x16xf32>
    %210 = math.exp %209 : vector<64x16xf32>
    %cst_82 = arith.constant dense<0.000000e+00> : vector<64xf32>
    %211 = vector.multi_reduction <add>, %210, %cst_82 [1] : vector<64x16xf32> to vector<64xf32>
    %212 = vector.shape_cast %211 : vector<64xf32> to vector<64x1xf32>
    %213 = tpu.reciprocal %212 {approx = true} : vector<64x1xf32> -> vector<64x1xf32>
    %214 = vector.broadcast %213 : vector<64x1xf32> to vector<64x16xf32>
    %215 = arith.mulf %210, %214 : vector<64x16xf32>
    %216 = vector.extract_strided_slice %166 {offsets = [0, 16], sizes = [16, 8], strides = [1, 1]} : vector<16x32xf32> to vector<16x8xf32>
    %cst_83 = arith.constant dense<0.000000e+00> : vector<64x8xf32>
    %217 = tpu.matmul %215, %216, %cst_83 {dimension_numbers = #tpu.dot_dimension_numbers<[1], [0], [0], [1], [0, 0, 1, 1], [], []>} : vector<64x16xf32>, vector<16x8xf32>, vector<64x8xf32> -> vector<64x8xf32>
    %218 = vector.extract_strided_slice %26 {offsets = [0, 24], sizes = [64, 8], strides = [1, 1]} : vector<64x32xf32> to vector<64x8xf32>
    %219 = vector.extract_strided_slice %165 {offsets = [0, 24], sizes = [16, 8], strides = [1, 1]} : vector<16x32xf32> to vector<16x8xf32>
    %cst_84 = arith.constant dense<0.000000e+00> : vector<64x16xf32>
    %220 = tpu.matmul %218, %219, %cst_84 {dimension_numbers = #tpu.dot_dimension_numbers<[1], [1], [0], [0], [0, 0, 1, 0], [], []>} : vector<64x8xf32>, vector<16x8xf32>, vector<64x16xf32> -> vector<64x16xf32>
    %cst_85 = arith.constant 0.353553385 : f32
    %221 = vector.broadcast %cst_85 : f32 to vector<64x16xf32>
    %222 = arith.mulf %220, %221 : vector<64x16xf32>
    %cst_86 = arith.constant dense<0xFF800000> : vector<64xf32>
    %223 = vector.multi_reduction <maximumf>, %222, %cst_86 [1] : vector<64x16xf32> to vector<64xf32>
    %224 = vector.shape_cast %223 : vector<64xf32> to vector<64x1xf32>
    %225 = vector.broadcast %224 : vector<64x1xf32> to vector<64x16xf32>
    %226 = arith.subf %222, %225 : vector<64x16xf32>
    %227 = math.exp %226 : vector<64x16xf32>
    %cst_87 = arith.constant dense<0.000000e+00> : vector<64xf32>
    %228 = vector.multi_reduction <add>, %227, %cst_87 [1] : vector<64x16xf32> to vector<64xf32>
    %229 = vector.shape_cast %228 : vector<64xf32> to vector<64x1xf32>
    %230 = tpu.reciprocal %229 {approx = true} : vector<64x1xf32> -> vector<64x1xf32>
    %231 = vector.broadcast %230 : vector<64x1xf32> to vector<64x16xf32>
    %232 = arith.mulf %227, %231 : vector<64x16xf32>
    %233 = vector.extract_strided_slice %166 {offsets = [0, 24], sizes = [16, 8], strides = [1, 1]} : vector<16x32xf32> to vector<16x8xf32>
    %cst_88 = arith.constant dense<0.000000e+00> : vector<64x8xf32>
    %234 = tpu.matmul %232, %233, %cst_88 {dimension_numbers = #tpu.dot_dimension_numbers<[1], [0], [0], [1], [0, 0, 1, 1], [], []>} : vector<64x16xf32>, vector<16x8xf32>, vector<64x8xf32> -> vector<64x8xf32>
    %235 = tpu.concatenate %183, %200, %217, %234 in 1 : vector<64x8xf32>, vector<64x8xf32>, vector<64x8xf32>, vector<64x8xf32> -> vector<64x32xf32>
    %c0_89 = arith.constant 0 : index
    %c0_90 = arith.constant 0 : index
    %236 = vector.load %arg11[%c0_89, %c0_90] : memref<32x32xf32, #tpu.memory_space<vmem>>, vector<32x32xf32>
    %cst_91 = arith.constant dense<0.000000e+00> : vector<64x32xf32>
    %237 = tpu.matmul %235, %236, %cst_91 {dimension_numbers = #tpu.dot_dimension_numbers<[1], [0], [0], [1], [0, 0, 1, 1], [], []>} : vector<64x32xf32>, vector<32x32xf32>, vector<64x32xf32> -> vector<64x32xf32>
    %238 = arith.addf %2, %237 : vector<64x32xf32>
    %c0_92 = arith.constant 0 : index
    %c0_93 = arith.constant 0 : index
    %239 = vector.load %arg12[%c0_92, %c0_93] : memref<1x32xf32, #tpu.memory_space<vmem>>, vector<1x32xf32>
    %240 = vector.broadcast %239 : vector<1x32xf32> to vector<64x32xf32>
    %241 = arith.addf %238, %240 : vector<64x32xf32>
    %cst_94 = arith.constant dense<0.000000e+00> : vector<64xf32>
    %242 = vector.multi_reduction <add>, %241, %cst_94 [1] : vector<64x32xf32> to vector<64xf32>
    %243 = vector.shape_cast %242 : vector<64xf32> to vector<64x1xf32>
    %cst_95 = arith.constant 3.200000e+01 : f32
    %244 = vector.broadcast %cst_95 : f32 to vector<64x1xf32>
    %245 = arith.divf %243, %244 : vector<64x1xf32>
    %246 = vector.broadcast %245 : vector<64x1xf32> to vector<64x32xf32>
    %247 = arith.subf %241, %246 : vector<64x32xf32>
    %248 = arith.mulf %247, %247 : vector<64x32xf32>
    %cst_96 = arith.constant dense<0.000000e+00> : vector<64xf32>
    %249 = vector.multi_reduction <add>, %248, %cst_96 [1] : vector<64x32xf32> to vector<64xf32>
    %250 = vector.shape_cast %249 : vector<64xf32> to vector<64x1xf32>
    %cst_97 = arith.constant 3.200000e+01 : f32
    %251 = vector.broadcast %cst_97 : f32 to vector<64x1xf32>
    %252 = arith.divf %250, %251 : vector<64x1xf32>
    %253 = vector.broadcast %245 : vector<64x1xf32> to vector<64x32xf32>
    %254 = arith.subf %241, %253 : vector<64x32xf32>
    %cst_98 = arith.constant 9.99999974E-6 : f32
    %255 = vector.broadcast %cst_98 : f32 to vector<64x1xf32>
    %256 = arith.addf %252, %255 : vector<64x1xf32>
    %257 = math.rsqrt %256 : vector<64x1xf32>
    %258 = vector.broadcast %257 : vector<64x1xf32> to vector<64x32xf32>
    %259 = arith.mulf %254, %258 : vector<64x32xf32>
    %260 = vector.broadcast %0 : vector<1x32xf32> to vector<64x32xf32>
    %261 = arith.mulf %259, %260 : vector<64x32xf32>
    %262 = vector.broadcast %1 : vector<1x32xf32> to vector<64x32xf32>
    %263 = arith.addf %261, %262 : vector<64x32xf32>
    %c0_99 = arith.constant 0 : index
    %c0_100 = arith.constant 0 : index
    %264 = vector.load %arg13[%c0_99, %c0_100] : memref<32x64xf32, #tpu.memory_space<vmem>>, vector<32x64xf32>
    %cst_101 = arith.constant dense<0.000000e+00> : vector<64x64xf32>
    %265 = tpu.matmul %263, %264, %cst_101 {dimension_numbers = #tpu.dot_dimension_numbers<[1], [0], [0], [1], [0, 0, 1, 1], [], []>} : vector<64x32xf32>, vector<32x64xf32>, vector<64x64xf32> -> vector<64x64xf32>
    %c0_102 = arith.constant 0 : index
    %c0_103 = arith.constant 0 : index
    %266 = vector.load %arg14[%c0_102, %c0_103] : memref<1x64xf32, #tpu.memory_space<vmem>>, vector<1x64xf32>
    %267 = vector.broadcast %266 : vector<1x64xf32> to vector<64x64xf32>
    %268 = arith.addf %265, %267 : vector<64x64xf32>
    %cst_104 = arith.constant 5.000000e-01 : f32
    %269 = vector.broadcast %cst_104 : f32 to vector<64x64xf32>
    %270 = arith.mulf %269, %268 : vector<64x64xf32>
    %271 = arith.mulf %268, %268 : vector<64x64xf32>
    %272 = arith.mulf %271, %268 : vector<64x64xf32>
    %cst_105 = arith.constant 4.471500e-02 : f32
    %273 = vector.broadcast %cst_105 : f32 to vector<64x64xf32>
    %274 = arith.mulf %273, %272 : vector<64x64xf32>
    %275 = arith.addf %268, %274 : vector<64x64xf32>
    %cst_106 = arith.constant 0.797884583 : f32
    %276 = vector.broadcast %cst_106 : f32 to vector<64x64xf32>
    %277 = arith.mulf %276, %275 : vector<64x64xf32>
    %278 = math.tanh %277 : vector<64x64xf32>
    %cst_107 = arith.constant 1.000000e+00 : f32
    %279 = vector.broadcast %cst_107 : f32 to vector<64x64xf32>
    %280 = arith.addf %279, %278 : vector<64x64xf32>
    %281 = arith.mulf %270, %280 : vector<64x64xf32>
    %c0_108 = arith.constant 0 : index
    %c0_109 = arith.constant 0 : index
    %282 = vector.load %arg15[%c0_108, %c0_109] : memref<64x32xf32, #tpu.memory_space<vmem>>, vector<64x32xf32>
    %cst_110 = arith.constant dense<0.000000e+00> : vector<64x32xf32>
    %283 = tpu.matmul %281, %282, %cst_110 {dimension_numbers = #tpu.dot_dimension_numbers<[1], [0], [0], [1], [0, 0, 1, 1], [], []>} : vector<64x64xf32>, vector<64x32xf32>, vector<64x32xf32> -> vector<64x32xf32>
    %c0_111 = arith.constant 0 : index
    %c0_112 = arith.constant 0 : index
    %284 = vector.load %arg16[%c0_111, %c0_112] : memref<1x32xf32, #tpu.memory_space<vmem>>, vector<1x32xf32>
    %285 = vector.broadcast %284 : vector<1x32xf32> to vector<64x32xf32>
    %286 = arith.addf %283, %285 : vector<64x32xf32>
    %287 = arith.addf %241, %286 : vector<64x32xf32>
    %c0_113 = arith.constant 0 : index
    %c0_114 = arith.constant 0 : index
    %288 = vector.load %arg17[%c0_113, %c0_114] : memref<64x32xf32, #tpu.memory_space<vmem>>, vector<64x32xf32>
    tpu.vector_store %arg17[%c0_113, %c0_114], %287 {strides = array<i32>} : memref<64x32xf32, #tpu.memory_space<vmem>>, vector<64x32xf32>,
    return
  }
  func.func @transform_0(%arg0: i32) -> (i32, i32) {
    %c0_i32 = arith.constant 0 : i32
    %c0_i32_0 = arith.constant 0 : i32
    return %arg0, %c0_i32 : i32, i32
  }
  func.func @transform_1(%arg0: i32) -> (i32, i32, i32, i32) {
    %c0_i32 = arith.constant 0 : i32
    %c0_i32_0 = arith.constant 0 : i32
    %c0_i32_1 = arith.constant 0 : i32
    %c0_i32_2 = arith.constant 0 : i32
    return %arg0, %c0_i32, %c0_i32_0, %c0_i32_1 : i32, i32, i32, i32
  }
  func.func @transform_2(%arg0: i32) -> (i32, i32) {
    %c0_i32 = arith.constant 0 : i32
    %c0_i32_0 = arith.constant 0 : i32
    %c0_i32_1 = arith.constant 0 : i32
    return %c0_i32, %c0_i32_0 : i32, i32
  }
  func.func @transform_3(%arg0: i32) -> (i32, i32) {
    %c0_i32 = arith.constant 0 : i32
    %c0_i32_0 = arith.constant 0 : i32
    %c0_i32_1 = arith.constant 0 : i32
    return %c0_i32, %c0_i32_0 : i32, i32
  }
  func.func @transform_4(%arg0: i32) -> (i32, i32) {
    %c0_i32 = arith.constant 0 : i32
    %c0_i32_0 = arith.constant 0 : i32
    %c0_i32_1 = arith.constant 0 : i32
    return %c0_i32, %c0_i32_0 : i32, i32
  }
  func.func @transform_5(%arg0: i32) -> (i32, i32) {
    %c0_i32 = arith.constant 0 : i32
    %c0_i32_0 = arith.constant 0 : i32
    %c0_i32_1 = arith.constant 0 : i32
    return %c0_i32, %c0_i32_0 : i32, i32
  }
  func.func @transform_6(%arg0: i32) -> (i32, i32) {
    %c0_i32 = arith.constant 0 : i32
    %c0_i32_0 = arith.constant 0 : i32
    %c0_i32_1 = arith.constant 0 : i32
    return %c0_i32, %c0_i32_0 : i32, i32
  }
  func.func @transform_7(%arg0: i32) -> (i32, i32) {
    %c0_i32 = arith.constant 0 : i32
    %c0_i32_0 = arith.constant 0 : i32
    %c0_i32_1 = arith.constant 0 : i32
    return %c0_i32, %c0_i32_0 : i32, i32
  }
  func.func @transform_8(%arg0: i32) -> (i32, i32) {
    %c0_i32 = arith.constant 0 : i32
    %c0_i32_0 = arith.constant 0 : i32
    %c0_i32_1 = arith.constant 0 : i32
    return %c0_i32, %c0_i32_0 : i32, i32
  }
  func.func @transform_9(%arg0: i32) -> (i32, i32) {
    %c0_i32 = arith.constant 0 : i32
    %c0_i32_0 = arith.constant 0 : i32
    %c0_i32_1 = arith.constant 0 : i32
    return %c0_i32, %c0_i32_0 : i32, i32
  }
  func.func @transform_10(%arg0: i32) -> (i32, i32) {
    %c0_i32 = arith.constant 0 : i32
    %c0_i32_0 = arith.constant 0 : i32
    %c0_i32_1 = arith.constant 0 : i32
    return %c0_i32, %c0_i32_0 : i32, i32
  }
  func.func @transform_11(%arg0: i32) -> (i32, i32) {
    %c0_i32 = arith.constant 0 : i32
    %c0_i32_0 = arith.constant 0 : i32
    %c0_i32_1 = arith.constant 0 : i32
    return %c0_i32, %c0_i32_0 : i32, i32
  }
  func.func @transform_12(%arg0: i32) -> (i32, i32) {
    %c0_i32 = arith.constant 0 : i32
    %c0_i32_0 = arith.constant 0 : i32
    %c0_i32_1 = arith.constant 0 : i32
    return %c0_i32, %c0_i32_0 : i32, i32
  }
  func.func @transform_13(%arg0: i32) -> (i32, i32) {
    %c0_i32 = arith.constant 0 : i32
    %c0_i32_0 = arith.constant 0 : i32
    %c0_i32_1 = arith.constant 0 : i32
    return %c0_i32, %c0_i32_0 : i32, i32
  }
  func.func @transform_14(%arg0: i32) -> (i32, i32) {
    %c0_i32 = arith.constant 0 : i32
    %c0_i32_0 = arith.constant 0 : i32
    %c0_i32_1 = arith.constant 0 : i32
    return %c0_i32, %c0_i32_0 : i32, i32
  }
  func.func @transform_15(%arg0: i32) -> (i32, i32) {
    %c0_i32 = arith.constant 0 : i32
    %c0_i32_0 = arith.constant 0 : i32
    %c0_i32_1 = arith.constant 0 : i32
    return %c0_i32, %c0_i32_0 : i32, i32
  }
  func.func @transform_16(%arg0: i32) -> (i32, i32) {
    %c0_i32 = arith.constant 0 : i32
    %c0_i32_0 = arith.constant 0 : i32
    return %arg0, %c0_i32 : i32, i32
  }
}

</mosaic_0001>

<llo_original>
// kernel: block_forward_pallas.1
$region0: #{block_forward_pallas.1}
  #allocation0 [shape = 'u32[]', space=smem, size = 0x4, offset = 0x4, fixed_abs, tag = 'smem constant byte address 0x4 - core index']
  #allocation1 [shape = 'u32[72,128]{1,0:T(1,128)}', space=vmem, size = 0x9000, scoped, tag = 'internal scratch']
  %s0 = inlined_call_operand.vmem [shape: f32[128,32], index: 0, kind: input, shape index: {}]
  %s1 = inlined_call_operand.vmem [shape: f32[2,4,16,32], index: 1, kind: input, shape index: {}]
  %s2 = inlined_call_operand.vmem [shape: f32[1,32], index: 2, kind: input, shape index: {}]
  %s3 = inlined_call_operand.vmem [shape: f32[1,32], index: 3, kind: input, shape index: {}]
  %s4 = inlined_call_operand.vmem [shape: f32[32,32], index: 4, kind: input, shape index: {}]
  %s5 = inlined_call_operand.vmem [shape: f32[32,64], index: 5, kind: input, shape index: {}]
  %s6 = inlined_call_operand.vmem [shape: f32[128,32], index: 6, kind: input, shape index: {}]
  %s7 = inlined_call_operand.vmem [shape: f32[1,32], index: 7, kind: input, shape index: {}]
  %s8 = inlined_call_operand.vmem [shape: f32[1,32], index: 8, kind: input, shape index: {}]
  %s9 = inlined_call_operand.vmem [shape: f32[1,32], index: 9, kind: input, shape index: {}]
  %s10 = inlined_call_operand.vmem [shape: f32[32,32], index: 10, kind: input, shape index: {}]
  %s11 = inlined_call_operand.vmem [shape: f32[1,32], index: 11, kind: input, shape index: {}]
  %s12 = inlined_call_operand.vmem [shape: f32[32,64], index: 12, kind: input, shape index: {}]
  %s13 = inlined_call_operand.vmem [shape: f32[1,64], index: 13, kind: input, shape index: {}]
  %s14 = inlined_call_operand.vmem [shape: f32[64,32], index: 14, kind: input, shape index: {}]
  %s15 = inlined_call_operand.vmem [shape: f32[1,32], index: 15, kind: input, shape index: {}]
  %s16 = inlined_call_operand.vmem [shape: f32[128,32], index: 16, kind: output, shape index: {}]
  %s17 = sld [smem:[#allocation0]]
  $region97: #{block_forward_pallas.1} parent=0
    _
  %s19 = ssub.s32 1, %s17
  %s20 = scalar_select 0, %s19, %s17
  loop: start=0, step=1, limit=4
  $region2: #{block_forward_pallas.1} parent=0 // loop_pre_header
    _
  $region3: #{block_forward_pallas.1} parent=0 // loop_header
    %s22 = sphi 0, %s26
    %p23 = scmp.ge.s32.totalorder %s22, 4
    %s32 = sphi 0, %s34
    %s35 = sphi 0, %s32
    %s36 = sphi 0, %s35
    %s52 = sphi 0, %s36
    %s58 = sphi 0, %s60
    %s61 = sphi 0, %s58
    %s62 = sphi 0, %s61
    %s78 = sphi 0, %s62
    %s82 = sphi 0, %s82
    %s84 = sphi 0, %s82
    %s85 = sphi 0, %s84
    %s99 = sphi 0, %s85
    %s103 = sphi 0, %s103
    %s105 = sphi 0, %s103
    %s106 = sphi 0, %s105
    %s120 = sphi 0, %s106
    %s124 = sphi 0, %s124
    %s126 = sphi 0, %s124
    %s127 = sphi 0, %s126
    %s141 = sphi 0, %s127
    %s145 = sphi 0, %s145
    %s147 = sphi 0, %s145
    %s148 = sphi 0, %s147
    %s162 = sphi 0, %s148
    %s166 = sphi 0, %s166
    %s168 = sphi 0, %s166
    %s169 = sphi 0, %s168
    %s183 = sphi 0, %s169
    %s187 = sphi 0, %s187
    %s189 = sphi 0, %s187
    %s190 = sphi 0, %s189
    %s204 = sphi 0, %s190
    %s208 = sphi 0, %s208
    %s210 = sphi 0, %s208
    %s211 = sphi 0, %s210
    %s225 = sphi 0, %s211
    %s229 = sphi 0, %s229
    %s231 = sphi 0, %s229
    %s232 = sphi 0, %s231
    %s246 = sphi 0, %s232
    %s250 = sphi 0, %s250
    %s252 = sphi 0, %s250
    %s253 = sphi 0, %s252
    %s267 = sphi 0, %s253
    %s271 = sphi 0, %s271
    %s273 = sphi 0, %s271
    %s274 = sphi 0, %s273
    %s288 = sphi 0, %s274
    %s292 = sphi 0, %s292
    %s294 = sphi 0, %s292
    %s295 = sphi 0, %s294
    %s309 = sphi 0, %s295
    %s313 = sphi 0, %s313
    %s315 = sphi 0, %s313
    %s316 = sphi 0, %s315
    %s330 = sphi 0, %s316
    %s334 = sphi 0, %s334
    %s336 = sphi 0, %s334
    %s337 = sphi 0, %s336
    %s351 = sphi 0, %s337
    %s355 = sphi 0, %s355
    %s357 = sphi 0, %s355
    %s358 = sphi 0, %s357
    %s372 = sphi 0, %s358
    %s378 = sphi 0, %s380
    %s381 = sphi 0, %s378
    %s382 = sphi 0, %s381
    %s398 = sphi 0, %s382
  $region4: #{block_forward_pallas.1} parent=0 // loop_header_branch
    %25 = sbr.rel (%p23) target = $region8
  $region5: #{block_forward_pallas.1} parent=0 // loop_body
    %s27 = ssub.s32 %s22, 1
    %s28 = ssub.s32 %s22, 2
    %s29 = sadd.s32 %s22, 1
    %s30 = ssub.s32 %s22, %s29
    %p31 = scmp.eq.s32.totalorder %s30, 0
    %s33 = sadd.s32 %s32, 1
    %s34 = scalar_select %p31, %s32, %s33
    %p37 = pneg %p31
    %p38 = scmp.eq.s32.totalorder %s22, 1
    %p39 = por %p37, %p38
    %p40 = scmp.ne.s32.totalorder %s32, %s35
    %p41 = scmp.eq.s32.totalorder %s22, 0
    %p42 = por %p40, %p41
    %p43 = scmp.ne.s32.totalorder %s32, %s35
    %p44 = scmp.eq.s32.totalorder %s27, 1
    %p45 = por %p43, %p44
    %p46 = scmp.ne.s32.totalorder %s35, %s36
    %p47 = scmp.eq.s32.totalorder %s27, 0
    %p48 = por %p46, %p47
    %p49 = scmp.ne.s32.totalorder %s35, %s36
    %p50 = scmp.eq.s32.totalorder %s28, 1
    %p51 = por %p49, %p50
    %p53 = scmp.ne.s32.totalorder %s36, %s52
    %p54 = scmp.eq.s32.totalorder %s28, 0
    %p55 = por %p53, %p54
    %s56 = ssub.s32 %s22, %s29
    %p57 = scmp.eq.s32.totalorder %s56, 0
    %s59 = sadd.s32 %s58, 1
    %s60 = scalar_select %p57, %s58, %s59
    %p63 = pneg %p57
    %p64 = scmp.eq.s32.totalorder %s22, 1
    %p65 = por %p63, %p64
    %p66 = scmp.ne.s32.totalorder %s58, %s61
    %p67 = scmp.eq.s32.totalorder %s22, 0
    %p68 = por %p66, %p67
    %p69 = scmp.ne.s32.totalorder %s58, %s61
    %p70 = scmp.eq.s32.totalorder %s27, 1
    %p71 = por %p69, %p70
    %p72 = scmp.ne.s32.totalorder %s61, %s62
    %p73 = scmp.eq.s32.totalorder %s27, 0
    %p74 = por %p72, %p73
    %p75 = scmp.ne.s32.totalorder %s61, %s62
    %p76 = scmp.eq.s32.totalorder %s28, 1
    %p77 = por %p75, %p76
    %p79 = scmp.ne.s32.totalorder %s62, %s78
    %p80 = scmp.eq.s32.totalorder %s28, 0
    %p81 = por %p79, %p80
    %s83 = sadd.s32 %s82, 1
    %p86 = scmp.eq.s32.totalorder %s22, 1
    %p87 = scmp.ne.s32.totalorder %s82, %s84
    %p88 = scmp.eq.s32.totalorder %s22, 0
    %p89 = por %p87, %p88
    %p90 = scmp.ne.s32.totalorder %s82, %s84
    %p91 = scmp.eq.s32.totalorder %s27, 1
    %p92 = por %p90, %p91
    %p93 = scmp.ne.s32.totalorder %s84, %s85
    %p94 = scmp.eq.s32.totalorder %s27, 0
    %p95 = por %p93, %p94
    %p96 = scmp.ne.s32.totalorder %s84, %s85
    %p97 = scmp.eq.s32.totalorder %s28, 1
    %p98 = por %p96, %p97
    %p100 = scmp.ne.s32.totalorder %s85, %s99
    %p101 = scmp.eq.s32.totalorder %s28, 0
    %p102 = por %p100, %p101
    %s104 = sadd.s32 %s103, 1
    %p107 = scmp.eq.s32.totalorder %s22, 1
    %p108 = scmp.ne.s32.totalorder %s103, %s105
    %p109 = scmp.eq.s32.totalorder %s22, 0
    %p110 = por %p108, %p109
    %p111 = scmp.ne.s32.totalorder %s103, %s105
    %p112 = scmp.eq.s32.totalorder %s27, 1
    %p113 = por %p111, %p112
    %p114 = scmp.ne.s32.totalorder %s105, %s106
    %p115 = scmp.eq.s32.totalorder %s27, 0
    %p116 = por %p114, %p115
    %p117 = scmp.ne.s32.totalorder %s105, %s106
    %p118 = scmp.eq.s32.totalorder %s28, 1
    %p119 = por %p117, %p118
    %p121 = scmp.ne.s32.totalorder %s106, %s120
    %p122 = scmp.eq.s32.totalorder %s28, 0
    %p123 = por %p121, %p122
    %s125 = sadd.s32 %s124, 1
    %p128 = scmp.eq.s32.totalorder %s22, 1
    %p129 = scmp.ne.s32.totalorder %s124, %s126
    %p130 = scmp.eq.s32.totalorder %s22, 0
    %p131 = por %p129, %p130
    %p132 = scmp.ne.s32.totalorder %s124, %s126
    %p133 = scmp.eq.s32.totalorder %s27, 1
    %p134 = por %p132, %p133
    %p135 = scmp.ne.s32.totalorder %s126, %s127
    %p136 = scmp.eq.s32.totalorder %s27, 0
    %p137 = por %p135, %p136
    %p138 = scmp.ne.s32.totalorder %s126, %s127
    %p139 = scmp.eq.s32.totalorder %s28, 1
    %p140 = por %p138, %p139
    %p142 = scmp.ne.s32.totalorder %s127, %s141
    %p143 = scmp.eq.s32.totalorder %s28, 0
    %p144 = por %p142, %p143
    %s146 = sadd.s32 %s145, 1
    %p149 = scmp.eq.s32.totalorder %s22, 1
    %p150 = scmp.ne.s32.totalorder %s145, %s147
    %p151 = scmp.eq.s32.totalorder %s22, 0
    %p152 = por %p150, %p151
    %p153 = scmp.ne.s32.totalorder %s145, %s147
    %p154 = scmp.eq.s32.totalorder %s27, 1
    %p155 = por %p153, %p154
    %p156 = scmp.ne.s32.totalorder %s147, %s148
    %p157 = scmp.eq.s32.totalorder %s27, 0
    %p158 = por %p156, %p157
    %p159 = scmp.ne.s32.totalorder %s147, %s148
    %p160 = scmp.eq.s32.totalorder %s28, 1
    %p161 = por %p159, %p160
    %p163 = scmp.ne.s32.totalorder %s148, %s162
    %p164 = scmp.eq.s32.totalorder %s28, 0
    %p165 = por %p163, %p164
    %s167 = sadd.s32 %s166, 1
    %p170 = scmp.eq.s32.totalorder %s22, 1
    %p171 = scmp.ne.s32.totalorder %s166, %s168
    %p172 = scmp.eq.s32.totalorder %s22, 0
    %p173 = por %p171, %p172
    %p174 = scmp.ne.s32.totalorder %s166, %s168
    %p175 = scmp.eq.s32.totalorder %s27, 1
    %p176 = por %p174, %p175
    %p177 = scmp.ne.s32.totalorder %s168, %s169
    %p178 = scmp.eq.s32.totalorder %s27, 0
    %p179 = por %p177, %p178
    %p180 = scmp.ne.s32.totalorder %s168, %s169
    %p181 = scmp.eq.s32.totalorder %s28, 1
    %p182 = por %p180, %p181
    %p184 = scmp.ne.s32.totalorder %s169, %s183
    %p185 = scmp.eq.s32.totalorder %s28, 0
    %p186 = por %p184, %p185
    %s188 = sadd.s32 %s187, 1
    %p191 = scmp.eq.s32.totalorder %s22, 1
    %p192 = scmp.ne.s32.totalorder %s187, %s189
    %p193 = scmp.eq.s32.totalorder %s22, 0
    %p194 = por %p192, %p193
    %p195 = scmp.ne.s32.totalorder %s187, %s189
    %p196 = scmp.eq.s32.totalorder %s27, 1
    %p197 = por %p195, %p196
    %p198 = scmp.ne.s32.totalorder %s189, %s190
    %p199 = scmp.eq.s32.totalorder %s27, 0
    %p200 = por %p198, %p199
    %p201 = scmp.ne.s32.totalorder %s189, %s190
    %p202 = scmp.eq.s32.totalorder %s28, 1
    %p203 = por %p201, %p202
    %p205 = scmp.ne.s32.totalorder %s190, %s204
    %p206 = scmp.eq.s32.totalorder %s28, 0
    %p207 = por %p205, %p206
    %s209 = sadd.s32 %s208, 1
    %p212 = scmp.eq.s32.totalorder %s22, 1
    %p213 = scmp.ne.s32.totalorder %s208, %s210
    %p214 = scmp.eq.s32.totalorder %s22, 0
    %p215 = por %p213, %p214
    %p216 = scmp.ne.s32.totalorder %s208, %s210
    %p217 = scmp.eq.s32.totalorder %s27, 1
    %p218 = por %p216, %p217
    %p219 = scmp.ne.s32.totalorder %s210, %s211
    %p220 = scmp.eq.s32.totalorder %s27, 0
    %p221 = por %p219, %p220
    %p222 = scmp.ne.s32.totalorder %s210, %s211
    %p223 = scmp.eq.s32.totalorder %s28, 1
    %p224 = por %p222, %p223
    %p226 = scmp.ne.s32.totalorder %s211, %s225
    %p227 = scmp.eq.s32.totalorder %s28, 0
    %p228 = por %p226, %p227
    %s230 = sadd.s32 %s229, 1
    %p233 = scmp.eq.s32.totalorder %s22, 1
    %p234 = scmp.ne.s32.totalorder %s229, %s231
    %p235 = scmp.eq.s32.totalorder %s22, 0
    %p236 = por %p234, %p235
    %p237 = scmp.ne.s32.totalorder %s229, %s231
    %p238 = scmp.eq.s32.totalorder %s27, 1
    %p239 = por %p237, %p238
    %p240 = scmp.ne.s32.totalorder %s231, %s232
    %p241 = scmp.eq.s32.totalorder %s27, 0
    %p242 = por %p240, %p241
    %p243 = scmp.ne.s32.totalorder %s231, %s232
    %p244 = scmp.eq.s32.totalorder %s28, 1
    %p245 = por %p243, %p244
    %p247 = scmp.ne.s32.totalorder %s232, %s246
    %p248 = scmp.eq.s32.totalorder %s28, 0
    %p249 = por %p247, %p248
    %s251 = sadd.s32 %s250, 1
    %p254 = scmp.eq.s32.totalorder %s22, 1
    %p255 = scmp.ne.s32.totalorder %s250, %s252
    %p256 = scmp.eq.s32.totalorder %s22, 0
    %p257 = por %p255, %p256
    %p258 = scmp.ne.s32.totalorder %s250, %s252
    %p259 = scmp.eq.s32.totalorder %s27, 1
    %p260 = por %p258, %p259
    %p261 = scmp.ne.s32.totalorder %s252, %s253
    %p262 = scmp.eq.s32.totalorder %s27, 0
    %p263 = por %p261, %p262
    %p264 = scmp.ne.s32.totalorder %s252, %s253
    %p265 = scmp.eq.s32.totalorder %s28, 1
    %p266 = por %p264, %p265
    %p268 = scmp.ne.s32.totalorder %s253, %s267
    %p269 = scmp.eq.s32.totalorder %s28, 0
    %p270 = por %p268, %p269
    %s272 = sadd.s32 %s271, 1
    %p275 = scmp.eq.s32.totalorder %s22, 1
    %p276 = scmp.ne.s32.totalorder %s271, %s273
    %p277 = scmp.eq.s32.totalorder %s22, 0
    %p278 = por %p276, %p277
    %p279 = scmp.ne.s32.totalorder %s271, %s273
    %p280 = scmp.eq.s32.totalorder %s27, 1
    %p281 = por %p279, %p280
    %p282 = scmp.ne.s32.totalorder %s273, %s274
    %p283 = scmp.eq.s32.totalorder %s27, 0
    %p284 = por %p282, %p283
    %p285 = scmp.ne.s32.totalorder %s273, %s274
    %p286 = scmp.eq.s32.totalorder %s28, 1
    %p287 = por %p285, %p286
    %p289 = scmp.ne.s32.totalorder %s274, %s288
    %p290 = scmp.eq.s32.totalorder %s28, 0
    %p291 = por %p289, %p290
    %s293 = sadd.s32 %s292, 1
    %p296 = scmp.eq.s32.totalorder %s22, 1
    %p297 = scmp.ne.s32.totalorder %s292, %s294
    %p298 = scmp.eq.s32.totalorder %s22, 0
    %p299 = por %p297, %p298
    %p300 = scmp.ne.s32.totalorder %s292, %s294
    %p301 = scmp.eq.s32.totalorder %s27, 1
    %p302 = por %p300, %p301
    %p303 = scmp.ne.s32.totalorder %s294, %s295
    %p304 = scmp.eq.s32.totalorder %s27, 0
    %p305 = por %p303, %p304
    %p306 = scmp.ne.s32.totalorder %s294, %s295
    %p307 = scmp.eq.s32.totalorder %s28, 1
    %p308 = por %p306, %p307
    %p310 = scmp.ne.s32.totalorder %s295, %s309
    %p311 = scmp.eq.s32.totalorder %s28, 0
    %p312 = por %p310, %p311
    %s314 = sadd.s32 %s313, 1
    %p317 = scmp.eq.s32.totalorder %s22, 1
    %p318 = scmp.ne.s32.totalorder %s313, %s315
    %p319 = scmp.eq.s32.totalorder %s22, 0
    %p320 = por %p318, %p319
    %p321 = scmp.ne.s32.totalorder %s313, %s315
    %p322 = scmp.eq.s32.totalorder %s27, 1
    %p323 = por %p321, %p322
    %p324 = scmp.ne.s32.totalorder %s315, %s316
    %p325 = scmp.eq.s32.totalorder %s27, 0
    %p326 = por %p324, %p325
    %p327 = scmp.ne.s32.totalorder %s315, %s316
    %p328 = scmp.eq.s32.totalorder %s28, 1
    %p329 = por %p327, %p328
    %p331 = scmp.ne.s32.totalorder %s316, %s330
    %p332 = scmp.eq.s32.totalorder %s28, 0
    %p333 = por %p331, %p332
    %s335 = sadd.s32 %s334, 1
    %p338 = scmp.eq.s32.totalorder %s22, 1
    %p339 = scmp.ne.s32.totalorder %s334, %s336
    %p340 = scmp.eq.s32.totalorder %s22, 0
    %p341 = por %p339, %p340
    %p342 = scmp.ne.s32.totalorder %s334, %s336
    %p343 = scmp.eq.s32.totalorder %s27, 1
    %p344 = por %p342, %p343
    %p345 = scmp.ne.s32.totalorder %s336, %s337
    %p346 = scmp.eq.s32.totalorder %s27, 0
    %p347 = por %p345, %p346
    %p348 = scmp.ne.s32.totalorder %s336, %s337
    %p349 = scmp.eq.s32.totalorder %s28, 1
    %p350 = por %p348, %p349
    %p352 = scmp.ne.s32.totalorder %s337, %s351
    %p353 = scmp.eq.s32.totalorder %s28, 0
    %p354 = por %p352, %p353
    %s356 = sadd.s32 %s355, 1
    %p359 = scmp.eq.s32.totalorder %s22, 1
    %p360 = scmp.ne.s32.totalorder %s355, %s357
    %p361 = scmp.eq.s32.totalorder %s22, 0
    %p362 = por %p360, %p361
    %p363 = scmp.ne.s32.totalorder %s355, %s357
    %p364 = scmp.eq.s32.totalorder %s27, 1
    %p365 = por %p363, %p364
    %p366 = scmp.ne.s32.totalorder %s357, %s358
    %p367 = scmp.eq.s32.totalorder %s27, 0
    %p368 = por %p366, %p367
    %p369 = scmp.ne.s32.totalorder %s357, %s358
    %p370 = scmp.eq.s32.totalorder %s28, 1
    %p371 = por %p369, %p370
    %p373 = scmp.ne.s32.totalorder %s358, %s372
    %p374 = scmp.eq.s32.totalorder %s28, 0
    %p375 = por %p373, %p374
    %s376 = ssub.s32 %s22, %s29
    %p377 = scmp.eq.s32.totalorder %s376, 0
    %s379 = sadd.s32 %s378, 1
    %s380 = scalar_select %p377, %s378, %s379
    %p383 = pneg %p377
    %p384 = scmp.eq.s32.totalorder %s22, 1
    %p385 = por %p383, %p384
    %p386 = scmp.ne.s32.totalorder %s378, %s381
    %p387 = scmp.eq.s32.totalorder %s22, 0
    %p388 = por %p386, %p387
    %p389 = scmp.ne.s32.totalorder %s378, %s381
    %p390 = scmp.eq.s32.totalorder %s27, 1
    %p391 = por %p389, %p390
    %p392 = scmp.ne.s32.totalorder %s381, %s382
    %p393 = scmp.eq.s32.totalorder %s27, 0
    %p394 = por %p392, %p393
    %p395 = scmp.ne.s32.totalorder %s381, %s382
    %p396 = scmp.eq.s32.totalorder %s28, 1
    %p397 = por %p395, %p396
    %p399 = scmp.ne.s32.totalorder %s382, %s398
    %p400 = scmp.eq.s32.totalorder %s28, 0
    %p401 = por %p399, %p400
    %p402 = scmp.le.s32.totalorder 1, %s22
    %p403 = scmp.lt.s32.totalorder %s22, 3
    %p404 = pnand %p402, %p403
    %p405 = pneg %p404
    // Predicated region
    $region9: #{block_forward_pallas.1} parent=5 // pred_check
      _
    $region10: #{block_forward_pallas.1} parent=5 // pred_check_branch
      %407 = sbr.rel (%p404) target = $region12
    $region11: #{block_forward_pallas.1} parent=5 // pred_region
      %s408 = ssub.s32 %s22, 1
      // Predicated region
      $region13: #{block_forward_pallas.1} parent=11 // pred_check
        %p409 = pneg %p95
      $region14: #{block_forward_pallas.1} parent=11 // pred_check_branch
        %411 = sbr.rel (%p409) target = $region16
      $region15: #{block_forward_pallas.1} parent=11 // pred_region
        _
      $region16: #{block_forward_pallas.1} parent=11 // pred_fallthru
        _
      // Predicated region
      $region17: #{block_forward_pallas.1} parent=11 // pred_check
        %p412 = pneg %p116
      $region18: #{block_forward_pallas.1} parent=11 // pred_check_branch
        %414 = sbr.rel (%p412) target = $region20
      $region19: #{block_forward_pallas.1} parent=11 // pred_region
        _
      $region20: #{block_forward_pallas.1} parent=11 // pred_fallthru
        _
      // Predicated region
      $region21: #{block_forward_pallas.1} parent=11 // pred_check
        %p415 = pneg %p137
      $region22: #{block_forward_pallas.1} parent=11 // pred_check_branch
        %417 = sbr.rel (%p415) target = $region24
      $region23: #{block_forward_pallas.1} parent=11 // pred_region
        _
      $region24: #{block_forward_pallas.1} parent=11 // pred_fallthru
        _
      // Predicated region
      $region25: #{block_forward_pallas.1} parent=11 // pred_check
        %p418 = pneg %p158
      $region26: #{block_forward_pallas.1} parent=11 // pred_check_branch
        %420 = sbr.rel (%p418) target = $region28
      $region27: #{block_forward_pallas.1} parent=11 // pred_region
        _
      $region28: #{block_forward_pallas.1} parent=11 // pred_fallthru
        _
      // Predicated region
      $region29: #{block_forward_pallas.1} parent=11 // pred_check
        %p421 = pneg %p179
      $region30: #{block_forward_pallas.1} parent=11 // pred_check_branch
        %423 = sbr.rel (%p421) target = $region32
      $region31: #{block_forward_pallas.1} parent=11 // pred_region
        _
      $region32: #{block_forward_pallas.1} parent=11 // pred_fallthru
        _
      // Predicated region
      $region33: #{block_forward_pallas.1} parent=11 // pred_check
        %p424 = pneg %p200
      $region34: #{block_forward_pallas.1} parent=11 // pred_check_branch
        %426 = sbr.rel (%p424) target = $region36
      $region35: #{block_forward_pallas.1} parent=11 // pred_region
        _
      $region36: #{block_forward_pallas.1} parent=11 // pred_fallthru
        _
      // Predicated region
      $region37: #{block_forward_pallas.1} parent=11 // pred_check
        %p427 = pneg %p221
      $region38: #{block_forward_pallas.1} parent=11 // pred_check_branch
        %429 = sbr.rel (%p427) target = $region40
      $region39: #{block_forward_pallas.1} parent=11 // pred_region
        _
      $region40: #{block_forward_pallas.1} parent=11 // pred_fallthru
        _
      // Predicated region
      $region41: #{block_forward_pallas.1} parent=11 // pred_check
        %p430 = pneg %p242
      $region42: #{block_forward_pallas.1} parent=11 // pred_check_branch
        %432 = sbr.rel (%p430) target = $region44
      $region43: #{block_forward_pallas.1} parent=11 // pred_region
        _
      $region44: #{block_forward_pallas.1} parent=11 // pred_fallthru
        _
      // Predicated region
      $region45: #{block_forward_pallas.1} parent=11 // pred_check
        %p433 = pneg %p263
      $region46: #{block_forward_pallas.1} parent=11 // pred_check_branch
        %435 = sbr.rel (%p433) target = $region48
      $region47: #{block_forward_pallas.1} parent=11 // pred_region
        _
      $region48: #{block_forward_pallas.1} parent=11 // pred_fallthru
        _
      // Predicated region
      $region49: #{block_forward_pallas.1} parent=11 // pred_check
        %p436 = pneg %p284
      $region50: #{block_forward_pallas.1} parent=11 // pred_check_branch
        %438 = sbr.rel (%p436) target = $region52
      $region51: #{block_forward_pallas.1} parent=11 // pred_region
        _
      $region52: #{block_forward_pallas.1} parent=11 // pred_fallthru
        _
      // Predicated region
      $region53: #{block_forward_pallas.1} parent=11 // pred_check
        %p439 = pneg %p305
      $region54: #{block_forward_pallas.1} parent=11 // pred_check_branch
        %441 = sbr.rel (%p439) target = $region56
      $region55: #{block_forward_pallas.1} parent=11 // pred_region
        _
      $region56: #{block_forward_pallas.1} parent=11 // pred_fallthru
        _
      // Predicated region
      $region57: #{block_forward_pallas.1} parent=11 // pred_check
        %p442 = pneg %p326
      $region58: #{block_forward_pallas.1} parent=11 // pred_check_branch
        %444 = sbr.rel (%p442) target = $region60
      $region59: #{block_forward_pallas.1} parent=11 // pred_region
        _
      $region60: #{block_forward_pallas.1} parent=11 // pred_fallthru
        _
      // Predicated region
      $region61: #{block_forward_pallas.1} parent=11 // pred_check
        %p445 = pneg %p347
      $region62: #{block_forward_pallas.1} parent=11 // pred_check_branch
        %447 = sbr.rel (%p445) target = $region64
      $region63: #{block_forward_pallas.1} parent=11 // pred_region
        _
      $region64: #{block_forward_pallas.1} parent=11 // pred_fallthru
        _
      // Predicated region
      $region65: #{block_forward_pallas.1} parent=11 // pred_check
        %p448 = pneg %p368
      $region66: #{block_forward_pallas.1} parent=11 // pred_check_branch
        %450 = sbr.rel (%p448) target = $region68
      $region67: #{block_forward_pallas.1} parent=11 // pred_region
        _
      $region68: #{block_forward_pallas.1} parent=11 // pred_fallthru
        _
    $region12: #{block_forward_pallas.1} parent=5 // pred_fallthru
      _
    %p451 = scmp.lt.s32.totalorder %s22, 2
    // Predicated region
    $region69: #{block_forward_pallas.1} parent=5 // pred_check
      %p452 = pneg %p451
    $region70: #{block_forward_pallas.1} parent=5 // pred_check_branch
      %454 = sbr.rel (%p452) target = $region72
    $region71: #{block_forward_pallas.1} parent=5 // pred_region
      // Predicated region
      $region73: #{block_forward_pallas.1} parent=71 // pred_check
        %p455 = pneg %p42
      $region74: #{block_forward_pallas.1} parent=71 // pred_check_branch
        %457 = sbr.rel (%p455) target = $region76
      $region75: #{block_forward_pallas.1} parent=71 // pred_region
        %s458 = smul.u32 8, %s22
        %p459 = scmp.lt.s32.totalorder %s458, 15
        %s460 = scalar_select %p459, %s458, 15
        %s461 = smul.addr %s460, 8
        %s462 = scalar_lea.vmem %s0, %s461
        %s463 = smul.u32 8, %s22
      $region76: #{block_forward_pallas.1} parent=71 // pred_fallthru
        _
      // Predicated region
      $region77: #{block_forward_pallas.1} parent=71 // pred_check
        %p464 = pneg %p68
      $region78: #{block_forward_pallas.1} parent=71 // pred_check_branch
        %466 = sbr.rel (%p464) target = $region80
      $region79: #{block_forward_pallas.1} parent=71 // pred_region
        %p467 = scmp.lt.s32.totalorder %s22, 1
        %s468 = scalar_select %p467, %s22, 1
        %s469 = smul.addr %s468, 8
        %s470 = smul.addr %s469, 8
        %s471 = scalar_lea.vmem %s1, %s470
      $region80: #{block_forward_pallas.1} parent=71 // pred_fallthru
        _
    $region72: #{block_forward_pallas.1} parent=5 // pred_fallthru
      _
    %p472 = scmp.le.s32.totalorder 1, %s22
    %p473 = scmp.lt.s32.totalorder %s22, 3
    %p474 = pnand %p472, %p473
    %p475 = pneg %p474
    // Predicated region
    $region81: #{block_forward_pallas.1} parent=5 // pred_check
      _
    $region82: #{block_forward_pallas.1} parent=5 // pred_check_branch
      %477 = sbr.rel (%p474) target = $region84
    $region83: #{block_forward_pallas.1} parent=5 // pred_region
      %s478 = ssub.s32 %s22, 1
      %s479 = smul.u32 8, %s27
      %p480 = scmp.lt.s32.totalorder %s479, 15
      %s481 = scalar_select %p480, %s479, 15
      %s482 = smul.addr %s481, 8
      %s483 = scalar_lea.vmem %s0, %s482
      %p484 = pneg %p48
      %p485 = pneg %p45
      %p486 = scmp.lt.s32.totalorder %s27, 1
      %s487 = scalar_select %p486, %s27, 1
      %s488 = smul.addr %s487, 8
      %s489 = smul.addr %s488, 8
      %s490 = scalar_lea.vmem %s1, %s489
      %p491 = pneg %p74
      %p492 = pneg %p71
      %p493 = pneg %p95
      %p494 = pneg %p92
      %p495 = pneg %p116
      %p496 = pneg %p113
      %p497 = pneg %p137
      %p498 = pneg %p134
      %p499 = pneg %p158
      %p500 = pneg %p155
      %p501 = pneg %p179
      %p502 = pneg %p176
      %p503 = pneg %p200
      %p504 = pneg %p197
      %p505 = pneg %p221
      %p506 = pneg %p218
      %p507 = pneg %p242
      %p508 = pneg %p239
      %p509 = pneg %p263
      %p510 = pneg %p260
      %p511 = pneg %p284
      %p512 = pneg %p281
      %p513 = pneg %p305
      %p514 = pneg %p302
      %p515 = pneg %p326
      %p516 = pneg %p323
      %p517 = pneg %p347
      %p518 = pneg %p344
      %p519 = pneg %p368
      %p520 = pneg %p365
      %p521 = pneg %p394
      %p522 = pneg %p391
      %s523 = smul.u32 8, %s27
      %p524 = scmp.lt.s32.totalorder %s523, 15
      %s525 = scalar_select %p524, %s523, 15
      %s526 = smul.addr %s525, 8
      %s527 = scalar_lea.vmem %s16, %s526
      %s528 = smul.u32 8, %s27
      %p529 = scmp.lt.s32.totalorder %s528, 15
      %s530 = scalar_select %p529, %s528, 15
      %s531 = smul.addr %s530, 8
      %s532 = scalar_lea.vmem %s0, %s531
      %s533 = smul.u32 8, %s27
      %p534 = scmp.lt.s32.totalorder %s27, 1
      %s535 = scalar_select %p534, %s27, 1
      %s536 = smul.addr %s535, 8
      %s537 = smul.addr %s536, 8
      %s538 = scalar_lea.vmem %s1, %s537
      %s539 = smul.u32 8, %s27
      %p540 = scmp.lt.s32.totalorder %s539, 15
      %s541 = scalar_select %p540, %s539, 15
      %s542 = smul.addr %s541, 8
      %s543 = scalar_lea.vmem %s16, %s542
      %s544 = smul.u32 8, %s27
      %v545 = vld [vmem:[%s2] sm:$0x1]
      %v546 = vld [vmem:[%s3] sm:$0x1]
      %v547 = vld [vmem:[%s532] sm:$0xff]
      %v548 = vld [vmem:[%s532 + $0x8] sm:$0xff]
      %v549 = vld [vmem:[%s532 + $0x10] sm:$0xff]
      %v550 = vld [vmem:[%s532 + $0x18] sm:$0xff]
      %v551 = vld [vmem:[%s532 + $0x20] sm:$0xff]
      %v552 = vld [vmem:[%s532 + $0x28] sm:$0xff]
      %v553 = vld [vmem:[%s532 + $0x30] sm:$0xff]
      %v554 = vld [vmem:[%s532 + $0x38] sm:$0xff]
      %vm555 = vcmask 261120
      %v556 = vsel %vm555, %v547, 0.0
      %557 = vadd.xlane.f32.xlu0 %v556
      %v558 = vpop.xlane.xlu0 %557
      %v559 = vsel %vm555, %v548, 0.0
      %560 = vadd.xlane.f32.xlu0 %v559
      %v561 = vpop.xlane.xlu0 %560
      %v562 = vsel %vm555, %v549, 0.0
      %563 = vadd.xlane.f32.xlu0 %v562
      %v564 = vpop.xlane.xlu0 %563
      %v565 = vsel %vm555, %v550, 0.0
      %566 = vadd.xlane.f32.xlu0 %v565
      %v567 = vpop.xlane.xlu0 %566
      %v568 = vsel %vm555, %v551, 0.0
      %569 = vadd.xlane.f32.xlu0 %v568
      %v570 = vpop.xlane.xlu0 %569
      %v571 = vsel %vm555, %v552, 0.0
      %572 = vadd.xlane.f32.xlu0 %v571
      %v573 = vpop.xlane.xlu0 %572
      %v574 = vsel %vm555, %v553, 0.0
      %575 = vadd.xlane.f32.xlu0 %v574
      %v576 = vpop.xlane.xlu0 %575
      %v577 = vsel %vm555, %v554, 0.0
      %578 = vadd.xlane.f32.xlu0 %v577
      %v579 = vpop.xlane.xlu0 %578
      %v580 = vrcp.pop 32.0
      %v581 = vmul.f32 32.0, %v580
      %v582 = vsub.f32 1.0, %v581
      %v583 = vmul.f32 %v580, %v582
      %v584 = vadd.f32 %v580, %v583
      %vm585 = vweird.f32 %v580
      %v586 = vsel %vm585, %v580, %v584
      %v587 = vmul.f32 %v558, %v586
      %v588 = vmul.f32 %v561, %v586
      %v589 = vmul.f32 %v564, %v586
      %v590 = vmul.f32 %v567, %v586
      %v591 = vmul.f32 %v570, %v586
      %v592 = vmul.f32 %v573, %v586
      %v593 = vmul.f32 %v576, %v586
      %v594 = vmul.f32 %v579, %v586
      %v595 = vsub.f32 %v547, %v587
      %v596 = vsub.f32 %v548, %v588
      %v597 = vsub.f32 %v549, %v589
      %v598 = vsub.f32 %v550, %v590
      %v599 = vsub.f32 %v551, %v591
      %v600 = vsub.f32 %v552, %v592
      %v601 = vsub.f32 %v553, %v593
      %v602 = vsub.f32 %v554, %v594
      %v603 = vmul.f32 %v595, %v595
      %v604 = vmul.f32 %v596, %v596
      %v605 = vmul.f32 %v597, %v597
      %v606 = vmul.f32 %v598, %v598
      %v607 = vmul.f32 %v599, %v599
      %v608 = vmul.f32 %v600, %v600
      %v609 = vmul.f32 %v601, %v601
      %v610 = vmul.f32 %v602, %v602
      %v611 = vsel %vm555, %v603, 0.0
      %612 = vadd.xlane.f32.xlu0 %v611
      %v613 = vpop.xlane.xlu0 %612
      %v614 = vsel %vm555, %v604, 0.0
      %615 = vadd.xlane.f32.xlu0 %v614
      %v616 = vpop.xlane.xlu0 %615
      %v617 = vsel %vm555, %v605, 0.0
      %618 = vadd.xlane.f32.xlu0 %v617
      %v619 = vpop.xlane.xlu0 %618
      %v620 = vsel %vm555, %v606, 0.0
      %621 = vadd.xlane.f32.xlu0 %v620
      %v622 = vpop.xlane.xlu0 %621
      %v623 = vsel %vm555, %v607, 0.0
      %624 = vadd.xlane.f32.xlu0 %v623
      %v625 = vpop.xlane.xlu0 %624
      %v626 = vsel %vm555, %v608, 0.0
      %627 = vadd.xlane.f32.xlu0 %v626
      %v628 = vpop.xlane.xlu0 %627
      %v629 = vsel %vm555, %v609, 0.0
      %630 = vadd.xlane.f32.xlu0 %v629
      %v631 = vpop.xlane.xlu0 %630
      %v632 = vsel %vm555, %v610, 0.0
      %633 = vadd.xlane.f32.xlu0 %v632
      %v634 = vpop.xlane.xlu0 %633
      %v635 = vmul.f32 %v613, %v586
      %v636 = vmul.f32 %v616, %v586
      %v637 = vmul.f32 %v619, %v586
      %v638 = vmul.f32 %v622, %v586
      %v639 = vmul.f32 %v625, %v586
      %v640 = vmul.f32 %v628, %v586
      %v641 = vmul.f32 %v631, %v586
      %v642 = vmul.f32 %v634, %v586
      %v643 = vadd.f32 %v635, 1e-05
      %v644 = vadd.f32 %v636, 1e-05
      %v645 = vadd.f32 %v637, 1e-05
      %v646 = vadd.f32 %v638, 1e-05
      %v647 = vadd.f32 %v639, 1e-05
      %v648 = vadd.f32 %v640, 1e-05
      %v649 = vadd.f32 %v641, 1e-05
      %v650 = vadd.f32 %v642, 1e-05
      %v651 = vrsqrt.pop %v643
      %v652 = vmul.f32 %v651, %v643
      %v653 = vmul.f32 %v652, %v651
      %v654 = vmul.f32 0.5, %v653
      %v655 = vsub.f32 1.5, %v654
      %v656 = vmul.f32 %v651, %v655
      %vm657 = vweird.f32 %v643
      %vm658 = vweird.f32 %v651
      %vm659 = vmor %vm657, %vm658
      %v660 = vsel %vm659, %v651, %v656
      %v661 = vrsqrt.pop %v644
      %v662 = vmul.f32 %v661, %v644
      %v663 = vmul.f32 %v662, %v661
      %v664 = vmul.f32 0.5, %v663
      %v665 = vsub.f32 1.5, %v664
      %v666 = vmul.f32 %v661, %v665
      %vm667 = vweird.f32 %v644
      %vm668 = vweird.f32 %v661
      %vm669 = vmor %vm667, %vm668
      %v670 = vsel %vm669, %v661, %v666
      %v671 = vrsqrt.pop %v645
      %v672 = vmul.f32 %v671, %v645
      %v673 = vmul.f32 %v672, %v671
      %v674 = vmul.f32 0.5, %v673
      %v675 = vsub.f32 1.5, %v674
      %v676 = vmul.f32 %v671, %v675
      %vm677 = vweird.f32 %v645
      %vm678 = vweird.f32 %v671
      %vm679 = vmor %vm677, %vm678
      %v680 = vsel %vm679, %v671, %v676
      %v681 = vrsqrt.pop %v646
      %v682 = vmul.f32 %v681, %v646
      %v683 = vmul.f32 %v682, %v681
      %v684 = vmul.f32 0.5, %v683
      %v685 = vsub.f32 1.5, %v684
      %v686 = vmul.f32 %v681, %v685
      %vm687 = vweird.f32 %v646
      %vm688 = vweird.f32 %v681
      %vm689 = vmor %vm687, %vm688
      %v690 = vsel %vm689, %v681, %v686
      %v691 = vrsqrt.pop %v647
      %v692 = vmul.f32 %v691, %v647
      %v693 = vmul.f32 %v692, %v691
      %v694 = vmul.f32 0.5, %v693
      %v695 = vsub.f32 1.5, %v694
      %v696 = vmul.f32 %v691, %v695
      %vm697 = vweird.f32 %v647
      %vm698 = vweird.f32 %v691
      %vm699 = vmor %vm697, %vm698
      %v700 = vsel %vm699, %v691, %v696
      %v701 = vrsqrt.pop %v648
      %v702 = vmul.f32 %v701, %v648
      %v703 = vmul.f32 %v702, %v701
      %v704 = vmul.f32 0.5, %v703
      %v705 = vsub.f32 1.5, %v704
      %v706 = vmul.f32 %v701, %v705
      %vm707 = vweird.f32 %v648
      %vm708 = vweird.f32 %v701
      %vm709 = vmor %vm707, %vm708
      %v710 = vsel %vm709, %v701, %v706
      %v711 = vrsqrt.pop %v649
      %v712 = vmul.f32 %v711, %v649
      %v713 = vmul.f32 %v712, %v711
      %v714 = vmul.f32 0.5, %v713
      %v715 = vsub.f32 1.5, %v714
      %v716 = vmul.f32 %v711, %v715
      %vm717 = vweird.f32 %v649
      %vm718 = vweird.f32 %v711
      %vm719 = vmor %vm717, %vm718
      %v720 = vsel %vm719, %v711, %v716
      %v721 = vrsqrt.pop %v650
      %v722 = vmul.f32 %v721, %v650
      %v723 = vmul.f32 %v722, %v721
      %v724 = vmul.f32 0.5, %v723
      %v725 = vsub.f32 1.5, %v724
      %v726 = vmul.f32 %v721, %v725
      %vm727 = vweird.f32 %v650
      %vm728 = vweird.f32 %v721
      %vm729 = vmor %vm727, %vm728
      %v730 = vsel %vm729, %v721, %v726
      %v731 = vmul.f32 %v595, %v660
      %v732 = vmul.f32 %v596, %v670
      %v733 = vmul.f32 %v597, %v680
      %v734 = vmul.f32 %v598, %v690
      %v735 = vmul.f32 %v599, %v700
      %v736 = vmul.f32 %v600, %v710
      %v737 = vmul.f32 %v601, %v720
      %v738 = vmul.f32 %v602, %v730
      %v740 = vperm.slane %v545, 0
      %v742 = vmul.f32 %v731, %v740
      %v743 = vmul.f32 %v732, %v740
      %v744 = vmul.f32 %v733, %v740
      %v745 = vmul.f32 %v734, %v740
      %v746 = vmul.f32 %v735, %v740
      %v747 = vmul.f32 %v736, %v740
      %v748 = vmul.f32 %v737, %v740
      %v749 = vmul.f32 %v738, %v740
      %v751 = vperm.slane %v546, 0
      %v753 = vadd.f32 %v742, %v751
      %v754 = vadd.f32 %v743, %v751
      %v755 = vadd.f32 %v744, %v751
      %v756 = vadd.f32 %v745, %v751
      %v757 = vadd.f32 %v746, %v751
      %v758 = vadd.f32 %v747, %v751
      %v759 = vadd.f32 %v748, %v751
      %v760 = vadd.f32 %v749, %v751
      %v761 = vld [vmem:[%s4] sm:$0xff]
      %v762 = vld [vmem:[%s4 + $0x8] sm:$0xff]
      %v763 = vld [vmem:[%s4 + $0x10] sm:$0xff]
      %v764 = vld [vmem:[%s4 + $0x18] sm:$0xff]
      %v766 = vsel %vm555, %v753, 0
      %v769 = vsel %vm555, %v754, 0
      %v772 = vsel %vm555, %v755, 0
      %v775 = vsel %vm555, %v756, 0
      %v778 = vsel %vm555, %v757, 0
      %v781 = vsel %vm555, %v758, 0
      %v784 = vsel %vm555, %v759, 0
      %v787 = vsel %vm555, %v760, 0
      %789 = vmatpush.msra.mxu0 0.0
      %790 = vmatpush.msra.mxu0 0.0
      %791 = vmatpush.msra.mxu0 0.0
      %792 = vmatpush.msra.mxu0 0.0
      %793 = vmatpush.msra.mxu0 0.0
      %794 = vmatpush.msra.mxu0 0.0
      %795 = vmatpush.msra.mxu0 0.0
      %796 = vmatpush.msra.mxu0 0.0
      %797 = vmatpush.msra.mxu0 0.0
      %798 = vmatpush.msra.mxu0 0.0
      %799 = vmatpush.msra.mxu0 0.0
      %800 = vmatpush.msra.mxu0 0.0
      %801 = vmatpush.msra.mxu0 %v764
      %802 = vmatpush.msra.mxu0 %v763
      %803 = vmatpush.msra.mxu0 %v762
      %804 = vmatpush.msra.mxu0 %v761
      %805 = vmatmul.f32.gmra.mxu0 %v766
      %v806 = vpop.f32.mrf.mxu0
      %v807 = vadd.f32 0.0, %v806
      %808 = vmatmul.f32.gmra.mxu0 %v769
      %v809 = vpop.f32.mrf.mxu0
      %v810 = vadd.f32 0.0, %v809
      %811 = vmatmul.f32.gmra.mxu0 %v772
      %v812 = vpop.f32.mrf.mxu0
      %v813 = vadd.f32 0.0, %v812
      %814 = vmatmul.f32.gmra.mxu0 %v775
      %v815 = vpop.f32.mrf.mxu0
      %v816 = vadd.f32 0.0, %v815
      %817 = vmatmul.f32.gmra.mxu0 %v778
      %v818 = vpop.f32.mrf.mxu0
      %v819 = vadd.f32 0.0, %v818
      %820 = vmatmul.f32.gmra.mxu0 %v781
      %v821 = vpop.f32.mrf.mxu0
      %v822 = vadd.f32 0.0, %v821
      %823 = vmatmul.f32.gmra.mxu0 %v784
      %v824 = vpop.f32.mrf.mxu0
      %v825 = vadd.f32 0.0, %v824
      %826 = vmatmul.f32.gmra.mxu0 %v787
      %v827 = vpop.f32.mrf.mxu0
      %v828 = vadd.f32 0.0, %v827
      %829 = vdwg.mxu0
      %v830 = vld [vmem:[%s538] sm:$0xff]
      %v831 = vld [vmem:[%s538 + $0x8] sm:$0xff]
      %v832 = vsel %vm555, %v830, 0.0
      %833 = vadd.xlane.f32.xlu0 %v832
      %v834 = vpop.xlane.xlu0 %833
      %v835 = vsel %vm555, %v831, 0.0
      %836 = vadd.xlane.f32.xlu0 %v835
      %v837 = vpop.xlane.xlu0 %836
      %v838 = vmul.f32 %v834, %v586
      %v839 = vmul.f32 %v837, %v586
      %v840 = vsub.f32 %v830, %v838
      %v841 = vsub.f32 %v831, %v839
      %v842 = vmul.f32 %v840, %v840
      %v843 = vmul.f32 %v841, %v841
      %v844 = vsel %vm555, %v842, 0.0
      %845 = vadd.xlane.f32.xlu0 %v844
      %v846 = vpop.xlane.xlu0 %845
      %v847 = vsel %vm555, %v843, 0.0
      %848 = vadd.xlane.f32.xlu0 %v847
      %v849 = vpop.xlane.xlu0 %848
      %v850 = vmul.f32 %v846, %v586
      %v851 = vmul.f32 %v849, %v586
      %v852 = vadd.f32 %v850, 1e-05
      %v853 = vadd.f32 %v851, 1e-05
      %v854 = vrsqrt.pop %v852
      %v855 = vmul.f32 %v854, %v852
      %v856 = vmul.f32 %v855, %v854
      %v857 = vmul.f32 0.5, %v856
      %v858 = vsub.f32 1.5, %v857
      %v859 = vmul.f32 %v854, %v858
      %vm860 = vweird.f32 %v852
      %vm861 = vweird.f32 %v854
      %vm862 = vmor %vm860, %vm861
      %v863 = vsel %vm862, %v854, %v859
      %v864 = vrsqrt.pop %v853
      %v865 = vmul.f32 %v864, %v853
      %v866 = vmul.f32 %v865, %v864
      %v867 = vmul.f32 0.5, %v866
      %v868 = vsub.f32 1.5, %v867
      %v869 = vmul.f32 %v864, %v868
      %vm870 = vweird.f32 %v853
      %vm871 = vweird.f32 %v864
      %vm872 = vmor %vm870, %vm871
      %v873 = vsel %vm872, %v864, %v869
      %v874 = vmul.f32 %v840, %v863
      %v875 = vmul.f32 %v841, %v873
      %v876 = vmul.f32 %v874, %v740
      %v877 = vmul.f32 %v875, %v740
      %v878 = vadd.f32 %v876, %v751
      %v879 = vadd.f32 %v877, %v751
      %v880 = vld [vmem:[%s6] sm:$0xff]
      %v881 = vld [vmem:[%s6 + $0x8] sm:$0xff]
      %v882 = vld [vmem:[%s6 + $0x10] sm:$0xff]
      %v883 = vld [vmem:[%s6 + $0x18] sm:$0xff]
      %s884 = scalar_lea.vmem %s538, 16
      %v885 = vld [vmem:[%s884] sm:$0xff]
      %v886 = vld [vmem:[%s884 + $0x8] sm:$0xff]
      %v887 = vsel %vm555, %v885, 0.0
      %888 = vadd.xlane.f32.xlu0 %v887
      %v889 = vpop.xlane.xlu0 %888
      %v890 = vsel %vm555, %v886, 0.0
      %891 = vadd.xlane.f32.xlu0 %v890
      %v892 = vpop.xlane.xlu0 %891
      %v893 = vmul.f32 %v889, %v586
      %v894 = vmul.f32 %v892, %v586
      %v895 = vsub.f32 %v885, %v893
      %v896 = vsub.f32 %v886, %v894
      %v897 = vmul.f32 %v895, %v895
      %v898 = vmul.f32 %v896, %v896
      %v899 = vsel %vm555, %v897, 0.0
      %900 = vadd.xlane.f32.xlu0 %v899
      %v901 = vpop.xlane.xlu0 %900
      %v902 = vsel %vm555, %v898, 0.0
      %903 = vadd.xlane.f32.xlu0 %v902
      %v904 = vpop.xlane.xlu0 %903
      %v905 = vmul.f32 %v901, %v586
      %v906 = vmul.f32 %v904, %v586
      %v907 = vadd.f32 %v905, 1e-05
      %v908 = vadd.f32 %v906, 1e-05
      %v909 = vrsqrt.pop %v907
      %v910 = vmul.f32 %v909, %v907
      %v911 = vmul.f32 %v910, %v909
      %v912 = vmul.f32 0.5, %v911
      %v913 = vsub.f32 1.5, %v912
      %v914 = vmul.f32 %v909, %v913
      %vm915 = vweird.f32 %v907
      %vm916 = vweird.f32 %v909
      %vm917 = vmor %vm915, %vm916
      %v918 = vsel %vm917, %v909, %v914
      %v919 = vrsqrt.pop %v908
      %v920 = vmul.f32 %v919, %v908
      %v921 = vmul.f32 %v920, %v919
      %v922 = vmul.f32 0.5, %v921
      %v923 = vsub.f32 1.5, %v922
      %v924 = vmul.f32 %v919, %v923
      %vm925 = vweird.f32 %v908
      %vm926 = vweird.f32 %v919
      %vm927 = vmor %vm925, %vm926
      %v928 = vsel %vm927, %v919, %v924
      %v929 = vmul.f32 %v895, %v918
      %v930 = vmul.f32 %v896, %v928
      %v931 = vmul.f32 %v929, %v740
      %v932 = vmul.f32 %v930, %v740
      %v933 = vadd.f32 %v931, %v751
      %v934 = vadd.f32 %v932, %v751
      %v935 = vld [vmem:[%s6 + $0x20] sm:$0xff]
      %v936 = vld [vmem:[%s6 + $0x28] sm:$0xff]
      %v937 = vld [vmem:[%s6 + $0x30] sm:$0xff]
      %v938 = vld [vmem:[%s6 + $0x38] sm:$0xff]
      %v940 = vsel %vm555, %v933, 0
      %v943 = vsel %vm555, %v934, 0
      %945 = vmatpush.msra.mxu0 0.0
      %946 = vmatpush.msra.mxu0 0.0
      %947 = vmatpush.msra.mxu0 0.0
      %948 = vmatpush.msra.mxu0 0.0
      %949 = vmatpush.msra.mxu0 0.0
      %950 = vmatpush.msra.mxu0 0.0
      %951 = vmatpush.msra.mxu0 0.0
      %952 = vmatpush.msra.mxu0 0.0
      %953 = vmatpush.msra.mxu0 0.0
      %954 = vmatpush.msra.mxu0 0.0
      %955 = vmatpush.msra.mxu0 0.0
      %956 = vmatpush.msra.mxu0 0.0
      %957 = vmatpush.msra.mxu0 %v938
      %958 = vmatpush.msra.mxu0 %v937
      %959 = vmatpush.msra.mxu0 %v936
      %960 = vmatpush.msra.mxu0 %v935
      %961 = vmatmul.f32.gmra.mxu0 %v940
      %v962 = vpop.f32.mrf.mxu0
      %v963 = vadd.f32 0.0, %v962
      %964 = vmatmul.f32.gmra.mxu0 %v943
      %v965 = vpop.f32.mrf.mxu0
      %v966 = vadd.f32 0.0, %v965
      %967 = vdwg.mxu0
      %v969 = vsel %vm555, %v878, 0
      %v972 = vsel %vm555, %v879, 0
      %974 = vmatpush.msra.mxu0 0.0
      %975 = vmatpush.msra.mxu0 0.0
      %976 = vmatpush.msra.mxu0 0.0
      %977 = vmatpush.msra.mxu0 0.0
      %978 = vmatpush.msra.mxu0 0.0
      %979 = vmatpush.msra.mxu0 0.0
      %980 = vmatpush.msra.mxu0 0.0
      %981 = vmatpush.msra.mxu0 0.0
      %982 = vmatpush.msra.mxu0 0.0
      %983 = vmatpush.msra.mxu0 0.0
      %984 = vmatpush.msra.mxu0 0.0
      %985 = vmatpush.msra.mxu0 0.0
      %986 = vmatpush.msra.mxu0 %v883
      %987 = vmatpush.msra.mxu0 %v882
      %988 = vmatpush.msra.mxu0 %v881
      %989 = vmatpush.msra.mxu0 %v880
      %990 = vmatmul.f32.gmra.mxu0 %v969
      %v991 = vpop.f32.mrf.mxu0
      %v992 = vadd.f32 %v963, %v991
      %993 = vmatmul.f32.gmra.mxu0 %v972
      %v994 = vpop.f32.mrf.mxu0
      %v995 = vadd.f32 %v966, %v994
      %996 = vdwg.mxu0
      %s997 = scalar_lea.vmem %s538, 32
      %v998 = vld [vmem:[%s997] sm:$0xff]
      %v999 = vld [vmem:[%s997 + $0x8] sm:$0xff]
      %v1000 = vsel %vm555, %v998, 0.0
      %1001 = vadd.xlane.f32.xlu0 %v1000
      %v1002 = vpop.xlane.xlu0 %1001
      %v1003 = vsel %vm555, %v999, 0.0
      %1004 = vadd.xlane.f32.xlu0 %v1003
      %v1005 = vpop.xlane.xlu0 %1004
      %v1006 = vmul.f32 %v1002, %v586
      %v1007 = vmul.f32 %v1005, %v586
      %v1008 = vsub.f32 %v998, %v1006
      %v1009 = vsub.f32 %v999, %v1007
      %v1010 = vmul.f32 %v1008, %v1008
      %v1011 = vmul.f32 %v1009, %v1009
      %v1012 = vsel %vm555, %v1010, 0.0
      %1013 = vadd.xlane.f32.xlu0 %v1012
      %v1014 = vpop.xlane.xlu0 %1013
      %v1015 = vsel %vm555, %v1011, 0.0
      %1016 = vadd.xlane.f32.xlu0 %v1015
      %v1017 = vpop.xlane.xlu0 %1016
      %v1018 = vmul.f32 %v1014, %v586
      %v1019 = vmul.f32 %v1017, %v586
      %v1020 = vadd.f32 %v1018, 1e-05
      %v1021 = vadd.f32 %v1019, 1e-05
      %v1022 = vrsqrt.pop %v1020
      %v1023 = vmul.f32 %v1022, %v1020
      %v1024 = vmul.f32 %v1023, %v1022
      %v1025 = vmul.f32 0.5, %v1024
      %v1026 = vsub.f32 1.5, %v1025
      %v1027 = vmul.f32 %v1022, %v1026
      %vm1028 = vweird.f32 %v1020
      %vm1029 = vweird.f32 %v1022
      %vm1030 = vmor %vm1028, %vm1029
      %v1031 = vsel %vm1030, %v1022, %v1027
      %v1032 = vrsqrt.pop %v1021
      %v1033 = vmul.f32 %v1032, %v1021
      %v1034 = vmul.f32 %v1033, %v1032
      %v1035 = vmul.f32 0.5, %v1034
      %v1036 = vsub.f32 1.5, %v1035
      %v1037 = vmul.f32 %v1032, %v1036
      %vm1038 = vweird.f32 %v1021
      %vm1039 = vweird.f32 %v1032
      %vm1040 = vmor %vm1038, %vm1039
      %v1041 = vsel %vm1040, %v1032, %v1037
      %v1042 = vmul.f32 %v1008, %v1031
      %v1043 = vmul.f32 %v1009, %v1041
      %v1044 = vmul.f32 %v1042, %v740
      %v1045 = vmul.f32 %v1043, %v740
      %v1046 = vadd.f32 %v1044, %v751
      %v1047 = vadd.f32 %v1045, %v751
      %v1048 = vld [vmem:[%s6 + $0x40] sm:$0xff]
      %v1049 = vld [vmem:[%s6 + $0x48] sm:$0xff]
      %v1050 = vld [vmem:[%s6 + $0x50] sm:$0xff]
      %v1051 = vld [vmem:[%s6 + $0x58] sm:$0xff]
      %v1053 = vsel %vm555, %v1046, 0
      %v1056 = vsel %vm555, %v1047, 0
      %1058 = vmatpush.msra.mxu0 0.0
      %1059 = vmatpush.msra.mxu0 0.0
      %1060 = vmatpush.msra.mxu0 0.0
      %1061 = vmatpush.msra.mxu0 0.0
      %1062 = vmatpush.msra.mxu0 0.0
      %1063 = vmatpush.msra.mxu0 0.0
      %1064 = vmatpush.msra.mxu0 0.0
      %1065 = vmatpush.msra.mxu0 0.0
      %1066 = vmatpush.msra.mxu0 0.0
      %1067 = vmatpush.msra.mxu0 0.0
      %1068 = vmatpush.msra.mxu0 0.0
      %1069 = vmatpush.msra.mxu0 0.0
      %1070 = vmatpush.msra.mxu0 %v1051
      %1071 = vmatpush.msra.mxu0 %v1050
      %1072 = vmatpush.msra.mxu0 %v1049
      %1073 = vmatpush.msra.mxu0 %v1048
      %1074 = vmatmul.f32.gmra.mxu0 %v1053
      %v1075 = vpop.f32.mrf.mxu0
      %v1076 = vadd.f32 0.0, %v1075
      %1077 = vmatmul.f32.gmra.mxu0 %v1056
      %v1078 = vpop.f32.mrf.mxu0
      %v1079 = vadd.f32 0.0, %v1078
      %1080 = vdwg.mxu0
      %v1081 = vadd.f32 %v992, %v1076
      %v1082 = vadd.f32 %v995, %v1079
      %s1083 = scalar_lea.vmem %s538, 48
      %v1084 = vld [vmem:[%s1083] sm:$0xff]
      %v1085 = vld [vmem:[%s1083 + $0x8] sm:$0xff]
      %v1086 = vsel %vm555, %v1084, 0.0
      %1087 = vadd.xlane.f32.xlu0 %v1086
      %v1088 = vpop.xlane.xlu0 %1087
      %v1089 = vsel %vm555, %v1085, 0.0
      %1090 = vadd.xlane.f32.xlu0 %v1089
      %v1091 = vpop.xlane.xlu0 %1090
      %v1092 = vmul.f32 %v1088, %v586
      %v1093 = vmul.f32 %v1091, %v586
      %v1094 = vsub.f32 %v1084, %v1092
      %v1095 = vsub.f32 %v1085, %v1093
      %v1096 = vmul.f32 %v1094, %v1094
      %v1097 = vmul.f32 %v1095, %v1095
      %v1098 = vsel %vm555, %v1096, 0.0
      %1099 = vadd.xlane.f32.xlu0 %v1098
      %v1100 = vpop.xlane.xlu0 %1099
      %v1101 = vsel %vm555, %v1097, 0.0
      %1102 = vadd.xlane.f32.xlu0 %v1101
      %v1103 = vpop.xlane.xlu0 %1102
      %v1104 = vmul.f32 %v1100, %v586
      %v1105 = vmul.f32 %v1103, %v586
      %v1106 = vadd.f32 %v1104, 1e-05
      %v1107 = vadd.f32 %v1105, 1e-05
      %v1108 = vrsqrt.pop %v1106
      %v1109 = vmul.f32 %v1108, %v1106
      %v1110 = vmul.f32 %v1109, %v1108
      %v1111 = vmul.f32 0.5, %v1110
      %v1112 = vsub.f32 1.5, %v1111
      %v1113 = vmul.f32 %v1108, %v1112
      %vm1114 = vweird.f32 %v1106
      %vm1115 = vweird.f32 %v1108
      %vm1116 = vmor %vm1114, %vm1115
      %v1117 = vsel %vm1116, %v1108, %v1113
      %v1118 = vrsqrt.pop %v1107
      %v1119 = vmul.f32 %v1118, %v1107
      %v1120 = vmul.f32 %v1119, %v1118
      %v1121 = vmul.f32 0.5, %v1120
      %v1122 = vsub.f32 1.5, %v1121
      %v1123 = vmul.f32 %v1118, %v1122
      %vm1124 = vweird.f32 %v1107
      %vm1125 = vweird.f32 %v1118
      %vm1126 = vmor %vm1124, %vm1125
      %v1127 = vsel %vm1126, %v1118, %v1123
      %v1128 = vmul.f32 %v1094, %v1117
      %v1129 = vmul.f32 %v1095, %v1127
      %v1130 = vmul.f32 %v1128, %v740
      %v1131 = vmul.f32 %v1129, %v740
      %v1132 = vadd.f32 %v1130, %v751
      %v1133 = vadd.f32 %v1131, %v751
      %v1134 = vld [vmem:[%s6 + $0x60] sm:$0xff]
      %v1135 = vld [vmem:[%s6 + $0x68] sm:$0xff]
      %v1136 = vld [vmem:[%s6 + $0x70] sm:$0xff]
      %v1137 = vld [vmem:[%s6 + $0x78] sm:$0xff]
      %v1139 = vsel %vm555, %v1132, 0
      %v1142 = vsel %vm555, %v1133, 0
      %1144 = vmatpush.msra.mxu0 0.0
      %1145 = vmatpush.msra.mxu0 0.0
      %1146 = vmatpush.msra.mxu0 0.0
      %1147 = vmatpush.msra.mxu0 0.0
      %1148 = vmatpush.msra.mxu0 0.0
      %1149 = vmatpush.msra.mxu0 0.0
      %1150 = vmatpush.msra.mxu0 0.0
      %1151 = vmatpush.msra.mxu0 0.0
      %1152 = vmatpush.msra.mxu0 0.0
      %1153 = vmatpush.msra.mxu0 0.0
      %1154 = vmatpush.msra.mxu0 0.0
      %1155 = vmatpush.msra.mxu0 0.0
      %1156 = vmatpush.msra.mxu0 %v1137
      %1157 = vmatpush.msra.mxu0 %v1136
      %1158 = vmatpush.msra.mxu0 %v1135
      %1159 = vmatpush.msra.mxu0 %v1134
      %1160 = vmatmul.f32.gmra.mxu0 %v1139
      %v1161 = vpop.f32.mrf.mxu0
      %v1162 = vadd.f32 0.0, %v1161
      %1163 = vmatmul.f32.gmra.mxu0 %v1142
      %v1164 = vpop.f32.mrf.mxu0
      %v1165 = vadd.f32 0.0, %v1164
      %1166 = vdwg.mxu0
      %v1167 = vadd.f32 %v1081, %v1162
      %v1168 = vadd.f32 %v1082, %v1165
      %v1169 = vld [vmem:[%s7] sm:$0x1]
      %v1171 = vperm.slane %v1169, 0
      %v1173 = vadd.f32 %v1167, %v1171
      %v1174 = vadd.f32 %v1168, %v1171
      %v1175 = vld [vmem:[%s8] sm:$0x1]
      %v1176 = vld [vmem:[%s9] sm:$0x1]
      %v1177 = vsel %vm555, %v1173, 0.0
      %1178 = vadd.xlane.f32.xlu0 %v1177
      %v1179 = vpop.xlane.xlu0 %1178
      %v1180 = vsel %vm555, %v1174, 0.0
      %1181 = vadd.xlane.f32.xlu0 %v1180
      %v1182 = vpop.xlane.xlu0 %1181
      %v1183 = vmul.f32 %v1179, %v586
      %v1184 = vmul.f32 %v1182, %v586
      %v1185 = vsub.f32 %v1173, %v1183
      %v1186 = vsub.f32 %v1174, %v1184
      %v1187 = vmul.f32 %v1185, %v1185
      %v1188 = vmul.f32 %v1186, %v1186
      %v1189 = vsel %vm555, %v1187, 0.0
      %1190 = vadd.xlane.f32.xlu0 %v1189
      %v1191 = vpop.xlane.xlu0 %1190
      %v1192 = vsel %vm555, %v1188, 0.0
      %1193 = vadd.xlane.f32.xlu0 %v1192
      %v1194 = vpop.xlane.xlu0 %1193
      %v1195 = vmul.f32 %v1191, %v586
      %v1196 = vmul.f32 %v1194, %v586
      %v1197 = vadd.f32 %v1195, 1e-05
      %v1198 = vadd.f32 %v1196, 1e-05
      %v1199 = vrsqrt.pop %v1197
      %v1200 = vmul.f32 %v1199, %v1197
      %v1201 = vmul.f32 %v1200, %v1199
      %v1202 = vmul.f32 0.5, %v1201
      %v1203 = vsub.f32 1.5, %v1202
      %v1204 = vmul.f32 %v1199, %v1203
      %vm1205 = vweird.f32 %v1197
      %vm1206 = vweird.f32 %v1199
      %vm1207 = vmor %vm1205, %vm1206
      %v1208 = vsel %vm1207, %v1199, %v1204
      %v1209 = vrsqrt.pop %v1198
      %v1210 = vmul.f32 %v1209, %v1198
      %v1211 = vmul.f32 %v1210, %v1209
      %v1212 = vmul.f32 0.5, %v1211
      %v1213 = vsub.f32 1.5, %v1212
      %v1214 = vmul.f32 %v1209, %v1213
      %vm1215 = vweird.f32 %v1198
      %vm1216 = vweird.f32 %v1209
      %vm1217 = vmor %vm1215, %vm1216
      %v1218 = vsel %vm1217, %v1209, %v1214
      %v1219 = vmul.f32 %v1185, %v1208
      %v1220 = vmul.f32 %v1186, %v1218
      %v1222 = vperm.slane %v1175, 0
      %v1224 = vmul.f32 %v1219, %v1222
      %v1225 = vmul.f32 %v1220, %v1222
      %v1227 = vperm.slane %v1176, 0
      %v1229 = vadd.f32 %v1224, %v1227
      %v1230 = vadd.f32 %v1225, %v1227
      %v1231 = vld [vmem:[%s5] sm:$0xff]
      %v1232 = vld [vmem:[%s5 + $0x8] sm:$0xff]
      %v1233 = vld [vmem:[%s5 + $0x10] sm:$0xff]
      %v1234 = vld [vmem:[%s5 + $0x18] sm:$0xff]
      %v1236 = vsel %vm555, %v1229, 0
      %v1239 = vsel %vm555, %v1230, 0
      %1241 = vmatpush.msra.mxu0 0.0
      %1242 = vmatpush.msra.mxu0 0.0
      %1243 = vmatpush.msra.mxu0 0.0
      %1244 = vmatpush.msra.mxu0 0.0
      %1245 = vmatpush.msra.mxu0 0.0
      %1246 = vmatpush.msra.mxu0 0.0
      %1247 = vmatpush.msra.mxu0 0.0
      %1248 = vmatpush.msra.mxu0 0.0
      %1249 = vmatpush.msra.mxu0 0.0
      %1250 = vmatpush.msra.mxu0 0.0
      %1251 = vmatpush.msra.mxu0 0.0
      %1252 = vmatpush.msra.mxu0 0.0
      %1253 = vmatpush.msra.mxu0 %v1234
      %1254 = vmatpush.msra.mxu0 %v1233
      %1255 = vmatpush.msra.mxu0 %v1232
      %1256 = vmatpush.msra.mxu0 %v1231
      %1257 = vmatmul.f32.gmra.mxu0 %v1236
      %v1258 = vpop.f32.mrf.mxu0
      %v1259 = vadd.f32 0.0, %v1258
      %1260 = vmatmul.f32.gmra.mxu0 %v1239
      %v1261 = vpop.f32.mrf.mxu0
      %v1262 = vadd.f32 0.0, %v1261
      %1263 = vdwg.mxu0
      %vm1264 = vcmask 64512
      %v1266 = vsel %vm1264, %v807, 0
      %v1269 = vsel %vm1264, %v810, 0
      %v1272 = vsel %vm1264, %v813, 0
      %v1275 = vsel %vm1264, %v816, 0
      %v1278 = vsel %vm1264, %v819, 0
      %v1281 = vsel %vm1264, %v822, 0
      %v1284 = vsel %vm1264, %v825, 0
      %v1287 = vsel %vm1264, %v828, 0
      %v1290 = vsel %vm1264, %v1259, 0
      %v1293 = vsel %vm1264, %v1262, 0
      %1295 = vmatpush.xpose.msra.mxu0 0.0
      %1296 = vmatpush.xpose.msra.mxu0 0.0
      %1297 = vmatpush.xpose.msra.mxu0 0.0
      %1298 = vmatpush.xpose.msra.mxu0 0.0
      %1299 = vmatpush.xpose.msra.mxu0 0.0
      %1300 = vmatpush.xpose.msra.mxu0 0.0
      %1301 = vmatpush.xpose.msra.mxu0 0.0
      %1302 = vmatpush.xpose.msra.mxu0 0.0
      %1303 = vmatpush.xpose.msra.mxu0 0.0
      %1304 = vmatpush.xpose.msra.mxu0 0.0
      %1305 = vmatpush.xpose.msra.mxu0 0.0
      %1306 = vmatpush.xpose.msra.mxu0 0.0
      %1307 = vmatpush.xpose.msra.mxu0 0.0
      %1308 = vmatpush.xpose.msra.mxu0 0.0
      %1309 = vmatpush.xpose.msra.mxu0 %v1293
      %1310 = vmatpush.xpose.msra.mxu0 %v1290
      %1311 = vmatmul.f32.gmra.mxu0 %v1266
      %v1312 = vpop.f32.mrf.mxu0
      %v1313 = vadd.f32 0.0, %v1312
      %1314 = vmatmul.f32.gmra.mxu0 %v1269
      %v1315 = vpop.f32.mrf.mxu0
      %v1316 = vadd.f32 0.0, %v1315
      %1317 = vmatmul.f32.gmra.mxu0 %v1272
      %v1318 = vpop.f32.mrf.mxu0
      %v1319 = vadd.f32 0.0, %v1318
      %1320 = vmatmul.f32.gmra.mxu0 %v1275
      %v1321 = vpop.f32.mrf.mxu0
      %v1322 = vadd.f32 0.0, %v1321
      %1323 = vmatmul.f32.gmra.mxu0 %v1278
      %v1324 = vpop.f32.mrf.mxu0
      %v1325 = vadd.f32 0.0, %v1324
      %1326 = vmatmul.f32.gmra.mxu0 %v1281
      %v1327 = vpop.f32.mrf.mxu0
      %v1328 = vadd.f32 0.0, %v1327
      %1329 = vmatmul.f32.gmra.mxu0 %v1284
      %v1330 = vpop.f32.mrf.mxu0
      %v1331 = vadd.f32 0.0, %v1330
      %1332 = vmatmul.f32.gmra.mxu0 %v1287
      %v1333 = vpop.f32.mrf.mxu0
      %v1334 = vadd.f32 0.0, %v1333
      %1335 = vdwg.mxu0
      %v1336 = vmul.f32 %v1313, 0.35355338
      %v1337 = vmul.f32 %v1316, 0.35355338
      %v1338 = vmul.f32 %v1319, 0.35355338
      %v1339 = vmul.f32 %v1322, 0.35355338
      %v1340 = vmul.f32 %v1325, 0.35355338
      %v1341 = vmul.f32 %v1328, 0.35355338
      %v1342 = vmul.f32 %v1331, 0.35355338
      %v1343 = vmul.f32 %v1334, 0.35355338
      %vm1344 = vcmask 130048
      %v1345 = vsel %vm1344, %v1336, -inf
      %1346 = vmax.xlane.f32.xlu0 %v1345
      %v1347 = vpop.xlane.xlu0 %1346
      %v1348 = vsel %vm1344, %v1337, -inf
      %1349 = vmax.xlane.f32.xlu0 %v1348
      %v1350 = vpop.xlane.xlu0 %1349
      %v1351 = vsel %vm1344, %v1338, -inf
      %1352 = vmax.xlane.f32.xlu0 %v1351
      %v1353 = vpop.xlane.xlu0 %1352
      %v1354 = vsel %vm1344, %v1339, -inf
      %1355 = vmax.xlane.f32.xlu0 %v1354
      %v1356 = vpop.xlane.xlu0 %1355
      %v1357 = vsel %vm1344, %v1340, -inf
      %1358 = vmax.xlane.f32.xlu0 %v1357
      %v1359 = vpop.xlane.xlu0 %1358
      %v1360 = vsel %vm1344, %v1341, -inf
      %1361 = vmax.xlane.f32.xlu0 %v1360
      %v1362 = vpop.xlane.xlu0 %1361
      %v1363 = vsel %vm1344, %v1342, -inf
      %1364 = vmax.xlane.f32.xlu0 %v1363
      %v1365 = vpop.xlane.xlu0 %1364
      %v1366 = vsel %vm1344, %v1343, -inf
      %1367 = vmax.xlane.f32.xlu0 %v1366
      %v1368 = vpop.xlane.xlu0 %1367
      %v1369 = vsub.f32 %v1336, %v1347
      %v1370 = vsub.f32 %v1337, %v1350
      %v1371 = vsub.f32 %v1338, %v1353
      %v1372 = vsub.f32 %v1339, %v1356
      %v1373 = vsub.f32 %v1340, %v1359
      %v1374 = vsub.f32 %v1341, %v1362
      %v1375 = vsub.f32 %v1342, %v1365
      %v1376 = vsub.f32 %v1343, %v1368
      %v1377 = vmul.f32 %v1369, 1.442695
      %v1378 = vpow.pop %v1377
      %v1379 = vmul.f32 %v1370, 1.442695
      %v1380 = vpow.pop %v1379
      %v1381 = vmul.f32 %v1371, 1.442695
      %v1382 = vpow.pop %v1381
      %v1383 = vmul.f32 %v1372, 1.442695
      %v1384 = vpow.pop %v1383
      %v1385 = vmul.f32 %v1373, 1.442695
      %v1386 = vpow.pop %v1385
      %v1387 = vmul.f32 %v1374, 1.442695
      %v1388 = vpow.pop %v1387
      %v1389 = vmul.f32 %v1375, 1.442695
      %v1390 = vpow.pop %v1389
      %v1391 = vmul.f32 %v1376, 1.442695
      %v1392 = vpow.pop %v1391
      %v1393 = vsel %vm1344, %v1378, 0.0
      %1394 = vadd.xlane.f32.xlu0 %v1393
      %v1395 = vpop.xlane.xlu0 %1394
      %v1396 = vsel %vm1344, %v1380, 0.0
      %1397 = vadd.xlane.f32.xlu0 %v1396
      %v1398 = vpop.xlane.xlu0 %1397
      %v1399 = vsel %vm1344, %v1382, 0.0
      %1400 = vadd.xlane.f32.xlu0 %v1399
      %v1401 = vpop.xlane.xlu0 %1400
      %v1402 = vsel %vm1344, %v1384, 0.0
      %1403 = vadd.xlane.f32.xlu0 %v1402
      %v1404 = vpop.xlane.xlu0 %1403
      %v1405 = vsel %vm1344, %v1386, 0.0
      %1406 = vadd.xlane.f32.xlu0 %v1405
      %v1407 = vpop.xlane.xlu0 %1406
      %v1408 = vsel %vm1344, %v1388, 0.0
      %1409 = vadd.xlane.f32.xlu0 %v1408
      %v1410 = vpop.xlane.xlu0 %1409
      %v1411 = vsel %vm1344, %v1390, 0.0
      %1412 = vadd.xlane.f32.xlu0 %v1411
      %v1413 = vpop.xlane.xlu0 %1412
      %v1414 = vsel %vm1344, %v1392, 0.0
      %1415 = vadd.xlane.f32.xlu0 %v1414
      %v1416 = vpop.xlane.xlu0 %1415
      %v1417 = vrcp.pop %v1395
      %v1418 = vrcp.pop %v1398
      %v1419 = vrcp.pop %v1401
      %v1420 = vrcp.pop %v1404
      %v1421 = vrcp.pop %v1407
      %v1422 = vrcp.pop %v1410
      %v1423 = vrcp.pop %v1413
      %v1424 = vrcp.pop %v1416
      %v1425 = vmul.f32 %v1378, %v1417
      %v1426 = vmul.f32 %v1380, %v1418
      %v1427 = vmul.f32 %v1382, %v1419
      %v1428 = vmul.f32 %v1384, %v1420
      %v1429 = vmul.f32 %v1386, %v1421
      %v1430 = vmul.f32 %v1388, %v1422
      %v1431 = vmul.f32 %v1390, %v1423
      %v1432 = vmul.f32 %v1392, %v1424
      %1433 = vrot.lane.b32.xlu0 %v1259, 96
      %v1434 = vpop.permute.xlu0 %1433
      %1435 = vrot.lane.b32.xlu0 %v1262, 96
      %v1436 = vpop.permute.xlu0 %1435
      %v1440 = vsel %vm1344, %v1425, 0
      %v1443 = vsel %vm1344, %v1426, 0
      %v1446 = vsel %vm1344, %v1427, 0
      %v1449 = vsel %vm1344, %v1428, 0
      %v1452 = vsel %vm1344, %v1429, 0
      %v1455 = vsel %vm1344, %v1430, 0
      %v1458 = vsel %vm1344, %v1431, 0
      %v1461 = vsel %vm1344, %v1432, 0
      %1463 = vmatpush.msra.mxu0 0.0
      %1464 = vmatpush.msra.mxu0 0.0
      %1465 = vmatpush.msra.mxu0 0.0
      %1466 = vmatpush.msra.mxu0 0.0
      %1467 = vmatpush.msra.mxu0 0.0
      %1468 = vmatpush.msra.mxu0 0.0
      %1469 = vmatpush.msra.mxu0 0.0
      %1470 = vmatpush.msra.mxu0 0.0
      %1471 = vmatpush.msra.mxu0 0.0
      %1472 = vmatpush.msra.mxu0 0.0
      %1473 = vmatpush.msra.mxu0 0.0
      %1474 = vmatpush.msra.mxu0 0.0
      %1475 = vmatpush.msra.mxu0 0.0
      %1476 = vmatpush.msra.mxu0 0.0
      %1477 = vmatpush.msra.mxu0 %v1436
      %1478 = vmatpush.msra.mxu0 %v1434
      %1479 = vmatmul.f32.gmra.mxu0 %v1440
      %v1480 = vpop.f32.mrf.mxu0
      %v1481 = vadd.f32 0.0, %v1480
      %1482 = vmatmul.f32.gmra.mxu0 %v1443
      %v1483 = vpop.f32.mrf.mxu0
      %v1484 = vadd.f32 0.0, %v1483
      %1485 = vmatmul.f32.gmra.mxu0 %v1446
      %v1486 = vpop.f32.mrf.mxu0
      %v1487 = vadd.f32 0.0, %v1486
      %1488 = vmatmul.f32.gmra.mxu0 %v1449
      %v1489 = vpop.f32.mrf.mxu0
      %v1490 = vadd.f32 0.0, %v1489
      %1491 = vmatmul.f32.gmra.mxu0 %v1452
      %v1492 = vpop.f32.mrf.mxu0
      %v1493 = vadd.f32 0.0, %v1492
      %1494 = vmatmul.f32.gmra.mxu0 %v1455
      %v1495 = vpop.f32.mrf.mxu0
      %v1496 = vadd.f32 0.0, %v1495
      %1497 = vmatmul.f32.gmra.mxu0 %v1458
      %v1498 = vpop.f32.mrf.mxu0
      %v1499 = vadd.f32 0.0, %v1498
      %1500 = vmatmul.f32.gmra.mxu0 %v1461
      %v1501 = vpop.f32.mrf.mxu0
      %v1502 = vadd.f32 0.0, %v1501
      %1503 = vdwg.mxu0
      %1504 = vrot.lane.b32.xlu0 %v807, 120
      %v1505 = vpop.permute.xlu0 %1504
      %1506 = vrot.lane.b32.xlu0 %v810, 120
      %v1507 = vpop.permute.xlu0 %1506
      %1508 = vrot.lane.b32.xlu0 %v813, 120
      %v1509 = vpop.permute.xlu0 %1508
      %1510 = vrot.lane.b32.xlu0 %v816, 120
      %v1511 = vpop.permute.xlu0 %1510
      %1512 = vrot.lane.b32.xlu0 %v819, 120
      %v1513 = vpop.permute.xlu0 %1512
      %1514 = vrot.lane.b32.xlu0 %v822, 120
      %v1515 = vpop.permute.xlu0 %1514
      %1516 = vrot.lane.b32.xlu0 %v825, 120
      %v1517 = vpop.permute.xlu0 %1516
      %1518 = vrot.lane.b32.xlu0 %v828, 120
      %v1519 = vpop.permute.xlu0 %1518
      %1520 = vrot.lane.b32.xlu0 %v1259, 120
      %v1521 = vpop.permute.xlu0 %1520
      %1522 = vrot.lane.b32.xlu0 %v1262, 120
      %v1523 = vpop.permute.xlu0 %1522
      %v1524 = vsel %vm1264, %v1505, 0
      %v1526 = vsel %vm1264, %v1507, 0
      %v1528 = vsel %vm1264, %v1509, 0
      %v1530 = vsel %vm1264, %v1511, 0
      %v1532 = vsel %vm1264, %v1513, 0
      %v1534 = vsel %vm1264, %v1515, 0
      %v1536 = vsel %vm1264, %v1517, 0
      %v1538 = vsel %vm1264, %v1519, 0
      %v1540 = vsel %vm1264, %v1521, 0
      %v1542 = vsel %vm1264, %v1523, 0
      %1544 = vmatpush.xpose.msra.mxu0 0.0
      %1545 = vmatpush.xpose.msra.mxu0 0.0
      %1546 = vmatpush.xpose.msra.mxu0 0.0
      %1547 = vmatpush.xpose.msra.mxu0 0.0
      %1548 = vmatpush.xpose.msra.mxu0 0.0
      %1549 = vmatpush.xpose.msra.mxu0 0.0
      %1550 = vmatpush.xpose.msra.mxu0 0.0
      %1551 = vmatpush.xpose.msra.mxu0 0.0
      %1552 = vmatpush.xpose.msra.mxu0 0.0
      %1553 = vmatpush.xpose.msra.mxu0 0.0
      %1554 = vmatpush.xpose.msra.mxu0 0.0
      %1555 = vmatpush.xpose.msra.mxu0 0.0
      %1556 = vmatpush.xpose.msra.mxu0 0.0
      %1557 = vmatpush.xpose.msra.mxu0 0.0
      %1558 = vmatpush.xpose.msra.mxu0 %v1542
      %1559 = vmatpush.xpose.msra.mxu0 %v1540
      %1560 = vmatmul.f32.gmra.mxu0 %v1524
      %v1561 = vpop.f32.mrf.mxu0
      %v1562 = vadd.f32 0.0, %v1561
      %1563 = vmatmul.f32.gmra.mxu0 %v1526
      %v1564 = vpop.f32.mrf.mxu0
      %v1565 = vadd.f32 0.0, %v1564
      %1566 = vmatmul.f32.gmra.mxu0 %v1528
      %v1567 = vpop.f32.mrf.mxu0
      %v1568 = vadd.f32 0.0, %v1567
      %1569 = vmatmul.f32.gmra.mxu0 %v1530
      %v1570 = vpop.f32.mrf.mxu0
      %v1571 = vadd.f32 0.0, %v1570
      %1572 = vmatmul.f32.gmra.mxu0 %v1532
      %v1573 = vpop.f32.mrf.mxu0
      %v1574 = vadd.f32 0.0, %v1573
      %1575 = vmatmul.f32.gmra.mxu0 %v1534
      %v1576 = vpop.f32.mrf.mxu0
      %v1577 = vadd.f32 0.0, %v1576
      %1578 = vmatmul.f32.gmra.mxu0 %v1536
      %v1579 = vpop.f32.mrf.mxu0
      %v1580 = vadd.f32 0.0, %v1579
      %1581 = vmatmul.f32.gmra.mxu0 %v1538
      %v1582 = vpop.f32.mrf.mxu0
      %v1583 = vadd.f32 0.0, %v1582
      %1584 = vdwg.mxu0
      %v1585 = vmul.f32 %v1562, 0.35355338
      %v1586 = vmul.f32 %v1565, 0.35355338
      %v1587 = vmul.f32 %v1568, 0.35355338
      %v1588 = vmul.f32 %v1571, 0.35355338
      %v1589 = vmul.f32 %v1574, 0.35355338
      %v1590 = vmul.f32 %v1577, 0.35355338
      %v1591 = vmul.f32 %v1580, 0.35355338
      %v1592 = vmul.f32 %v1583, 0.35355338
      %v1593 = vsel %vm1344, %v1585, -inf
      %1594 = vmax.xlane.f32.xlu0 %v1593
      %v1595 = vpop.xlane.xlu0 %1594
      %v1596 = vsel %vm1344, %v1586, -inf
      %1597 = vmax.xlane.f32.xlu0 %v1596
      %v1598 = vpop.xlane.xlu0 %1597
      %v1599 = vsel %vm1344, %v1587, -inf
      %1600 = vmax.xlane.f32.xlu0 %v1599
      %v1601 = vpop.xlane.xlu0 %1600
      %v1602 = vsel %vm1344, %v1588, -inf
      %1603 = vmax.xlane.f32.xlu0 %v1602
      %v1604 = vpop.xlane.xlu0 %1603
      %v1605 = vsel %vm1344, %v1589, -inf
      %1606 = vmax.xlane.f32.xlu0 %v1605
      %v1607 = vpop.xlane.xlu0 %1606
      %v1608 = vsel %vm1344, %v1590, -inf
      %1609 = vmax.xlane.f32.xlu0 %v1608
      %v1610 = vpop.xlane.xlu0 %1609
      %v1611 = vsel %vm1344, %v1591, -inf
      %1612 = vmax.xlane.f32.xlu0 %v1611
      %v1613 = vpop.xlane.xlu0 %1612
      %v1614 = vsel %vm1344, %v1592, -inf
      %1615 = vmax.xlane.f32.xlu0 %v1614
      %v1616 = vpop.xlane.xlu0 %1615
      %v1617 = vsub.f32 %v1585, %v1595
      %v1618 = vsub.f32 %v1586, %v1598
      %v1619 = vsub.f32 %v1587, %v1601
      %v1620 = vsub.f32 %v1588, %v1604
      %v1621 = vsub.f32 %v1589, %v1607
      %v1622 = vsub.f32 %v1590, %v1610
      %v1623 = vsub.f32 %v1591, %v1613
      %v1624 = vsub.f32 %v1592, %v1616
      %v1625 = vmul.f32 %v1617, 1.442695
      %v1626 = vpow.pop %v1625
      %v1627 = vmul.f32 %v1618, 1.442695
      %v1628 = vpow.pop %v1627
      %v1629 = vmul.f32 %v1619, 1.442695
      %v1630 = vpow.pop %v1629
      %v1631 = vmul.f32 %v1620, 1.442695
      %v1632 = vpow.pop %v1631
      %v1633 = vmul.f32 %v1621, 1.442695
      %v1634 = vpow.pop %v1633
      %v1635 = vmul.f32 %v1622, 1.442695
      %v1636 = vpow.pop %v1635
      %v1637 = vmul.f32 %v1623, 1.442695
      %v1638 = vpow.pop %v1637
      %v1639 = vmul.f32 %v1624, 1.442695
      %v1640 = vpow.pop %v1639
      %v1641 = vsel %vm1344, %v1626, 0.0
      %1642 = vadd.xlane.f32.xlu0 %v1641
      %v1643 = vpop.xlane.xlu0 %1642
      %v1644 = vsel %vm1344, %v1628, 0.0
      %1645 = vadd.xlane.f32.xlu0 %v1644
      %v1646 = vpop.xlane.xlu0 %1645
      %v1647 = vsel %vm1344, %v1630, 0.0
      %1648 = vadd.xlane.f32.xlu0 %v1647
      %v1649 = vpop.xlane.xlu0 %1648
      %v1650 = vsel %vm1344, %v1632, 0.0
      %1651 = vadd.xlane.f32.xlu0 %v1650
      %v1652 = vpop.xlane.xlu0 %1651
      %v1653 = vsel %vm1344, %v1634, 0.0
      %1654 = vadd.xlane.f32.xlu0 %v1653
      %v1655 = vpop.xlane.xlu0 %1654
      %v1656 = vsel %vm1344, %v1636, 0.0
      %1657 = vadd.xlane.f32.xlu0 %v1656
      %v1658 = vpop.xlane.xlu0 %1657
      %v1659 = vsel %vm1344, %v1638, 0.0
      %1660 = vadd.xlane.f32.xlu0 %v1659
      %v1661 = vpop.xlane.xlu0 %1660
      %v1662 = vsel %vm1344, %v1640, 0.0
      %1663 = vadd.xlane.f32.xlu0 %v1662
      %v1664 = vpop.xlane.xlu0 %1663
      %v1665 = vrcp.pop %v1643
      %v1666 = vrcp.pop %v1646
      %v1667 = vrcp.pop %v1649
      %v1668 = vrcp.pop %v1652
      %v1669 = vrcp.pop %v1655
      %v1670 = vrcp.pop %v1658
      %v1671 = vrcp.pop %v1661
      %v1672 = vrcp.pop %v1664
      %v1673 = vmul.f32 %v1626, %v1665
      %v1674 = vmul.f32 %v1628, %v1666
      %v1675 = vmul.f32 %v1630, %v1667
      %v1676 = vmul.f32 %v1632, %v1668
      %v1677 = vmul.f32 %v1634, %v1669
      %v1678 = vmul.f32 %v1636, %v1670
      %v1679 = vmul.f32 %v1638, %v1671
      %v1680 = vmul.f32 %v1640, %v1672
      %1681 = vrot.lane.b32.xlu0 %v1259, 88
      %v1682 = vpop.permute.xlu0 %1681
      %1683 = vrot.lane.b32.xlu0 %v1262, 88
      %v1684 = vpop.permute.xlu0 %1683
      %v1688 = vsel %vm1344, %v1673, 0
      %v1691 = vsel %vm1344, %v1674, 0
      %v1694 = vsel %vm1344, %v1675, 0
      %v1697 = vsel %vm1344, %v1676, 0
      %v1700 = vsel %vm1344, %v1677, 0
      %v1703 = vsel %vm1344, %v1678, 0
      %v1706 = vsel %vm1344, %v1679, 0
      %v1709 = vsel %vm1344, %v1680, 0
      %1711 = vmatpush.msra.mxu0 0.0
      %1712 = vmatpush.msra.mxu0 0.0
      %1713 = vmatpush.msra.mxu0 0.0
      %1714 = vmatpush.msra.mxu0 0.0
      %1715 = vmatpush.msra.mxu0 0.0
      %1716 = vmatpush.msra.mxu0 0.0
      %1717 = vmatpush.msra.mxu0 0.0
      %1718 = vmatpush.msra.mxu0 0.0
      %1719 = vmatpush.msra.mxu0 0.0
      %1720 = vmatpush.msra.mxu0 0.0
      %1721 = vmatpush.msra.mxu0 0.0
      %1722 = vmatpush.msra.mxu0 0.0
      %1723 = vmatpush.msra.mxu0 0.0
      %1724 = vmatpush.msra.mxu0 0.0
      %1725 = vmatpush.msra.mxu0 %v1684
      %1726 = vmatpush.msra.mxu0 %v1682
      %1727 = vmatmul.f32.gmra.mxu0 %v1688
      %v1728 = vpop.f32.mrf.mxu0
      %v1729 = vadd.f32 0.0, %v1728
      %1730 = vmatmul.f32.gmra.mxu0 %v1691
      %v1731 = vpop.f32.mrf.mxu0
      %v1732 = vadd.f32 0.0, %v1731
      %1733 = vmatmul.f32.gmra.mxu0 %v1694
      %v1734 = vpop.f32.mrf.mxu0
      %v1735 = vadd.f32 0.0, %v1734
      %1736 = vmatmul.f32.gmra.mxu0 %v1697
      %v1737 = vpop.f32.mrf.mxu0
      %v1738 = vadd.f32 0.0, %v1737
      %1739 = vmatmul.f32.gmra.mxu0 %v1700
      %v1740 = vpop.f32.mrf.mxu0
      %v1741 = vadd.f32 0.0, %v1740
      %1742 = vmatmul.f32.gmra.mxu0 %v1703
      %v1743 = vpop.f32.mrf.mxu0
      %v1744 = vadd.f32 0.0, %v1743
      %1745 = vmatmul.f32.gmra.mxu0 %v1706
      %v1746 = vpop.f32.mrf.mxu0
      %v1747 = vadd.f32 0.0, %v1746
      %1748 = vmatmul.f32.gmra.mxu0 %v1709
      %v1749 = vpop.f32.mrf.mxu0
      %v1750 = vadd.f32 0.0, %v1749
      %1751 = vdwg.mxu0
      %1752 = vrot.lane.b32.xlu0 %v807, 112
      %v1753 = vpop.permute.xlu0 %1752
      %1754 = vrot.lane.b32.xlu0 %v810, 112
      %v1755 = vpop.permute.xlu0 %1754
      %1756 = vrot.lane.b32.xlu0 %v813, 112
      %v1757 = vpop.permute.xlu0 %1756
      %1758 = vrot.lane.b32.xlu0 %v816, 112
      %v1759 = vpop.permute.xlu0 %1758
      %1760 = vrot.lane.b32.xlu0 %v819, 112
      %v1761 = vpop.permute.xlu0 %1760
      %1762 = vrot.lane.b32.xlu0 %v822, 112
      %v1763 = vpop.permute.xlu0 %1762
      %1764 = vrot.lane.b32.xlu0 %v825, 112
      %v1765 = vpop.permute.xlu0 %1764
      %1766 = vrot.lane.b32.xlu0 %v828, 112
      %v1767 = vpop.permute.xlu0 %1766
      %1768 = vrot.lane.b32.xlu0 %v1259, 112
      %v1769 = vpop.permute.xlu0 %1768
      %1770 = vrot.lane.b32.xlu0 %v1262, 112
      %v1771 = vpop.permute.xlu0 %1770
      %v1772 = vsel %vm1264, %v1753, 0
      %v1774 = vsel %vm1264, %v1755, 0
      %v1776 = vsel %vm1264, %v1757, 0
      %v1778 = vsel %vm1264, %v1759, 0
      %v1780 = vsel %vm1264, %v1761, 0
      %v1782 = vsel %vm1264, %v1763, 0
      %v1784 = vsel %vm1264, %v1765, 0
      %v1786 = vsel %vm1264, %v1767, 0
      %v1788 = vsel %vm1264, %v1769, 0
      %v1790 = vsel %vm1264, %v1771, 0
      %1792 = vmatpush.xpose.msra.mxu0 0.0
      %1793 = vmatpush.xpose.msra.mxu0 0.0
      %1794 = vmatpush.xpose.msra.mxu0 0.0
      %1795 = vmatpush.xpose.msra.mxu0 0.0
      %1796 = vmatpush.xpose.msra.mxu0 0.0
      %1797 = vmatpush.xpose.msra.mxu0 0.0
      %1798 = vmatpush.xpose.msra.mxu0 0.0
      %1799 = vmatpush.xpose.msra.mxu0 0.0
      %1800 = vmatpush.xpose.msra.mxu0 0.0
      %1801 = vmatpush.xpose.msra.mxu0 0.0
      %1802 = vmatpush.xpose.msra.mxu0 0.0
      %1803 = vmatpush.xpose.msra.mxu0 0.0
      %1804 = vmatpush.xpose.msra.mxu0 0.0
      %1805 = vmatpush.xpose.msra.mxu0 0.0
      %1806 = vmatpush.xpose.msra.mxu0 %v1790
      %1807 = vmatpush.xpose.msra.mxu0 %v1788
      %1808 = vmatmul.f32.gmra.mxu0 %v1772
      %v1809 = vpop.f32.mrf.mxu0
      %v1810 = vadd.f32 0.0, %v1809
      %1811 = vmatmul.f32.gmra.mxu0 %v1774
      %v1812 = vpop.f32.mrf.mxu0
      %v1813 = vadd.f32 0.0, %v1812
      %1814 = vmatmul.f32.gmra.mxu0 %v1776
      %v1815 = vpop.f32.mrf.mxu0
      %v1816 = vadd.f32 0.0, %v1815
      %1817 = vmatmul.f32.gmra.mxu0 %v1778
      %v1818 = vpop.f32.mrf.mxu0
      %v1819 = vadd.f32 0.0, %v1818
      %1820 = vmatmul.f32.gmra.mxu0 %v1780
      %v1821 = vpop.f32.mrf.mxu0
      %v1822 = vadd.f32 0.0, %v1821
      %1823 = vmatmul.f32.gmra.mxu0 %v1782
      %v1824 = vpop.f32.mrf.mxu0
      %v1825 = vadd.f32 0.0, %v1824
      %1826 = vmatmul.f32.gmra.mxu0 %v1784
      %v1827 = vpop.f32.mrf.mxu0
      %v1828 = vadd.f32 0.0, %v1827
      %1829 = vmatmul.f32.gmra.mxu0 %v1786
      %v1830 = vpop.f32.mrf.mxu0
      %v1831 = vadd.f32 0.0, %v1830
      %1832 = vdwg.mxu0
      %v1833 = vmul.f32 %v1810, 0.35355338
      %v1834 = vmul.f32 %v1813, 0.35355338
      %v1835 = vmul.f32 %v1816, 0.35355338
      %v1836 = vmul.f32 %v1819, 0.35355338
      %v1837 = vmul.f32 %v1822, 0.35355338
      %v1838 = vmul.f32 %v1825, 0.35355338
      %v1839 = vmul.f32 %v1828, 0.35355338
      %v1840 = vmul.f32 %v1831, 0.35355338
      %v1841 = vsel %vm1344, %v1833, -inf
      %1842 = vmax.xlane.f32.xlu0 %v1841
      %v1843 = vpop.xlane.xlu0 %1842
      %v1844 = vsel %vm1344, %v1834, -inf
      %1845 = vmax.xlane.f32.xlu0 %v1844
      %v1846 = vpop.xlane.xlu0 %1845
      %v1847 = vsel %vm1344, %v1835, -inf
      %1848 = vmax.xlane.f32.xlu0 %v1847
      %v1849 = vpop.xlane.xlu0 %1848
      %v1850 = vsel %vm1344, %v1836, -inf
      %1851 = vmax.xlane.f32.xlu0 %v1850
      %v1852 = vpop.xlane.xlu0 %1851
      %v1853 = vsel %vm1344, %v1837, -inf
      %1854 = vmax.xlane.f32.xlu0 %v1853
      %v1855 = vpop.xlane.xlu0 %1854
      %v1856 = vsel %vm1344, %v1838, -inf
      %1857 = vmax.xlane.f32.xlu0 %v1856
      %v1858 = vpop.xlane.xlu0 %1857
      %v1859 = vsel %vm1344, %v1839, -inf
      %1860 = vmax.xlane.f32.xlu0 %v1859
      %v1861 = vpop.xlane.xlu0 %1860
      %v1862 = vsel %vm1344, %v1840, -inf
      %1863 = vmax.xlane.f32.xlu0 %v1862
      %v1864 = vpop.xlane.xlu0 %1863
      %v1865 = vsub.f32 %v1833, %v1843
      %v1866 = vsub.f32 %v1834, %v1846
      %v1867 = vsub.f32 %v1835, %v1849
      %v1868 = vsub.f32 %v1836, %v1852
      %v1869 = vsub.f32 %v1837, %v1855
      %v1870 = vsub.f32 %v1838, %v1858
      %v1871 = vsub.f32 %v1839, %v1861
      %v1872 = vsub.f32 %v1840, %v1864
      %v1873 = vmul.f32 %v1865, 1.442695
      %v1874 = vpow.pop %v1873
      %v1875 = vmul.f32 %v1866, 1.442695
      %v1876 = vpow.pop %v1875
      %v1877 = vmul.f32 %v1867, 1.442695
      %v1878 = vpow.pop %v1877
      %v1879 = vmul.f32 %v1868, 1.442695
      %v1880 = vpow.pop %v1879
      %v1881 = vmul.f32 %v1869, 1.442695
      %v1882 = vpow.pop %v1881
      %v1883 = vmul.f32 %v1870, 1.442695
      %v1884 = vpow.pop %v1883
      %v1885 = vmul.f32 %v1871, 1.442695
      %v1886 = vpow.pop %v1885
      %v1887 = vmul.f32 %v1872, 1.442695
      %v1888 = vpow.pop %v1887
      %v1889 = vsel %vm1344, %v1874, 0.0
      %1890 = vadd.xlane.f32.xlu0 %v1889
      %v1891 = vpop.xlane.xlu0 %1890
      %v1892 = vsel %vm1344, %v1876, 0.0
      %1893 = vadd.xlane.f32.xlu0 %v1892
      %v1894 = vpop.xlane.xlu0 %1893
      %v1895 = vsel %vm1344, %v1878, 0.0
      %1896 = vadd.xlane.f32.xlu0 %v1895
      %v1897 = vpop.xlane.xlu0 %1896
      %v1898 = vsel %vm1344, %v1880, 0.0
      %1899 = vadd.xlane.f32.xlu0 %v1898
      %v1900 = vpop.xlane.xlu0 %1899
      %v1901 = vsel %vm1344, %v1882, 0.0
      %1902 = vadd.xlane.f32.xlu0 %v1901
      %v1903 = vpop.xlane.xlu0 %1902
      %v1904 = vsel %vm1344, %v1884, 0.0
      %1905 = vadd.xlane.f32.xlu0 %v1904
      %v1906 = vpop.xlane.xlu0 %1905
      %v1907 = vsel %vm1344, %v1886, 0.0
      %1908 = vadd.xlane.f32.xlu0 %v1907
      %v1909 = vpop.xlane.xlu0 %1908
      %v1910 = vsel %vm1344, %v1888, 0.0
      %1911 = vadd.xlane.f32.xlu0 %v1910
      %v1912 = vpop.xlane.xlu0 %1911
      %v1913 = vrcp.pop %v1891
      %v1914 = vrcp.pop %v1894
      %v1915 = vrcp.pop %v1897
      %v1916 = vrcp.pop %v1900
      %v1917 = vrcp.pop %v1903
      %v1918 = vrcp.pop %v1906
      %v1919 = vrcp.pop %v1909
      %v1920 = vrcp.pop %v1912
      %v1921 = vmul.f32 %v1874, %v1913
      %v1922 = vmul.f32 %v1876, %v1914
      %v1923 = vmul.f32 %v1878, %v1915
      %v1924 = vmul.f32 %v1880, %v1916
      %v1925 = vmul.f32 %v1882, %v1917
      %v1926 = vmul.f32 %v1884, %v1918
      %v1927 = vmul.f32 %v1886, %v1919
      %v1928 = vmul.f32 %v1888, %v1920
      %1929 = vrot.lane.b32.xlu0 %v1259, 80
      %v1930 = vpop.permute.xlu0 %1929
      %1931 = vrot.lane.b32.xlu0 %v1262, 80
      %v1932 = vpop.permute.xlu0 %1931
      %v1936 = vsel %vm1344, %v1921, 0
      %v1939 = vsel %vm1344, %v1922, 0
      %v1942 = vsel %vm1344, %v1923, 0
      %v1945 = vsel %vm1344, %v1924, 0
      %v1948 = vsel %vm1344, %v1925, 0
      %v1951 = vsel %vm1344, %v1926, 0
      %v1954 = vsel %vm1344, %v1927, 0
      %v1957 = vsel %vm1344, %v1928, 0
      %1959 = vmatpush.msra.mxu0 0.0
      %1960 = vmatpush.msra.mxu0 0.0
      %1961 = vmatpush.msra.mxu0 0.0
      %1962 = vmatpush.msra.mxu0 0.0
      %1963 = vmatpush.msra.mxu0 0.0
      %1964 = vmatpush.msra.mxu0 0.0
      %1965 = vmatpush.msra.mxu0 0.0
      %1966 = vmatpush.msra.mxu0 0.0
      %1967 = vmatpush.msra.mxu0 0.0
      %1968 = vmatpush.msra.mxu0 0.0
      %1969 = vmatpush.msra.mxu0 0.0
      %1970 = vmatpush.msra.mxu0 0.0
      %1971 = vmatpush.msra.mxu0 0.0
      %1972 = vmatpush.msra.mxu0 0.0
      %1973 = vmatpush.msra.mxu0 %v1932
      %1974 = vmatpush.msra.mxu0 %v1930
      %1975 = vmatmul.f32.gmra.mxu0 %v1936
      %v1976 = vpop.f32.mrf.mxu0
      %v1977 = vadd.f32 0.0, %v1976
      %1978 = vmatmul.f32.gmra.mxu0 %v1939
      %v1979 = vpop.f32.mrf.mxu0
      %v1980 = vadd.f32 0.0, %v1979
      %1981 = vmatmul.f32.gmra.mxu0 %v1942
      %v1982 = vpop.f32.mrf.mxu0
      %v1983 = vadd.f32 0.0, %v1982
      %1984 = vmatmul.f32.gmra.mxu0 %v1945
      %v1985 = vpop.f32.mrf.mxu0
      %v1986 = vadd.f32 0.0, %v1985
      %1987 = vmatmul.f32.gmra.mxu0 %v1948
      %v1988 = vpop.f32.mrf.mxu0
      %v1989 = vadd.f32 0.0, %v1988
      %1990 = vmatmul.f32.gmra.mxu0 %v1951
      %v1991 = vpop.f32.mrf.mxu0
      %v1992 = vadd.f32 0.0, %v1991
      %1993 = vmatmul.f32.gmra.mxu0 %v1954
      %v1994 = vpop.f32.mrf.mxu0
      %v1995 = vadd.f32 0.0, %v1994
      %1996 = vmatmul.f32.gmra.mxu0 %v1957
      %v1997 = vpop.f32.mrf.mxu0
      %v1998 = vadd.f32 0.0, %v1997
      %1999 = vdwg.mxu0
      %2000 = vrot.lane.b32.xlu0 %v807, 104
      %v2001 = vpop.permute.xlu0 %2000
      %2002 = vrot.lane.b32.xlu0 %v810, 104
      %v2003 = vpop.permute.xlu0 %2002
      %2004 = vrot.lane.b32.xlu0 %v813, 104
      %v2005 = vpop.permute.xlu0 %2004
      %2006 = vrot.lane.b32.xlu0 %v816, 104
      %v2007 = vpop.permute.xlu0 %2006
      %2008 = vrot.lane.b32.xlu0 %v819, 104
      %v2009 = vpop.permute.xlu0 %2008
      %2010 = vrot.lane.b32.xlu0 %v822, 104
      %v2011 = vpop.permute.xlu0 %2010
      %2012 = vrot.lane.b32.xlu0 %v825, 104
      %v2013 = vpop.permute.xlu0 %2012
      %2014 = vrot.lane.b32.xlu0 %v828, 104
      %v2015 = vpop.permute.xlu0 %2014
      %2016 = vrot.lane.b32.xlu0 %v1259, 104
      %v2017 = vpop.permute.xlu0 %2016
      %2018 = vrot.lane.b32.xlu0 %v1262, 104
      %v2019 = vpop.permute.xlu0 %2018
      %v2020 = vsel %vm1264, %v2001, 0
      %v2022 = vsel %vm1264, %v2003, 0
      %v2024 = vsel %vm1264, %v2005, 0
      %v2026 = vsel %vm1264, %v2007, 0
      %v2028 = vsel %vm1264, %v2009, 0
      %v2030 = vsel %vm1264, %v2011, 0
      %v2032 = vsel %vm1264, %v2013, 0
      %v2034 = vsel %vm1264, %v2015, 0
      %v2036 = vsel %vm1264, %v2017, 0
      %v2038 = vsel %vm1264, %v2019, 0
      %2040 = vmatpush.xpose.msra.mxu0 0.0
      %2041 = vmatpush.xpose.msra.mxu0 0.0
      %2042 = vmatpush.xpose.msra.mxu0 0.0
      %2043 = vmatpush.xpose.msra.mxu0 0.0
      %2044 = vmatpush.xpose.msra.mxu0 0.0
      %2045 = vmatpush.xpose.msra.mxu0 0.0
      %2046 = vmatpush.xpose.msra.mxu0 0.0
      %2047 = vmatpush.xpose.msra.mxu0 0.0
      %2048 = vmatpush.xpose.msra.mxu0 0.0
      %2049 = vmatpush.xpose.msra.mxu0 0.0
      %2050 = vmatpush.xpose.msra.mxu0 0.0
      %2051 = vmatpush.xpose.msra.mxu0 0.0
      %2052 = vmatpush.xpose.msra.mxu0 0.0
      %2053 = vmatpush.xpose.msra.mxu0 0.0
      %2054 = vmatpush.xpose.msra.mxu0 %v2038
      %2055 = vmatpush.xpose.msra.mxu0 %v2036
      %2056 = vmatmul.f32.gmra.mxu0 %v2020
      %v2057 = vpop.f32.mrf.mxu0
      %v2058 = vadd.f32 0.0, %v2057
      %2059 = vmatmul.f32.gmra.mxu0 %v2022
      %v2060 = vpop.f32.mrf.mxu0
      %v2061 = vadd.f32 0.0, %v2060
      %2062 = vmatmul.f32.gmra.mxu0 %v2024
      %v2063 = vpop.f32.mrf.mxu0
      %v2064 = vadd.f32 0.0, %v2063
      %2065 = vmatmul.f32.gmra.mxu0 %v2026
      %v2066 = vpop.f32.mrf.mxu0
      %v2067 = vadd.f32 0.0, %v2066
      %2068 = vmatmul.f32.gmra.mxu0 %v2028
      %v2069 = vpop.f32.mrf.mxu0
      %v2070 = vadd.f32 0.0, %v2069
      %2071 = vmatmul.f32.gmra.mxu0 %v2030
      %v2072 = vpop.f32.mrf.mxu0
      %v2073 = vadd.f32 0.0, %v2072
      %2074 = vmatmul.f32.gmra.mxu0 %v2032
      %v2075 = vpop.f32.mrf.mxu0
      %v2076 = vadd.f32 0.0, %v2075
      %2077 = vmatmul.f32.gmra.mxu0 %v2034
      %v2078 = vpop.f32.mrf.mxu0
      %v2079 = vadd.f32 0.0, %v2078
      %2080 = vdwg.mxu0
      %v2081 = vmul.f32 %v2058, 0.35355338
      %v2082 = vmul.f32 %v2061, 0.35355338
      %v2083 = vmul.f32 %v2064, 0.35355338
      %v2084 = vmul.f32 %v2067, 0.35355338
      %v2085 = vmul.f32 %v2070, 0.35355338
      %v2086 = vmul.f32 %v2073, 0.35355338
      %v2087 = vmul.f32 %v2076, 0.35355338
      %v2088 = vmul.f32 %v2079, 0.35355338
      %v2089 = vsel %vm1344, %v2081, -inf
      %2090 = vmax.xlane.f32.xlu0 %v2089
      %v2091 = vpop.xlane.xlu0 %2090
      %v2092 = vsel %vm1344, %v2082, -inf
      %2093 = vmax.xlane.f32.xlu0 %v2092
      %v2094 = vpop.xlane.xlu0 %2093
      %v2095 = vsel %vm1344, %v2083, -inf
      %2096 = vmax.xlane.f32.xlu0 %v2095
      %v2097 = vpop.xlane.xlu0 %2096
      %v2098 = vsel %vm1344, %v2084, -inf
      %2099 = vmax.xlane.f32.xlu0 %v2098
      %v2100 = vpop.xlane.xlu0 %2099
      %v2101 = vsel %vm1344, %v2085, -inf
      %2102 = vmax.xlane.f32.xlu0 %v2101
      %v2103 = vpop.xlane.xlu0 %2102
      %v2104 = vsel %vm1344, %v2086, -inf
      %2105 = vmax.xlane.f32.xlu0 %v2104
      %v2106 = vpop.xlane.xlu0 %2105
      %v2107 = vsel %vm1344, %v2087, -inf
      %2108 = vmax.xlane.f32.xlu0 %v2107
      %v2109 = vpop.xlane.xlu0 %2108
      %v2110 = vsel %vm1344, %v2088, -inf
      %2111 = vmax.xlane.f32.xlu0 %v2110
      %v2112 = vpop.xlane.xlu0 %2111
      %v2113 = vsub.f32 %v2081, %v2091
      %v2114 = vsub.f32 %v2082, %v2094
      %v2115 = vsub.f32 %v2083, %v2097
      %v2116 = vsub.f32 %v2084, %v2100
      %v2117 = vsub.f32 %v2085, %v2103
      %v2118 = vsub.f32 %v2086, %v2106
      %v2119 = vsub.f32 %v2087, %v2109
      %v2120 = vsub.f32 %v2088, %v2112
      %v2121 = vmul.f32 %v2113, 1.442695
      %v2122 = vpow.pop %v2121
      %v2123 = vmul.f32 %v2114, 1.442695
      %v2124 = vpow.pop %v2123
      %v2125 = vmul.f32 %v2115, 1.442695
      %v2126 = vpow.pop %v2125
      %v2127 = vmul.f32 %v2116, 1.442695
      %v2128 = vpow.pop %v2127
      %v2129 = vmul.f32 %v2117, 1.442695
      %v2130 = vpow.pop %v2129
      %v2131 = vmul.f32 %v2118, 1.442695
      %v2132 = vpow.pop %v2131
      %v2133 = vmul.f32 %v2119, 1.442695
      %v2134 = vpow.pop %v2133
      %v2135 = vmul.f32 %v2120, 1.442695
      %v2136 = vpow.pop %v2135
      %v2137 = vsel %vm1344, %v2122, 0.0
      %2138 = vadd.xlane.f32.xlu0 %v2137
      %v2139 = vpop.xlane.xlu0 %2138
      %v2140 = vsel %vm1344, %v2124, 0.0
      %2141 = vadd.xlane.f32.xlu0 %v2140
      %v2142 = vpop.xlane.xlu0 %2141
      %v2143 = vsel %vm1344, %v2126, 0.0
      %2144 = vadd.xlane.f32.xlu0 %v2143
      %v2145 = vpop.xlane.xlu0 %2144
      %v2146 = vsel %vm1344, %v2128, 0.0
      %2147 = vadd.xlane.f32.xlu0 %v2146
      %v2148 = vpop.xlane.xlu0 %2147
      %v2149 = vsel %vm1344, %v2130, 0.0
      %2150 = vadd.xlane.f32.xlu0 %v2149
      %v2151 = vpop.xlane.xlu0 %2150
      %v2152 = vsel %vm1344, %v2132, 0.0
      %2153 = vadd.xlane.f32.xlu0 %v2152
      %v2154 = vpop.xlane.xlu0 %2153
      %v2155 = vsel %vm1344, %v2134, 0.0
      %2156 = vadd.xlane.f32.xlu0 %v2155
      %v2157 = vpop.xlane.xlu0 %2156
      %v2158 = vsel %vm1344, %v2136, 0.0
      %2159 = vadd.xlane.f32.xlu0 %v2158
      %v2160 = vpop.xlane.xlu0 %2159
      %v2161 = vrcp.pop %v2139
      %v2162 = vrcp.pop %v2142
      %v2163 = vrcp.pop %v2145
      %v2164 = vrcp.pop %v2148
      %v2165 = vrcp.pop %v2151
      %v2166 = vrcp.pop %v2154
      %v2167 = vrcp.pop %v2157
      %v2168 = vrcp.pop %v2160
      %v2169 = vmul.f32 %v2122, %v2161
      %v2170 = vmul.f32 %v2124, %v2162
      %v2171 = vmul.f32 %v2126, %v2163
      %v2172 = vmul.f32 %v2128, %v2164
      %v2173 = vmul.f32 %v2130, %v2165
      %v2174 = vmul.f32 %v2132, %v2166
      %v2175 = vmul.f32 %v2134, %v2167
      %v2176 = vmul.f32 %v2136, %v2168
      %2177 = vrot.lane.b32.xlu0 %v1259, 72
      %v2178 = vpop.permute.xlu0 %2177
      %2179 = vrot.lane.b32.xlu0 %v1262, 72
      %v2180 = vpop.permute.xlu0 %2179
      %v2184 = vsel %vm1344, %v2169, 0
      %v2187 = vsel %vm1344, %v2170, 0
      %v2190 = vsel %vm1344, %v2171, 0
      %v2193 = vsel %vm1344, %v2172, 0
      %v2196 = vsel %vm1344, %v2173, 0
      %v2199 = vsel %vm1344, %v2174, 0
      %v2202 = vsel %vm1344, %v2175, 0
      %v2205 = vsel %vm1344, %v2176, 0
      %2207 = vmatpush.msra.mxu0 0.0
      %2208 = vmatpush.msra.mxu0 0.0
      %2209 = vmatpush.msra.mxu0 0.0
      %2210 = vmatpush.msra.mxu0 0.0
      %2211 = vmatpush.msra.mxu0 0.0
      %2212 = vmatpush.msra.mxu0 0.0
      %2213 = vmatpush.msra.mxu0 0.0
      %2214 = vmatpush.msra.mxu0 0.0
      %2215 = vmatpush.msra.mxu0 0.0
      %2216 = vmatpush.msra.mxu0 0.0
      %2217 = vmatpush.msra.mxu0 0.0
      %2218 = vmatpush.msra.mxu0 0.0
      %2219 = vmatpush.msra.mxu0 0.0
      %2220 = vmatpush.msra.mxu0 0.0
      %2221 = vmatpush.msra.mxu0 %v2180
      %2222 = vmatpush.msra.mxu0 %v2178
      %2223 = vmatmul.f32.gmra.mxu0 %v2184
      %v2224 = vpop.f32.mrf.mxu0
      %v2225 = vadd.f32 0.0, %v2224
      %2226 = vmatmul.f32.gmra.mxu0 %v2187
      %v2227 = vpop.f32.mrf.mxu0
      %v2228 = vadd.f32 0.0, %v2227
      %2229 = vmatmul.f32.gmra.mxu0 %v2190
      %v2230 = vpop.f32.mrf.mxu0
      %v2231 = vadd.f32 0.0, %v2230
      %2232 = vmatmul.f32.gmra.mxu0 %v2193
      %v2233 = vpop.f32.mrf.mxu0
      %v2234 = vadd.f32 0.0, %v2233
      %2235 = vmatmul.f32.gmra.mxu0 %v2196
      %v2236 = vpop.f32.mrf.mxu0
      %v2237 = vadd.f32 0.0, %v2236
      %2238 = vmatmul.f32.gmra.mxu0 %v2199
      %v2239 = vpop.f32.mrf.mxu0
      %v2240 = vadd.f32 0.0, %v2239
      %2241 = vmatmul.f32.gmra.mxu0 %v2202
      %v2242 = vpop.f32.mrf.mxu0
      %v2243 = vadd.f32 0.0, %v2242
      %2244 = vmatmul.f32.gmra.mxu0 %v2205
      %v2245 = vpop.f32.mrf.mxu0
      %v2246 = vadd.f32 0.0, %v2245
      %2247 = vdwg.mxu0
      %2256 = vrot.lane.b32.xlu0 %v1729, 8
      %v2257 = vpop.permute.xlu0 %2256
      %2258 = vrot.lane.b32.xlu0 %v1732, 8
      %v2259 = vpop.permute.xlu0 %2258
      %2260 = vrot.lane.b32.xlu0 %v1735, 8
      %v2261 = vpop.permute.xlu0 %2260
      %2262 = vrot.lane.b32.xlu0 %v1738, 8
      %v2263 = vpop.permute.xlu0 %2262
      %2264 = vrot.lane.b32.xlu0 %v1741, 8
      %v2265 = vpop.permute.xlu0 %2264
      %2266 = vrot.lane.b32.xlu0 %v1744, 8
      %v2267 = vpop.permute.xlu0 %2266
      %2268 = vrot.lane.b32.xlu0 %v1747, 8
      %v2269 = vpop.permute.xlu0 %2268
      %2270 = vrot.lane.b32.xlu0 %v1750, 8
      %v2271 = vpop.permute.xlu0 %2270
      %2288 = vrot.lane.b32.xlu0 %v1977, 16
      %v2289 = vpop.permute.xlu0 %2288
      %2290 = vrot.lane.b32.xlu0 %v1980, 16
      %v2291 = vpop.permute.xlu0 %2290
      %2292 = vrot.lane.b32.xlu0 %v1983, 16
      %v2293 = vpop.permute.xlu0 %2292
      %2294 = vrot.lane.b32.xlu0 %v1986, 16
      %v2295 = vpop.permute.xlu0 %2294
      %2296 = vrot.lane.b32.xlu0 %v1989, 16
      %v2297 = vpop.permute.xlu0 %2296
      %2298 = vrot.lane.b32.xlu0 %v1992, 16
      %v2299 = vpop.permute.xlu0 %2298
      %2300 = vrot.lane.b32.xlu0 %v1995, 16
      %v2301 = vpop.permute.xlu0 %2300
      %2302 = vrot.lane.b32.xlu0 %v1998, 16
      %v2303 = vpop.permute.xlu0 %2302
      %2320 = vrot.lane.b32.xlu0 %v2225, 24
      %v2321 = vpop.permute.xlu0 %2320
      %2322 = vrot.lane.b32.xlu0 %v2228, 24
      %v2323 = vpop.permute.xlu0 %2322
      %2324 = vrot.lane.b32.xlu0 %v2231, 24
      %v2325 = vpop.permute.xlu0 %2324
      %2326 = vrot.lane.b32.xlu0 %v2234, 24
      %v2327 = vpop.permute.xlu0 %2326
      %2328 = vrot.lane.b32.xlu0 %v2237, 24
      %v2329 = vpop.permute.xlu0 %2328
      %2330 = vrot.lane.b32.xlu0 %v2240, 24
      %v2331 = vpop.permute.xlu0 %2330
      %2332 = vrot.lane.b32.xlu0 %v2243, 24
      %v2333 = vpop.permute.xlu0 %2332
      %2334 = vrot.lane.b32.xlu0 %v2246, 24
      %v2335 = vpop.permute.xlu0 %2334
      %v2344 = vsel %vm1264, %v1481, %v2257
      %v2345 = vsel %vm1264, %v1484, %v2259
      %v2346 = vsel %vm1264, %v1487, %v2261
      %v2347 = vsel %vm1264, %v1490, %v2263
      %v2348 = vsel %vm1264, %v1493, %v2265
      %v2349 = vsel %vm1264, %v1496, %v2267
      %v2350 = vsel %vm1264, %v1499, %v2269
      %v2351 = vsel %vm1264, %v1502, %v2271
      %v2352 = vsel %vm1344, %v2344, %v2289
      %v2353 = vsel %vm1344, %v2345, %v2291
      %v2354 = vsel %vm1344, %v2346, %v2293
      %v2355 = vsel %vm1344, %v2347, %v2295
      %v2356 = vsel %vm1344, %v2348, %v2297
      %v2357 = vsel %vm1344, %v2349, %v2299
      %v2358 = vsel %vm1344, %v2350, %v2301
      %v2359 = vsel %vm1344, %v2351, %v2303
      %vm2360 = vcmask 195584
      %v2361 = vsel %vm2360, %v2352, %v2321
      %v2362 = vsel %vm2360, %v2353, %v2323
      %v2363 = vsel %vm2360, %v2354, %v2325
      %v2364 = vsel %vm2360, %v2355, %v2327
      %v2365 = vsel %vm2360, %v2356, %v2329
      %v2366 = vsel %vm2360, %v2357, %v2331
      %v2367 = vsel %vm2360, %v2358, %v2333
      %v2368 = vsel %vm2360, %v2359, %v2335
      %v2369 = vld [vmem:[%s10] sm:$0xff]
      %v2370 = vld [vmem:[%s10 + $0x8] sm:$0xff]
      %v2371 = vld [vmem:[%s10 + $0x10] sm:$0xff]
      %v2372 = vld [vmem:[%s10 + $0x18] sm:$0xff]
      %v2374 = vsel %vm555, %v2361, 0
      %v2377 = vsel %vm555, %v2362, 0
      %v2380 = vsel %vm555, %v2363, 0
      %v2383 = vsel %vm555, %v2364, 0
      %v2386 = vsel %vm555, %v2365, 0
      %v2389 = vsel %vm555, %v2366, 0
      %v2392 = vsel %vm555, %v2367, 0
      %v2395 = vsel %vm555, %v2368, 0
      %2397 = vmatpush.msra.mxu0 0.0
      %2398 = vmatpush.msra.mxu0 0.0
      %2399 = vmatpush.msra.mxu0 0.0
      %2400 = vmatpush.msra.mxu0 0.0
      %2401 = vmatpush.msra.mxu0 0.0
      %2402 = vmatpush.msra.mxu0 0.0
      %2403 = vmatpush.msra.mxu0 0.0
      %2404 = vmatpush.msra.mxu0 0.0
      %2405 = vmatpush.msra.mxu0 0.0
      %2406 = vmatpush.msra.mxu0 0.0
      %2407 = vmatpush.msra.mxu0 0.0
      %2408 = vmatpush.msra.mxu0 0.0
      %2409 = vmatpush.msra.mxu0 %v2372
      %2410 = vmatpush.msra.mxu0 %v2371
      %2411 = vmatpush.msra.mxu0 %v2370
      %2412 = vmatpush.msra.mxu0 %v2369
      %2413 = vmatmul.f32.gmra.mxu0 %v2374
      %v2414 = vpop.f32.mrf.mxu0
      %v2415 = vadd.f32 0.0, %v2414
      %2416 = vmatmul.f32.gmra.mxu0 %v2377
      %v2417 = vpop.f32.mrf.mxu0
      %v2418 = vadd.f32 0.0, %v2417
      %2419 = vmatmul.f32.gmra.mxu0 %v2380
      %v2420 = vpop.f32.mrf.mxu0
      %v2421 = vadd.f32 0.0, %v2420
      %2422 = vmatmul.f32.gmra.mxu0 %v2383
      %v2423 = vpop.f32.mrf.mxu0
      %v2424 = vadd.f32 0.0, %v2423
      %2425 = vmatmul.f32.gmra.mxu0 %v2386
      %v2426 = vpop.f32.mrf.mxu0
      %v2427 = vadd.f32 0.0, %v2426
      %2428 = vmatmul.f32.gmra.mxu0 %v2389
      %v2429 = vpop.f32.mrf.mxu0
      %v2430 = vadd.f32 0.0, %v2429
      %2431 = vmatmul.f32.gmra.mxu0 %v2392
      %v2432 = vpop.f32.mrf.mxu0
      %v2433 = vadd.f32 0.0, %v2432
      %2434 = vmatmul.f32.gmra.mxu0 %v2395
      %v2435 = vpop.f32.mrf.mxu0
      %v2436 = vadd.f32 0.0, %v2435
      %2437 = vdwg.mxu0
      %v2438 = vadd.f32 %v547, %v2415
      %v2439 = vadd.f32 %v548, %v2418
      %v2440 = vadd.f32 %v549, %v2421
      %v2441 = vadd.f32 %v550, %v2424
      %v2442 = vadd.f32 %v551, %v2427
      %v2443 = vadd.f32 %v552, %v2430
      %v2444 = vadd.f32 %v553, %v2433
      %v2445 = vadd.f32 %v554, %v2436
      %v2446 = vld [vmem:[%s11] sm:$0x1]
      %v2448 = vperm.slane %v2446, 0
      %v2450 = vadd.f32 %v2438, %v2448
      %v2451 = vadd.f32 %v2439, %v2448
      %v2452 = vadd.f32 %v2440, %v2448
      %v2453 = vadd.f32 %v2441, %v2448
      %v2454 = vadd.f32 %v2442, %v2448
      %v2455 = vadd.f32 %v2443, %v2448
      %v2456 = vadd.f32 %v2444, %v2448
      %v2457 = vadd.f32 %v2445, %v2448
      %v2458 = vsel %vm555, %v2450, 0.0
      %2459 = vadd.xlane.f32.xlu0 %v2458
      %v2460 = vpop.xlane.xlu0 %2459
      %v2461 = vsel %vm555, %v2451, 0.0
      %2462 = vadd.xlane.f32.xlu0 %v2461
      %v2463 = vpop.xlane.xlu0 %2462
      %v2464 = vsel %vm555, %v2452, 0.0
      %2465 = vadd.xlane.f32.xlu0 %v2464
      %v2466 = vpop.xlane.xlu0 %2465
      %v2467 = vsel %vm555, %v2453, 0.0
      %2468 = vadd.xlane.f32.xlu0 %v2467
      %v2469 = vpop.xlane.xlu0 %2468
      %v2470 = vsel %vm555, %v2454, 0.0
      %2471 = vadd.xlane.f32.xlu0 %v2470
      %v2472 = vpop.xlane.xlu0 %2471
      %v2473 = vsel %vm555, %v2455, 0.0
      %2474 = vadd.xlane.f32.xlu0 %v2473
      %v2475 = vpop.xlane.xlu0 %2474
      %v2476 = vsel %vm555, %v2456, 0.0
      %2477 = vadd.xlane.f32.xlu0 %v2476
      %v2478 = vpop.xlane.xlu0 %2477
      %v2479 = vsel %vm555, %v2457, 0.0
      %2480 = vadd.xlane.f32.xlu0 %v2479
      %v2481 = vpop.xlane.xlu0 %2480
      %v2482 = vmul.f32 %v2460, %v586
      %v2483 = vmul.f32 %v2463, %v586
      %v2484 = vmul.f32 %v2466, %v586
      %v2485 = vmul.f32 %v2469, %v586
      %v2486 = vmul.f32 %v2472, %v586
      %v2487 = vmul.f32 %v2475, %v586
      %v2488 = vmul.f32 %v2478, %v586
      %v2489 = vmul.f32 %v2481, %v586
      %v2490 = vsub.f32 %v2450, %v2482
      %v2491 = vsub.f32 %v2451, %v2483
      %v2492 = vsub.f32 %v2452, %v2484
      %v2493 = vsub.f32 %v2453, %v2485
      %v2494 = vsub.f32 %v2454, %v2486
      %v2495 = vsub.f32 %v2455, %v2487
      %v2496 = vsub.f32 %v2456, %v2488
      %v2497 = vsub.f32 %v2457, %v2489
      %v2498 = vmul.f32 %v2490, %v2490
      %v2499 = vmul.f32 %v2491, %v2491
      %v2500 = vmul.f32 %v2492, %v2492
      %v2501 = vmul.f32 %v2493, %v2493
      %v2502 = vmul.f32 %v2494, %v2494
      %v2503 = vmul.f32 %v2495, %v2495
      %v2504 = vmul.f32 %v2496, %v2496
      %v2505 = vmul.f32 %v2497, %v2497
      %v2506 = vsel %vm555, %v2498, 0.0
      %2507 = vadd.xlane.f32.xlu0 %v2506
      %v2508 = vpop.xlane.xlu0 %2507
      %v2509 = vsel %vm555, %v2499, 0.0
      %2510 = vadd.xlane.f32.xlu0 %v2509
      %v2511 = vpop.xlane.xlu0 %2510
      %v2512 = vsel %vm555, %v2500, 0.0
      %2513 = vadd.xlane.f32.xlu0 %v2512
      %v2514 = vpop.xlane.xlu0 %2513
      %v2515 = vsel %vm555, %v2501, 0.0
      %2516 = vadd.xlane.f32.xlu0 %v2515
      %v2517 = vpop.xlane.xlu0 %2516
      %v2518 = vsel %vm555, %v2502, 0.0
      %2519 = vadd.xlane.f32.xlu0 %v2518
      %v2520 = vpop.xlane.xlu0 %2519
      %v2521 = vsel %vm555, %v2503, 0.0
      %2522 = vadd.xlane.f32.xlu0 %v2521
      %v2523 = vpop.xlane.xlu0 %2522
      %v2524 = vsel %vm555, %v2504, 0.0
      %2525 = vadd.xlane.f32.xlu0 %v2524
      %v2526 = vpop.xlane.xlu0 %2525
      %v2527 = vsel %vm555, %v2505, 0.0
      %2528 = vadd.xlane.f32.xlu0 %v2527
      %v2529 = vpop.xlane.xlu0 %2528
      %v2530 = vmul.f32 %v2508, %v586
      %v2531 = vmul.f32 %v2511, %v586
      %v2532 = vmul.f32 %v2514, %v586
      %v2533 = vmul.f32 %v2517, %v586
      %v2534 = vmul.f32 %v2520, %v586
      %v2535 = vmul.f32 %v2523, %v586
      %v2536 = vmul.f32 %v2526, %v586
      %v2537 = vmul.f32 %v2529, %v586
      %v2538 = vadd.f32 %v2530, 1e-05
      %v2539 = vadd.f32 %v2531, 1e-05
      %v2540 = vadd.f32 %v2532, 1e-05
      %v2541 = vadd.f32 %v2533, 1e-05
      %v2542 = vadd.f32 %v2534, 1e-05
      %v2543 = vadd.f32 %v2535, 1e-05
      %v2544 = vadd.f32 %v2536, 1e-05
      %v2545 = vadd.f32 %v2537, 1e-05
      %v2546 = vrsqrt.pop %v2538
      %v2547 = vmul.f32 %v2546, %v2538
      %v2548 = vmul.f32 %v2547, %v2546
      %v2549 = vmul.f32 0.5, %v2548
      %v2550 = vsub.f32 1.5, %v2549
      %v2551 = vmul.f32 %v2546, %v2550
      %vm2552 = vweird.f32 %v2538
      %vm2553 = vweird.f32 %v2546
      %vm2554 = vmor %vm2552, %vm2553
      %v2555 = vsel %vm2554, %v2546, %v2551
      %v2556 = vrsqrt.pop %v2539
      %v2557 = vmul.f32 %v2556, %v2539
      %v2558 = vmul.f32 %v2557, %v2556
      %v2559 = vmul.f32 0.5, %v2558
      %v2560 = vsub.f32 1.5, %v2559
      %v2561 = vmul.f32 %v2556, %v2560
      %vm2562 = vweird.f32 %v2539
      %vm2563 = vweird.f32 %v2556
      %vm2564 = vmor %vm2562, %vm2563
      %v2565 = vsel %vm2564, %v2556, %v2561
      %v2566 = vrsqrt.pop %v2540
      %v2567 = vmul.f32 %v2566, %v2540
      %v2568 = vmul.f32 %v2567, %v2566
      %v2569 = vmul.f32 0.5, %v2568
      %v2570 = vsub.f32 1.5, %v2569
      %v2571 = vmul.f32 %v2566, %v2570
      %vm2572 = vweird.f32 %v2540
      %vm2573 = vweird.f32 %v2566
      %vm2574 = vmor %vm2572, %vm2573
      %v2575 = vsel %vm2574, %v2566, %v2571
      %v2576 = vrsqrt.pop %v2541
      %v2577 = vmul.f32 %v2576, %v2541
      %v2578 = vmul.f32 %v2577, %v2576
      %v2579 = vmul.f32 0.5, %v2578
      %v2580 = vsub.f32 1.5, %v2579
      %v2581 = vmul.f32 %v2576, %v2580
      %vm2582 = vweird.f32 %v2541
      %vm2583 = vweird.f32 %v2576
      %vm2584 = vmor %vm2582, %vm2583
      %v2585 = vsel %vm2584, %v2576, %v2581
      %v2586 = vrsqrt.pop %v2542
      %v2587 = vmul.f32 %v2586, %v2542
      %v2588 = vmul.f32 %v2587, %v2586
      %v2589 = vmul.f32 0.5, %v2588
      %v2590 = vsub.f32 1.5, %v2589
      %v2591 = vmul.f32 %v2586, %v2590
      %vm2592 = vweird.f32 %v2542
      %vm2593 = vweird.f32 %v2586
      %vm2594 = vmor %vm2592, %vm2593
      %v2595 = vsel %vm2594, %v2586, %v2591
      %v2596 = vrsqrt.pop %v2543
      %v2597 = vmul.f32 %v2596, %v2543
      %v2598 = vmul.f32 %v2597, %v2596
      %v2599 = vmul.f32 0.5, %v2598
      %v2600 = vsub.f32 1.5, %v2599
      %v2601 = vmul.f32 %v2596, %v2600
      %vm2602 = vweird.f32 %v2543
      %vm2603 = vweird.f32 %v2596
      %vm2604 = vmor %vm2602, %vm2603
      %v2605 = vsel %vm2604, %v2596, %v2601
      %v2606 = vrsqrt.pop %v2544
      %v2607 = vmul.f32 %v2606, %v2544
      %v2608 = vmul.f32 %v2607, %v2606
      %v2609 = vmul.f32 0.5, %v2608
      %v2610 = vsub.f32 1.5, %v2609
      %v2611 = vmul.f32 %v2606, %v2610
      %vm2612 = vweird.f32 %v2544
      %vm2613 = vweird.f32 %v2606
      %vm2614 = vmor %vm2612, %vm2613
      %v2615 = vsel %vm2614, %v2606, %v2611
      %v2616 = vrsqrt.pop %v2545
      %v2617 = vmul.f32 %v2616, %v2545
      %v2618 = vmul.f32 %v2617, %v2616
      %v2619 = vmul.f32 0.5, %v2618
      %v2620 = vsub.f32 1.5, %v2619
      %v2621 = vmul.f32 %v2616, %v2620
      %vm2622 = vweird.f32 %v2545
      %vm2623 = vweird.f32 %v2616
      %vm2624 = vmor %vm2622, %vm2623
      %v2625 = vsel %vm2624, %v2616, %v2621
      %v2626 = vmul.f32 %v2490, %v2555
      %v2627 = vmul.f32 %v2491, %v2565
      %v2628 = vmul.f32 %v2492, %v2575
      %v2629 = vmul.f32 %v2493, %v2585
      %v2630 = vmul.f32 %v2494, %v2595
      %v2631 = vmul.f32 %v2495, %v2605
      %v2632 = vmul.f32 %v2496, %v2615
      %v2633 = vmul.f32 %v2497, %v2625
      %v2634 = vmul.f32 %v2626, %v740
      %v2635 = vmul.f32 %v2627, %v740
      %v2636 = vmul.f32 %v2628, %v740
      %v2637 = vmul.f32 %v2629, %v740
      %v2638 = vmul.f32 %v2630, %v740
      %v2639 = vmul.f32 %v2631, %v740
      %v2640 = vmul.f32 %v2632, %v740
      %v2641 = vmul.f32 %v2633, %v740
      %v2642 = vadd.f32 %v2634, %v751
      %v2643 = vadd.f32 %v2635, %v751
      %v2644 = vadd.f32 %v2636, %v751
      %v2645 = vadd.f32 %v2637, %v751
      %v2646 = vadd.f32 %v2638, %v751
      %v2647 = vadd.f32 %v2639, %v751
      %v2648 = vadd.f32 %v2640, %v751
      %v2649 = vadd.f32 %v2641, %v751
      %v2650 = vld [vmem:[%s12] sm:$0xff]
      %v2651 = vld [vmem:[%s12 + $0x8] sm:$0xff]
      %v2652 = vld [vmem:[%s12 + $0x10] sm:$0xff]
      %v2653 = vld [vmem:[%s12 + $0x18] sm:$0xff]
      %v2654 = vld [vmem:[%s13] sm:$0x1]
      %v2656 = vperm.slane %v2654, 0
      %v2659 = vsel %vm555, %v2642, 0
      %v2662 = vsel %vm555, %v2643, 0
      %v2665 = vsel %vm555, %v2644, 0
      %v2668 = vsel %vm555, %v2645, 0
      %v2671 = vsel %vm555, %v2646, 0
      %v2674 = vsel %vm555, %v2647, 0
      %v2677 = vsel %vm555, %v2648, 0
      %v2680 = vsel %vm555, %v2649, 0
      %2682 = vmatpush.msra.mxu0 0.0
      %2683 = vmatpush.msra.mxu0 0.0
      %2684 = vmatpush.msra.mxu0 0.0
      %2685 = vmatpush.msra.mxu0 0.0
      %2686 = vmatpush.msra.mxu0 0.0
      %2687 = vmatpush.msra.mxu0 0.0
      %2688 = vmatpush.msra.mxu0 0.0
      %2689 = vmatpush.msra.mxu0 0.0
      %2690 = vmatpush.msra.mxu0 0.0
      %2691 = vmatpush.msra.mxu0 0.0
      %2692 = vmatpush.msra.mxu0 0.0
      %2693 = vmatpush.msra.mxu0 0.0
      %2694 = vmatpush.msra.mxu0 %v2653
      %2695 = vmatpush.msra.mxu0 %v2652
      %2696 = vmatpush.msra.mxu0 %v2651
      %2697 = vmatpush.msra.mxu0 %v2650
      %2698 = vmatmul.f32.gmra.mxu0 %v2659
      %v2699 = vpop.f32.mrf.mxu0
      %v2700 = vadd.f32 %v2656, %v2699
      %2701 = vmatmul.f32.gmra.mxu0 %v2662
      %v2702 = vpop.f32.mrf.mxu0
      %v2703 = vadd.f32 %v2656, %v2702
      %2704 = vmatmul.f32.gmra.mxu0 %v2665
      %v2705 = vpop.f32.mrf.mxu0
      %v2706 = vadd.f32 %v2656, %v2705
      %2707 = vmatmul.f32.gmra.mxu0 %v2668
      %v2708 = vpop.f32.mrf.mxu0
      %v2709 = vadd.f32 %v2656, %v2708
      %2710 = vmatmul.f32.gmra.mxu0 %v2671
      %v2711 = vpop.f32.mrf.mxu0
      %v2712 = vadd.f32 %v2656, %v2711
      %2713 = vmatmul.f32.gmra.mxu0 %v2674
      %v2714 = vpop.f32.mrf.mxu0
      %v2715 = vadd.f32 %v2656, %v2714
      %2716 = vmatmul.f32.gmra.mxu0 %v2677
      %v2717 = vpop.f32.mrf.mxu0
      %v2718 = vadd.f32 %v2656, %v2717
      %2719 = vmatmul.f32.gmra.mxu0 %v2680
      %v2720 = vpop.f32.mrf.mxu0
      %v2721 = vadd.f32 %v2656, %v2720
      %2722 = vdwg.mxu0
      %v2723 = vmul.f32 %v2700, 0.5
      %v2724 = vmul.f32 %v2703, 0.5
      %v2725 = vmul.f32 %v2706, 0.5
      %v2726 = vmul.f32 %v2709, 0.5
      %v2727 = vmul.f32 %v2712, 0.5
      %v2728 = vmul.f32 %v2715, 0.5
      %v2729 = vmul.f32 %v2718, 0.5
      %v2730 = vmul.f32 %v2721, 0.5
      %v2731 = vmul.f32 %v2700, %v2700
      %v2732 = vmul.f32 %v2703, %v2703
      %v2733 = vmul.f32 %v2706, %v2706
      %v2734 = vmul.f32 %v2709, %v2709
      %v2735 = vmul.f32 %v2712, %v2712
      %v2736 = vmul.f32 %v2715, %v2715
      %v2737 = vmul.f32 %v2718, %v2718
      %v2738 = vmul.f32 %v2721, %v2721
      %v2739 = vmul.f32 %v2731, %v2700
      %v2740 = vmul.f32 %v2732, %v2703
      %v2741 = vmul.f32 %v2733, %v2706
      %v2742 = vmul.f32 %v2734, %v2709
      %v2743 = vmul.f32 %v2735, %v2712
      %v2744 = vmul.f32 %v2736, %v2715
      %v2745 = vmul.f32 %v2737, %v2718
      %v2746 = vmul.f32 %v2738, %v2721
      %v2747 = vmul.f32 %v2739, 0.044715
      %v2748 = vmul.f32 %v2740, 0.044715
      %v2749 = vmul.f32 %v2741, 0.044715
      %v2750 = vmul.f32 %v2742, 0.044715
      %v2751 = vmul.f32 %v2743, 0.044715
      %v2752 = vmul.f32 %v2744, 0.044715
      %v2753 = vmul.f32 %v2745, 0.044715
      %v2754 = vmul.f32 %v2746, 0.044715
      %v2755 = vadd.f32 %v2700, %v2747
      %v2756 = vadd.f32 %v2703, %v2748
      %v2757 = vadd.f32 %v2706, %v2749
      %v2758 = vadd.f32 %v2709, %v2750
      %v2759 = vadd.f32 %v2712, %v2751
      %v2760 = vadd.f32 %v2715, %v2752
      %v2761 = vadd.f32 %v2718, %v2753
      %v2762 = vadd.f32 %v2721, %v2754
      %v2763 = vmul.f32 %v2755, 0.7978846
      %v2764 = vmul.f32 %v2756, 0.7978846
      %v2765 = vmul.f32 %v2757, 0.7978846
      %v2766 = vmul.f32 %v2758, 0.7978846
      %v2767 = vmul.f32 %v2759, 0.7978846
      %v2768 = vmul.f32 %v2760, 0.7978846
      %v2769 = vmul.f32 %v2761, 0.7978846
      %v2770 = vmul.f32 %v2762, 0.7978846
      %v2771 = vtanh.pop %v2763
      %v2772 = vtanh.pop %v2764
      %v2773 = vtanh.pop %v2765
      %v2774 = vtanh.pop %v2766
      %v2775 = vtanh.pop %v2767
      %v2776 = vtanh.pop %v2768
      %v2777 = vtanh.pop %v2769
      %v2778 = vtanh.pop %v2770
      %v2779 = vadd.f32 %v2771, 1.0
      %v2780 = vadd.f32 %v2772, 1.0
      %v2781 = vadd.f32 %v2773, 1.0
      %v2782 = vadd.f32 %v2774, 1.0
      %v2783 = vadd.f32 %v2775, 1.0
      %v2784 = vadd.f32 %v2776, 1.0
      %v2785 = vadd.f32 %v2777, 1.0
      %v2786 = vadd.f32 %v2778, 1.0
      %v2787 = vmul.f32 %v2723, %v2779
      %v2788 = vmul.f32 %v2724, %v2780
      %v2789 = vmul.f32 %v2725, %v2781
      %v2790 = vmul.f32 %v2726, %v2782
      %v2791 = vmul.f32 %v2727, %v2783
      %v2792 = vmul.f32 %v2728, %v2784
      %v2793 = vmul.f32 %v2729, %v2785
      %v2794 = vmul.f32 %v2730, %v2786
      %v2795 = vld [vmem:[%s14] sm:$0xff]
      %v2796 = vld [vmem:[%s14 + $0x8] sm:$0xff]
      %v2797 = vld [vmem:[%s14 + $0x10] sm:$0xff]
      %v2798 = vld [vmem:[%s14 + $0x18] sm:$0xff]
      %v2799 = vld [vmem:[%s14 + $0x20] sm:$0xff]
      %v2800 = vld [vmem:[%s14 + $0x28] sm:$0xff]
      %v2801 = vld [vmem:[%s14 + $0x30] sm:$0xff]
      %v2802 = vld [vmem:[%s14 + $0x38] sm:$0xff]
      %v2803 = vld [vmem:[%s15] sm:$0x1]
      %v2805 = vperm.slane %v2803, 0
      %vm2807 = vcmask 523264
      %v2809 = vsel %vm2807, %v2787, 0
      %v2812 = vsel %vm2807, %v2788, 0
      %v2815 = vsel %vm2807, %v2789, 0
      %v2818 = vsel %vm2807, %v2790, 0
      %v2821 = vsel %vm2807, %v2791, 0
      %v2824 = vsel %vm2807, %v2792, 0
      %v2827 = vsel %vm2807, %v2793, 0
      %v2830 = vsel %vm2807, %v2794, 0
      %2832 = vmatpush.msra.mxu0 0.0
      %2833 = vmatpush.msra.mxu0 0.0
      %2834 = vmatpush.msra.mxu0 0.0
      %2835 = vmatpush.msra.mxu0 0.0
      %2836 = vmatpush.msra.mxu0 0.0
      %2837 = vmatpush.msra.mxu0 0.0
      %2838 = vmatpush.msra.mxu0 0.0
      %2839 = vmatpush.msra.mxu0 0.0
      %2840 = vmatpush.msra.mxu0 %v2802
      %2841 = vmatpush.msra.mxu0 %v2801
      %2842 = vmatpush.msra.mxu0 %v2800
      %2843 = vmatpush.msra.mxu0 %v2799
      %2844 = vmatpush.msra.mxu0 %v2798
      %2845 = vmatpush.msra.mxu0 %v2797
      %2846 = vmatpush.msra.mxu0 %v2796
      %2847 = vmatpush.msra.mxu0 %v2795
      %2848 = vmatmul.f32.gmra.mxu0 %v2809
      %v2849 = vpop.f32.mrf.mxu0
      %v2850 = vadd.f32 %v2805, %v2849
      %2851 = vmatmul.f32.gmra.mxu0 %v2812
      %v2852 = vpop.f32.mrf.mxu0
      %v2853 = vadd.f32 %v2805, %v2852
      %2854 = vmatmul.f32.gmra.mxu0 %v2815
      %v2855 = vpop.f32.mrf.mxu0
      %v2856 = vadd.f32 %v2805, %v2855
      %2857 = vmatmul.f32.gmra.mxu0 %v2818
      %v2858 = vpop.f32.mrf.mxu0
      %v2859 = vadd.f32 %v2805, %v2858
      %2860 = vmatmul.f32.gmra.mxu0 %v2821
      %v2861 = vpop.f32.mrf.mxu0
      %v2862 = vadd.f32 %v2805, %v2861
      %2863 = vmatmul.f32.gmra.mxu0 %v2824
      %v2864 = vpop.f32.mrf.mxu0
      %v2865 = vadd.f32 %v2805, %v2864
      %2866 = vmatmul.f32.gmra.mxu0 %v2827
      %v2867 = vpop.f32.mrf.mxu0
      %v2868 = vadd.f32 %v2805, %v2867
      %2869 = vmatmul.f32.gmra.mxu0 %v2830
      %v2870 = vpop.f32.mrf.mxu0
      %v2871 = vadd.f32 %v2805, %v2870
      %2872 = vdwg.mxu0
      %v2873 = vadd.f32 %v2450, %v2850
      %v2874 = vadd.f32 %v2451, %v2853
      %v2875 = vadd.f32 %v2452, %v2856
      %v2876 = vadd.f32 %v2453, %v2859
      %v2877 = vadd.f32 %v2454, %v2862
      %v2878 = vadd.f32 %v2455, %v2865
      %v2879 = vadd.f32 %v2456, %v2868
      %v2880 = vadd.f32 %v2457, %v2871
      %2881 = vst.msk [vmem:[%s543] sm:$0xff] %vm555, %v2873
      %2882 = vst.msk [vmem:[%s543 + $0x8] sm:$0xff] %vm555, %v2874
      %2883 = vst.msk [vmem:[%s543 + $0x10] sm:$0xff] %vm555, %v2875
      %2884 = vst.msk [vmem:[%s543 + $0x18] sm:$0xff] %vm555, %v2876
      %2885 = vst.msk [vmem:[%s543 + $0x20] sm:$0xff] %vm555, %v2877
      %2886 = vst.msk [vmem:[%s543 + $0x28] sm:$0xff] %vm555, %v2878
      %2887 = vst.msk [vmem:[%s543 + $0x30] sm:$0xff] %vm555, %v2879
      %2888 = vst.msk [vmem:[%s543 + $0x38] sm:$0xff] %vm555, %v2880
      %s2889 = smul.u32 8, %s27
      %p2890 = scmp.lt.s32.totalorder %s2889, 15
      %s2891 = scalar_select %p2890, %s2889, 15
      %s2892 = smul.addr %s2891, 8
      %s2893 = scalar_lea.vmem %s16, %s2892
      // Predicated region
      $region85: #{block_forward_pallas.1} parent=83 // pred_check
        %p2894 = pneg %p391
      $region86: #{block_forward_pallas.1} parent=83 // pred_check_branch
        %2896 = sbr.rel (%p2894) target = $region88
      $region87: #{block_forward_pallas.1} parent=83 // pred_region
        %s2897 = smul.u32 8, %s27
      $region88: #{block_forward_pallas.1} parent=83 // pred_fallthru
        _
    $region84: #{block_forward_pallas.1} parent=5 // pred_fallthru
      _
    %p2898 = scmp.le.s32.totalorder 2, %s22
    // Predicated region
    $region89: #{block_forward_pallas.1} parent=5 // pred_check
      %p2899 = pneg %p2898
    $region90: #{block_forward_pallas.1} parent=5 // pred_check_branch
      %2901 = sbr.rel (%p2899) target = $region92
    $region91: #{block_forward_pallas.1} parent=5 // pred_region
      %s2902 = ssub.s32 %s22, 2
      // Predicated region
      $region93: #{block_forward_pallas.1} parent=91 // pred_check
        %p2903 = pneg %p397
      $region94: #{block_forward_pallas.1} parent=91 // pred_check_branch
        %2905 = sbr.rel (%p2903) target = $region96
      $region95: #{block_forward_pallas.1} parent=91 // pred_region
        %s2906 = smul.u32 8, %s28
        %p2907 = scmp.lt.s32.totalorder %s2906, 15
        %s2908 = scalar_select %p2907, %s2906, 15
        %s2909 = smul.addr %s2908, 8
        %s2910 = scalar_lea.vmem %s16, %s2909
      $region96: #{block_forward_pallas.1} parent=91 // pred_fallthru
        _
    $region92: #{block_forward_pallas.1} parent=5 // pred_fallthru
      _
  $region6: #{block_forward_pallas.1} parent=0 // loop_footer
    %s26 = sadd.s32 1, %s22
  $region7: #{block_forward_pallas.1} parent=0 // loop_footer_branch
    %21 = sbr.rel target = $region3
  $region8: #{block_forward_pallas.1} parent=0 // loop_exit
    _

</llo_original>
